<compile_context>
chip_gen: v5e
topology: v5e:2x2
jax: 0.10.0
libtpu: 0.0.40
codegen_flags: <defaults>
</compile_context>

<pallas_src>
import numpy as np
import jax
import jax.numpy as jnp
from jax import lax
from jax.experimental import pallas as pl
from jax.experimental.pallas import tpu as pltpu


LANE = 128


def _round_up(x, m):
    return ((x + m - 1) // m) * m


# ----------------------------- Pallas kernel -------------------------------- #
def _make_kernel(*, H, W, stride, has_ds, Cin_p, P_p, Cout_p, T):
    HW = H * W
    Ho, Wo = H // stride, W // stride
    HoW, HoWo = Ho * W, Ho * Wo

    def kernel(x_ref, w1_ref, b1_ref, w2_ref, b2_ref, w3_ref, b3_ref, *rest):
        idx = 0
        if has_ds:
            wd_ref, bd_ref = rest[0], rest[1]
            idx = 2
        out_ref = rest[idx]
        pad_buf = rest[idx + 1]                       # (2T+HW, P_p) bf16
        pool_buf = rest[idx + 2] if stride > 1 else None

        # Zero halo rows above/below the image once; they are never overwritten
        # by later grid steps, so no need to re-zero them per image.
        @pl.when(pl.program_id(0) == 0)
        def _():
            z = jnp.zeros((T, P_p), jnp.bfloat16)
            pad_buf[0:T, :] = z
            pad_buf[T + HW:T + HW + T, :] = z

        # ---- conv1 (1x1, no bias) + folded bn1 + relu1 ------------------------
        x2 = x_ref[...].reshape(HW, Cin_p)                       # bf16
        h1 = jnp.dot(x2, w1_ref[...], preferred_element_type=jnp.float32)
        h1 = jnp.maximum(h1 + b1_ref[...], 0.0)                  # (HW, P_p) f32

        # ---- conv2 (3x3, pad=1) + folded bn2 + relu2 --------------------------
        # h1 lives (in bf16) at rows [T, T+HW) of the flat scratch; each tap is a
        # shifted contiguous read.  Column wrap (dx = +/-1) is masked with an
        # iota-based mask.
        pad_buf[T:T + HW, :] = h1.astype(jnp.bfloat16)

        col = lax.broadcasted_iota(jnp.int32, (HW, 1), 0) % W
        mask_l = col >= 1            # valid when dx == -1
        mask_r = col <= W - 2        # valid when dx == +1

        acc = jnp.zeros((HW, P_p), jnp.float32)
        tap = 0
        for dy in (-1, 0, 1):
            for dx in (-1, 0, 1):
                win = pad_buf[pl.ds(T + dy * W + dx, HW), :]     # bf16
                if dx == -1:
                    win = jnp.where(mask_l, win, 0.0)
                elif dx == 1:
                    win = jnp.where(mask_r, win, 0.0)
                acc = acc + jnp.dot(win, w2_ref[tap],
                                    preferred_element_type=jnp.float32)
                tap += 1
        h2 = jnp.maximum(acc + b2_ref[...], 0.0)                 # (HW, P_p) f32

        # ---- AvgPool2d(stride) -------------------------------------------------
        def pool(a2d, C):
            if stride == 1:
                return a2d
            # pool along H: reshape splits only leading dims (W stays the sublane
            # dim, multiple of 8) -> cheap vreg adds.
            a4 = a2d.reshape(Ho, stride, W, C)
            u = a4[:, 0]
            for d in range(1, stride):
                u = u + a4[:, d]
            u = u.reshape(HoW, C)
            # pool along W: scratch round-trip + strided reads (rows j*s + d).
            pool_buf[0:HoW, 0:C] = u
            v = pool_buf[pl.ds(0, HoWo, stride=stride), 0:C]
            for d in range(1, stride):
                v = v + pool_buf[pl.ds(d, HoWo, stride=stride), 0:C]
            return v * (1.0 / float(stride * stride))

        # ---- avgpool -> conv3 (1x1) + folded bn3 -------------------------------
        pooled = pool(h2, P_p)                                   # (HoWo, P_p)
        h3 = jnp.dot(pooled.astype(jnp.bfloat16), w3_ref[...],
                     preferred_element_type=jnp.float32) + b3_ref[...]

        # ---- identity / downsample branch --------------------------------------
        if has_ds:
            xf = pool(x2.astype(jnp.float32), Cin_p)             # (HoWo, Cin_p)
            idn = jnp.dot(xf.astype(jnp.bfloat16), wd_ref[...],
                          preferred_element_type=jnp.float32) + bd_ref[...]
        else:
            idn = x2.astype(jnp.float32)                          # Cin_p == Cout_p

        # ---- residual add + relu3 ----------------------------------------------
        out = jnp.maximum(h3 + idn, 0.0)                          # (HoWo, Cout_p)
        out_ref[...] = out.reshape(1, Ho, Wo, Cout_p)

    return kernel


# ------------------------------- glue / wrapper ------------------------------ #
def _fold_bn(g, b, m, v, eps=1e-5):
    s = g / jnp.sqrt(v + eps)
    return s, b - m * s


def _pad_mat(a, r, c):
    return jnp.zeros((r, c), jnp.float32).at[:a.shape[0], :a.shape[1]].set(a)


def _pad_bias(a, c):
    return jnp.zeros((1, c), jnp.float32).at[0, :a.shape[0]].set(a)


def bottleneck_forward(x_nchw, p, stride):
    x = jnp.transpose(x_nchw, (0, 2, 3, 1)).astype(jnp.float32)   # -> NHWC
    N, H, W, Cin = x.shape
    P = p['w1'].shape[1]
    Cout = p['w3'].shape[1]
    has_ds = (stride > 1) or (Cin != Cout)

    assert H % stride == 0 and W % stride == 0
    Ho, Wo = H // stride, W // stride
    assert W % 8 == 0 and Wo % 8 == 0, "W and W//stride must be multiples of 8"

    Cin_p = _round_up(Cin, LANE)
    P_p = _round_up(P, LANE)
    Cout_p = _round_up(Cout, LANE)
    T = _round_up(W + 1, 8)            # zero border rows above/below the image
    HW = H * W

    # fold BN scales into the conv weights (inference / running stats)
    s1, b1 = _fold_bn(p['g1'], p['b1'], p['m1'], p['v1'])
    s2, b2 = _fold_bn(p['g2'], p['b2'], p['m2'], p['v2'])
    s3, b3 = _fold_bn(p['g3'], p['b3'], p['m3'], p['v3'])

    w1p = _pad_mat(p['w1'] * s1[None, :], Cin_p, P_p).astype(jnp.bfloat16)
    w2f = p['w2'] * s2[None, None, None, :]
    w2p = (jnp.zeros((3, 3, P_p, P_p), jnp.float32)
           .at[:, :, :P, :P].set(w2f)
           .reshape(9, P_p, P_p).astype(jnp.bfloat16))
    w3p = _pad_mat(p['w3'] * s3[None, :], P_p, Cout_p).astype(jnp.bfloat16)
    b1p, b2p, b3p = _pad_bias(b1, P_p), _pad_bias(b2, P_p), _pad_bias(b3, Cout_p)

    xp = (jnp.zeros((N, H, W, Cin_p), jnp.float32)
          .at[..., :Cin].set(x).astype(jnp.bfloat16))

    in_specs = [
        pl.BlockSpec((1, H, W, Cin_p), lambda n: (n, 0, 0, 0)),
        pl.BlockSpec((Cin_p, P_p), lambda n: (0, 0)),
        pl.BlockSpec((1, P_p), lambda n: (0, 0)),
        pl.BlockSpec((9, P_p, P_p), lambda n: (0, 0, 0)),
        pl.BlockSpec((1, P_p), lambda n: (0, 0)),
        pl.BlockSpec((P_p, Cout_p), lambda n: (0, 0)),
        pl.BlockSpec((1, Cout_p), lambda n: (0, 0)),
    ]
    args = [xp, w1p, b1p, w2p, b2p, w3p, b3p]
    if has_ds:
        sd, bd = _fold_bn(p['gd'], p['bd'], p['md'], p['vd'])
        wdp = _pad_mat(p['wd'] * sd[None, :], Cin_p, Cout_p).astype(jnp.bfloat16)
        bdp = _pad_bias(bd, Cout_p)
        in_specs += [pl.BlockSpec((Cin_p, Cout_p), lambda n: (0, 0)),
                     pl.BlockSpec((1, Cout_p), lambda n: (0, 0))]
        args += [wdp, bdp]
    else:
        assert Cin == Cout

    scratch_shapes = [pltpu.VMEM((2 * T + HW, P_p), jnp.bfloat16)]
    if stride > 1:
        scratch_shapes.append(
            pltpu.VMEM((Ho * W, max(P_p, Cin_p)), jnp.float32))

    kernel = _make_kernel(H=H, W=W, stride=stride, has_ds=has_ds,
                          Cin_p=Cin_p, P_p=P_p, Cout_p=Cout_p, T=T)

    out = pl.pallas_call(
        kernel,
        out_shape=jax.ShapeDtypeStruct((N, Ho, Wo, Cout_p), jnp.float32),
        grid=(N,),
        in_specs=in_specs,
        out_specs=pl.BlockSpec((1, Ho, Wo, Cout_p), lambda n: (n, 0, 0, 0)),
        scratch_shapes=scratch_shapes,
        compiler_params=pltpu.CompilerParams(
            dimension_semantics=("parallel",),
            vmem_limit_bytes=32 * 1024 * 1024),
    )(*args)

    out = out[..., :Cout]                                          # drop channel pad
    return jnp.transpose(out, (0, 3, 1, 2))                        # -> NCHW


# --------------------------- pure-JAX reference ------------------------------ #
def _bn(x, g, b, m, v, eps=1e-5):
    return (x - m) * (g / jnp.sqrt(v + eps)) + b


def _avgpool(x, s):
    if s == 1:
        return x
    N, H, W, C = x.shape
    return x.reshape(N, H // s, s, W // s, s, C).mean(axis=(2, 4))


def _conv(x, w, pad):
    return lax.conv_general_dilated(
        x, w, window_strides=(1, 1), padding=pad,
        dimension_numbers=('NHWC', 'HWIO', 'NHWC'))


def ref_forward(x_nchw, p, stride):
    x = jnp.transpose(x_nchw, (0, 2, 3, 1)).astype(jnp.float32)
    Cin = x.shape[-1]
    Cout = p['w3'].shape[1]
    out = _conv(x, p['w1'][None, None], 'VALID')
    out = jax.nn.relu(_bn(out, p['g1'], p['b1'], p['m1'], p['v1']))
    out = _conv(out, p['w2'], ((1, 1), (1, 1)))
    out = jax.nn.relu(_bn(out, p['g2'], p['b2'], p['m2'], p['v2']))
    out = _avgpool(out, stride)
    out = _conv(out, p['w3'][None, None], 'VALID')
    out = _bn(out, p['g3'], p['b3'], p['m3'], p['v3'])
    if stride > 1 or Cin != Cout:
        idn = _avgpool(x, stride)
        idn = _conv(idn, p['wd'][None, None], 'VALID')
        idn = _bn(idn, p['gd'], p['bd'], p['md'], p['vd'])
    else:
        idn = x
    return jnp.transpose(jax.nn.relu(out + idn), (0, 3, 1, 2))


# -------------------------- deterministic params ----------------------------- #
def init_params(key, inplanes, planes):
    expansion = 4
    cout = planes * expansion
    keys = jax.random.split(key, 8)

    def w(k, shape, fan_in):
        return jax.random.normal(k, shape, jnp.float32) * (0.5 / float(np.sqrt(fan_in)))

    def bn_p(k, c):
        k1, k2, k3, k4 = jax.random.split(k, 4)
        return (1.0 + 0.1 * jax.random.normal(k1, (c,), jnp.float32),
                0.1 * jax.random.normal(k2, (c,), jnp.float32),
                0.1 * jax.random.normal(k3, (c,), jnp.float32),
                0.5 + jnp.abs(jax.random.normal(k4, (c,), jnp.float32)))

    p = {}
    p['w1'] = w(keys[0], (inplanes, planes), inplanes)          # 1x1, (Cin, P)
    p['w2'] = w(keys[1], (3, 3, planes, planes), 9 * planes)    # 3x3 HWIO
    p['w3'] = w(keys[2], (planes, cout), planes)                # 1x1, (P, 4P)
    p['wd'] = w(keys[3], (inplanes, cout), inplanes)            # downsample 1x1
    p['g1'], p['b1'], p['m1'], p['v1'] = bn_p(keys[4], planes)
    p['g2'], p['b2'], p['m2'], p['v2'] = bn_p(keys[5], planes)
    p['g3'], p['b3'], p['m3'], p['v3'] = bn_p(keys[6], cout)
    p['gd'], p['bd'], p['md'], p['vd'] = bn_p(keys[7], cout)
    return p


if __name__ == "__main__":
    N, inplanes, planes, H, W, stride = 2, 8, 4, 16, 16, 2

    key = jax.random.PRNGKey(0)
    kx, kp = jax.random.split(key)
    x = jax.random.normal(kx, (N, inplanes, H, W), jnp.float32)   # NCHW like PyTorch
    params = init_params(kp, inplanes, planes)

    out = jax.block_until_ready(bottleneck_forward(x, params, stride))
    ref = jax.block_until_ready(ref_forward(x, params, stride))

    assert out.shape == ref.shape == (N, planes * 4, H // stride, W // stride)
    err = float(jnp.max(jnp.abs(out - ref)))
    if not np.allclose(np.asarray(out), np.asarray(ref), rtol=5e-2, atol=5e-2):
        raise AssertionError(f"mismatch vs reference, max abs err = {err}")

    print("KERNEL_OK")
</pallas_src>

<mosaic_0001>
module attributes {stable_mosaic.version = 11 : i64} {
  func.func @kernel(%arg0: i32, %arg1: memref<1x16x16x128xbf16, #tpu.memory_space<vmem>>, %arg2: memref<128x128xbf16, #tpu.memory_space<vmem>>, %arg3: memref<1x128xf32, #tpu.memory_space<vmem>>, %arg4: memref<9x128x128xbf16, #tpu.memory_space<vmem>>, %arg5: memref<1x128xf32, #tpu.memory_space<vmem>>, %arg6: memref<128x128xbf16, #tpu.memory_space<vmem>>, %arg7: memref<1x128xf32, #tpu.memory_space<vmem>>, %arg8: memref<128x128xbf16, #tpu.memory_space<vmem>>, %arg9: memref<1x128xf32, #tpu.memory_space<vmem>>, %arg10: memref<1x8x8x128xf32, #tpu.memory_space<vmem>>, %arg11: memref<304x128xbf16, #tpu.memory_space<vmem>>, %arg12: memref<128x128xf32, #tpu.memory_space<vmem>>) attributes {dimension_semantics = [#tpu.dimension_semantics<parallel>], iteration_bounds = array<i64: 2>, scalar_prefetch = 0 : i64, scratch_operands = 2 : i64, tpu.core_type = #tpu.core_type<tc>, window_params = [{transform_indices = @transform_0, window_bounds = array<i64: 1, 16, 16, 128>}, {pipeline_mode = #tpu.pipeline_mode<synchronous>, transform_indices = @transform_1, window_bounds = array<i64: 128, 128>}, {pipeline_mode = #tpu.pipeline_mode<synchronous>, transform_indices = @transform_2, window_bounds = array<i64: 1, 128>}, {pipeline_mode = #tpu.pipeline_mode<synchronous>, transform_indices = @transform_3, window_bounds = array<i64: 9, 128, 128>}, {pipeline_mode = #tpu.pipeline_mode<synchronous>, transform_indices = @transform_4, window_bounds = array<i64: 1, 128>}, {pipeline_mode = #tpu.pipeline_mode<synchronous>, transform_indices = @transform_5, window_bounds = array<i64: 128, 128>}, {pipeline_mode = #tpu.pipeline_mode<synchronous>, transform_indices = @transform_6, window_bounds = array<i64: 1, 128>}, {pipeline_mode = #tpu.pipeline_mode<synchronous>, transform_indices = @transform_7, window_bounds = array<i64: 128, 128>}, {pipeline_mode = #tpu.pipeline_mode<synchronous>, transform_indices = @transform_8, window_bounds = array<i64: 1, 128>}, {transform_indices = @transform_9, window_bounds = array<i64: 1, 8, 8, 128>}]} {
    %c0_i32 = arith.constant 0 : i32
    %0 = arith.cmpi eq, %arg0, %c0_i32 : i32
    %1 = arith.extui %0 : i1 to i32
    %c0_i32_0 = arith.constant 0 : i32
    %2 = arith.cmpi ne, %1, %c0_i32_0 : i32
    scf.if %2 {
      %cst_94 = arith.constant 0.000000e+00 : bf16
      %160 = vector.broadcast %cst_94 : bf16 to vector<24x128xbf16>
      %c0_95 = arith.constant 0 : index
      %c0_96 = arith.constant 0 : index
      %161 = vector.load %arg11[%c0_95, %c0_96] : memref<304x128xbf16, #tpu.memory_space<vmem>>, vector<24x128xbf16>
      tpu.vector_store %arg11[%c0_95, %c0_96], %160 {strides = array<i32>} : memref<304x128xbf16, #tpu.memory_space<vmem>>, vector<24x128xbf16>,
      %c280 = arith.constant 280 : index
      %c0_97 = arith.constant 0 : index
      %162 = vector.load %arg11[%c280, %c0_97] : memref<304x128xbf16, #tpu.memory_space<vmem>>, vector<24x128xbf16>
      tpu.vector_store %arg11[%c280, %c0_97], %160 {strides = array<i32>} : memref<304x128xbf16, #tpu.memory_space<vmem>>, vector<24x128xbf16>,
    } else {
    }
    %c0 = arith.constant 0 : index
    %c0_1 = arith.constant 0 : index
    %c0_2 = arith.constant 0 : index
    %c0_3 = arith.constant 0 : index
    %3 = vector.load %arg1[%c0, %c0_1, %c0_2, %c0_3] : memref<1x16x16x128xbf16, #tpu.memory_space<vmem>>, vector<1x16x16x128xbf16>
    %4 = vector.shape_cast %3 : vector<1x16x16x128xbf16> to vector<256x128xbf16>
    %c0_4 = arith.constant 0 : index
    %c0_5 = arith.constant 0 : index
    %5 = vector.load %arg2[%c0_4, %c0_5] : memref<128x128xbf16, #tpu.memory_space<vmem>>, vector<128x128xbf16>
    %cst = arith.constant dense<0.000000e+00> : vector<256x128xf32>
    %6 = tpu.matmul %4, %5, %cst {dimension_numbers = #tpu.dot_dimension_numbers<[1], [0], [0], [1], [0, 0, 1, 1], [], []>} : vector<256x128xbf16>, vector<128x128xbf16>, vector<256x128xf32> -> vector<256x128xf32>
    %c0_6 = arith.constant 0 : index
    %c0_7 = arith.constant 0 : index
    %7 = vector.load %arg3[%c0_6, %c0_7] : memref<1x128xf32, #tpu.memory_space<vmem>>, vector<1x128xf32>
    %8 = vector.broadcast %7 : vector<1x128xf32> to vector<256x128xf32>
    %9 = arith.addf %6, %8 : vector<256x128xf32>
    %cst_8 = arith.constant 0.000000e+00 : f32
    %10 = vector.broadcast %cst_8 : f32 to vector<256x128xf32>
    %11 = arith.maximumf %9, %10 : vector<256x128xf32>
    %12 = arith.truncf %11 : vector<256x128xf32> to vector<256x128xbf16>
    %c24 = arith.constant 24 : index
    %c0_9 = arith.constant 0 : index
    %13 = vector.load %arg11[%c24, %c0_9] : memref<304x128xbf16, #tpu.memory_space<vmem>>, vector<256x128xbf16>
    tpu.vector_store %arg11[%c24, %c0_9], %12 {strides = array<i32>} : memref<304x128xbf16, #tpu.memory_space<vmem>>, vector<256x128xbf16>,
    %14 = tpu.iota {dimensions = array<i32: 0>} : vector<256x1xi32>
    %c16_i32 = arith.constant 16 : i32
    %c0_i32_10 = arith.constant 0 : i32
    %15 = arith.cmpi eq, %c16_i32, %c0_i32_10 : i32
    %c1_i32 = arith.constant 1 : i32
    %16 = arith.select %15, %c1_i32, %c16_i32 : i32
    %17 = vector.broadcast %16 : i32 to vector<256x1xi32>
    %18 = arith.remsi %14, %17 : vector<256x1xi32>
    %c0_i32_11 = arith.constant 0 : i32
    %19 = vector.broadcast %c0_i32_11 : i32 to vector<256x1xi32>
    %20 = arith.cmpi ne, %18, %19 : vector<256x1xi32>
    %c0_i32_12 = arith.constant 0 : i32
    %21 = vector.broadcast %c0_i32_12 : i32 to vector<256x1xi32>
    %22 = arith.cmpi slt, %18, %21 : vector<256x1xi32>
    %c0_i32_13 = arith.constant 0 : i32
    %23 = arith.cmpi slt, %16, %c0_i32_13 : i32
    %24 = vector.broadcast %23 : i1 to vector<256x1xi1>
    %25 = vector.broadcast %24 : vector<256x1xi1> to vector<256x1xi1>
    %26 = arith.xori %22, %25 : vector<256x1xi1>
    %27 = arith.andi %26, %20 : vector<256x1xi1>
    %28 = vector.broadcast %16 : i32 to vector<256x1xi32>
    %29 = arith.addi %18, %28 : vector<256x1xi32>
    %30 = arith.select %27, %29, %18 : vector<256x1xi1>, vector<256x1xi32>
    %c1_i32_14 = arith.constant 1 : i32
    %31 = vector.broadcast %c1_i32_14 : i32 to vector<256x1xi32>
    %32 = arith.cmpi sge, %30, %31 : vector<256x1xi32>
    %c14_i32 = arith.constant 14 : i32
    %33 = vector.broadcast %c14_i32 : i32 to vector<256x1xi32>
    %34 = arith.cmpi sle, %30, %33 : vector<256x1xi32>
    %cst_15 = arith.constant 0.000000e+00 : f32
    %35 = vector.broadcast %cst_15 : f32 to vector<256x128xf32>
    %c7 = arith.constant 7 : index
    %c0_16 = arith.constant 0 : index
    %36 = vector.load %arg11[%c7, %c0_16] : memref<304x128xbf16, #tpu.memory_space<vmem>>, vector<256x128xbf16>
    %cst_17 = arith.constant 0.000000e+00 : f32
    %37 = arith.truncf %cst_17 : f32 to bf16
    %38 = vector.shape_cast %32 : vector<256x1xi1> to vector<256x1xi1>
    %39 = vector.broadcast %38 : vector<256x1xi1> to vector<256x128xi1>
    %40 = vector.broadcast %37 : bf16 to vector<256x128xbf16>
    %41 = arith.select %39, %36, %40 : vector<256x128xi1>, vector<256x128xbf16>
    %c0_18 = arith.constant 0 : index
    %c0_19 = arith.constant 0 : index
    %c0_20 = arith.constant 0 : index
    %42 = vector.load %arg4[%c0_18, %c0_19, %c0_20] : memref<9x128x128xbf16, #tpu.memory_space<vmem>>, vector<1x128x128xbf16>
    %43 = vector.shape_cast %42 : vector<1x128x128xbf16> to vector<128x128xbf16>
    %cst_21 = arith.constant dense<0.000000e+00> : vector<256x128xf32>
    %44 = tpu.matmul %41, %43, %cst_21 {dimension_numbers = #tpu.dot_dimension_numbers<[1], [0], [0], [1], [0, 0, 1, 1], [], []>} : vector<256x128xbf16>, vector<128x128xbf16>, vector<256x128xf32> -> vector<256x128xf32>
    %45 = arith.addf %35, %44 : vector<256x128xf32>
    %c8 = arith.constant 8 : index
    %c0_22 = arith.constant 0 : index
    %46 = vector.load %arg11[%c8, %c0_22] : memref<304x128xbf16, #tpu.memory_space<vmem>>, vector<256x128xbf16>
    %c1 = arith.constant 1 : index
    %c0_23 = arith.constant 0 : index
    %c0_24 = arith.constant 0 : index
    %47 = vector.load %arg4[%c1, %c0_23, %c0_24] : memref<9x128x128xbf16, #tpu.memory_space<vmem>>, vector<1x128x128xbf16>
    %48 = vector.shape_cast %47 : vector<1x128x128xbf16> to vector<128x128xbf16>
    %cst_25 = arith.constant dense<0.000000e+00> : vector<256x128xf32>
    %49 = tpu.matmul %46, %48, %cst_25 {dimension_numbers = #tpu.dot_dimension_numbers<[1], [0], [0], [1], [0, 0, 1, 1], [], []>} : vector<256x128xbf16>, vector<128x128xbf16>, vector<256x128xf32> -> vector<256x128xf32>
    %50 = arith.addf %45, %49 : vector<256x128xf32>
    %c9 = arith.constant 9 : index
    %c0_26 = arith.constant 0 : index
    %51 = vector.load %arg11[%c9, %c0_26] : memref<304x128xbf16, #tpu.memory_space<vmem>>, vector<256x128xbf16>
    %cst_27 = arith.constant 0.000000e+00 : f32
    %52 = arith.truncf %cst_27 : f32 to bf16
    %53 = vector.shape_cast %34 : vector<256x1xi1> to vector<256x1xi1>
    %54 = vector.broadcast %53 : vector<256x1xi1> to vector<256x128xi1>
    %55 = vector.broadcast %52 : bf16 to vector<256x128xbf16>
    %56 = arith.select %54, %51, %55 : vector<256x128xi1>, vector<256x128xbf16>
    %c2 = arith.constant 2 : index
    %c0_28 = arith.constant 0 : index
    %c0_29 = arith.constant 0 : index
    %57 = vector.load %arg4[%c2, %c0_28, %c0_29] : memref<9x128x128xbf16, #tpu.memory_space<vmem>>, vector<1x128x128xbf16>
    %58 = vector.shape_cast %57 : vector<1x128x128xbf16> to vector<128x128xbf16>
    %cst_30 = arith.constant dense<0.000000e+00> : vector<256x128xf32>
    %59 = tpu.matmul %56, %58, %cst_30 {dimension_numbers = #tpu.dot_dimension_numbers<[1], [0], [0], [1], [0, 0, 1, 1], [], []>} : vector<256x128xbf16>, vector<128x128xbf16>, vector<256x128xf32> -> vector<256x128xf32>
    %60 = arith.addf %50, %59 : vector<256x128xf32>
    %c23 = arith.constant 23 : index
    %c0_31 = arith.constant 0 : index
    %61 = vector.load %arg11[%c23, %c0_31] : memref<304x128xbf16, #tpu.memory_space<vmem>>, vector<256x128xbf16>
    %cst_32 = arith.constant 0.000000e+00 : f32
    %62 = arith.truncf %cst_32 : f32 to bf16
    %63 = vector.shape_cast %32 : vector<256x1xi1> to vector<256x1xi1>
    %64 = vector.broadcast %63 : vector<256x1xi1> to vector<256x128xi1>
    %65 = vector.broadcast %62 : bf16 to vector<256x128xbf16>
    %66 = arith.select %64, %61, %65 : vector<256x128xi1>, vector<256x128xbf16>
    %c3 = arith.constant 3 : index
    %c0_33 = arith.constant 0 : index
    %c0_34 = arith.constant 0 : index
    %67 = vector.load %arg4[%c3, %c0_33, %c0_34] : memref<9x128x128xbf16, #tpu.memory_space<vmem>>, vector<1x128x128xbf16>
    %68 = vector.shape_cast %67 : vector<1x128x128xbf16> to vector<128x128xbf16>
    %cst_35 = arith.constant dense<0.000000e+00> : vector<256x128xf32>
    %69 = tpu.matmul %66, %68, %cst_35 {dimension_numbers = #tpu.dot_dimension_numbers<[1], [0], [0], [1], [0, 0, 1, 1], [], []>} : vector<256x128xbf16>, vector<128x128xbf16>, vector<256x128xf32> -> vector<256x128xf32>
    %70 = arith.addf %60, %69 : vector<256x128xf32>
    %c24_36 = arith.constant 24 : index
    %c0_37 = arith.constant 0 : index
    %71 = vector.load %arg11[%c24_36, %c0_37] : memref<304x128xbf16, #tpu.memory_space<vmem>>, vector<256x128xbf16>
    %c4 = arith.constant 4 : index
    %c0_38 = arith.constant 0 : index
    %c0_39 = arith.constant 0 : index
    %72 = vector.load %arg4[%c4, %c0_38, %c0_39] : memref<9x128x128xbf16, #tpu.memory_space<vmem>>, vector<1x128x128xbf16>
    %73 = vector.shape_cast %72 : vector<1x128x128xbf16> to vector<128x128xbf16>
    %cst_40 = arith.constant dense<0.000000e+00> : vector<256x128xf32>
    %74 = tpu.matmul %71, %73, %cst_40 {dimension_numbers = #tpu.dot_dimension_numbers<[1], [0], [0], [1], [0, 0, 1, 1], [], []>} : vector<256x128xbf16>, vector<128x128xbf16>, vector<256x128xf32> -> vector<256x128xf32>
    %75 = arith.addf %70, %74 : vector<256x128xf32>
    %c25 = arith.constant 25 : index
    %c0_41 = arith.constant 0 : index
    %76 = vector.load %arg11[%c25, %c0_41] : memref<304x128xbf16, #tpu.memory_space<vmem>>, vector<256x128xbf16>
    %cst_42 = arith.constant 0.000000e+00 : f32
    %77 = arith.truncf %cst_42 : f32 to bf16
    %78 = vector.shape_cast %34 : vector<256x1xi1> to vector<256x1xi1>
    %79 = vector.broadcast %78 : vector<256x1xi1> to vector<256x128xi1>
    %80 = vector.broadcast %77 : bf16 to vector<256x128xbf16>
    %81 = arith.select %79, %76, %80 : vector<256x128xi1>, vector<256x128xbf16>
    %c5 = arith.constant 5 : index
    %c0_43 = arith.constant 0 : index
    %c0_44 = arith.constant 0 : index
    %82 = vector.load %arg4[%c5, %c0_43, %c0_44] : memref<9x128x128xbf16, #tpu.memory_space<vmem>>, vector<1x128x128xbf16>
    %83 = vector.shape_cast %82 : vector<1x128x128xbf16> to vector<128x128xbf16>
    %cst_45 = arith.constant dense<0.000000e+00> : vector<256x128xf32>
    %84 = tpu.matmul %81, %83, %cst_45 {dimension_numbers = #tpu.dot_dimension_numbers<[1], [0], [0], [1], [0, 0, 1, 1], [], []>} : vector<256x128xbf16>, vector<128x128xbf16>, vector<256x128xf32> -> vector<256x128xf32>
    %85 = arith.addf %75, %84 : vector<256x128xf32>
    %c39 = arith.constant 39 : index
    %c0_46 = arith.constant 0 : index
    %86 = vector.load %arg11[%c39, %c0_46] : memref<304x128xbf16, #tpu.memory_space<vmem>>, vector<256x128xbf16>
    %cst_47 = arith.constant 0.000000e+00 : f32
    %87 = arith.truncf %cst_47 : f32 to bf16
    %88 = vector.shape_cast %32 : vector<256x1xi1> to vector<256x1xi1>
    %89 = vector.broadcast %88 : vector<256x1xi1> to vector<256x128xi1>
    %90 = vector.broadcast %87 : bf16 to vector<256x128xbf16>
    %91 = arith.select %89, %86, %90 : vector<256x128xi1>, vector<256x128xbf16>
    %c6 = arith.constant 6 : index
    %c0_48 = arith.constant 0 : index
    %c0_49 = arith.constant 0 : index
    %92 = vector.load %arg4[%c6, %c0_48, %c0_49] : memref<9x128x128xbf16, #tpu.memory_space<vmem>>, vector<1x128x128xbf16>
    %93 = vector.shape_cast %92 : vector<1x128x128xbf16> to vector<128x128xbf16>
    %cst_50 = arith.constant dense<0.000000e+00> : vector<256x128xf32>
    %94 = tpu.matmul %91, %93, %cst_50 {dimension_numbers = #tpu.dot_dimension_numbers<[1], [0], [0], [1], [0, 0, 1, 1], [], []>} : vector<256x128xbf16>, vector<128x128xbf16>, vector<256x128xf32> -> vector<256x128xf32>
    %95 = arith.addf %85, %94 : vector<256x128xf32>
    %c40 = arith.constant 40 : index
    %c0_51 = arith.constant 0 : index
    %96 = vector.load %arg11[%c40, %c0_51] : memref<304x128xbf16, #tpu.memory_space<vmem>>, vector<256x128xbf16>
    %c7_52 = arith.constant 7 : index
    %c0_53 = arith.constant 0 : index
    %c0_54 = arith.constant 0 : index
    %97 = vector.load %arg4[%c7_52, %c0_53, %c0_54] : memref<9x128x128xbf16, #tpu.memory_space<vmem>>, vector<1x128x128xbf16>
    %98 = vector.shape_cast %97 : vector<1x128x128xbf16> to vector<128x128xbf16>
    %cst_55 = arith.constant dense<0.000000e+00> : vector<256x128xf32>
    %99 = tpu.matmul %96, %98, %cst_55 {dimension_numbers = #tpu.dot_dimension_numbers<[1], [0], [0], [1], [0, 0, 1, 1], [], []>} : vector<256x128xbf16>, vector<128x128xbf16>, vector<256x128xf32> -> vector<256x128xf32>
    %100 = arith.addf %95, %99 : vector<256x128xf32>
    %c41 = arith.constant 41 : index
    %c0_56 = arith.constant 0 : index
    %101 = vector.load %arg11[%c41, %c0_56] : memref<304x128xbf16, #tpu.memory_space<vmem>>, vector<256x128xbf16>
    %cst_57 = arith.constant 0.000000e+00 : f32
    %102 = arith.truncf %cst_57 : f32 to bf16
    %103 = vector.shape_cast %34 : vector<256x1xi1> to vector<256x1xi1>
    %104 = vector.broadcast %103 : vector<256x1xi1> to vector<256x128xi1>
    %105 = vector.broadcast %102 : bf16 to vector<256x128xbf16>
    %106 = arith.select %104, %101, %105 : vector<256x128xi1>, vector<256x128xbf16>
    %c8_58 = arith.constant 8 : index
    %c0_59 = arith.constant 0 : index
    %c0_60 = arith.constant 0 : index
    %107 = vector.load %arg4[%c8_58, %c0_59, %c0_60] : memref<9x128x128xbf16, #tpu.memory_space<vmem>>, vector<1x128x128xbf16>
    %108 = vector.shape_cast %107 : vector<1x128x128xbf16> to vector<128x128xbf16>
    %cst_61 = arith.constant dense<0.000000e+00> : vector<256x128xf32>
    %109 = tpu.matmul %106, %108, %cst_61 {dimension_numbers = #tpu.dot_dimension_numbers<[1], [0], [0], [1], [0, 0, 1, 1], [], []>} : vector<256x128xbf16>, vector<128x128xbf16>, vector<256x128xf32> -> vector<256x128xf32>
    %110 = arith.addf %100, %109 : vector<256x128xf32>
    %c0_62 = arith.constant 0 : index
    %c0_63 = arith.constant 0 : index
    %111 = vector.load %arg5[%c0_62, %c0_63] : memref<1x128xf32, #tpu.memory_space<vmem>>, vector<1x128xf32>
    %112 = vector.broadcast %111 : vector<1x128xf32> to vector<256x128xf32>
    %113 = arith.addf %110, %112 : vector<256x128xf32>
    %cst_64 = arith.constant 0.000000e+00 : f32
    %114 = vector.broadcast %cst_64 : f32 to vector<256x128xf32>
    %115 = arith.maximumf %113, %114 : vector<256x128xf32>
    %116 = vector.shape_cast %115 : vector<256x128xf32> to vector<8x2x16x128xf32>
    %117 = vector.extract_strided_slice %116 {offsets = [0, 0, 0, 0], sizes = [8, 1, 16, 128], strides = [1, 1, 1, 1]} : vector<8x2x16x128xf32> to vector<8x1x16x128xf32>
    %118 = vector.shape_cast %117 : vector<8x1x16x128xf32> to vector<8x16x128xf32>
    %119 = vector.extract_strided_slice %116 {offsets = [0, 1, 0, 0], sizes = [8, 1, 16, 128], strides = [1, 1, 1, 1]} : vector<8x2x16x128xf32> to vector<8x1x16x128xf32>
    %120 = vector.shape_cast %119 : vector<8x1x16x128xf32> to vector<8x16x128xf32>
    %121 = arith.addf %118, %120 : vector<8x16x128xf32>
    %122 = vector.shape_cast %121 : vector<8x16x128xf32> to vector<128x128xf32>
    %c0_65 = arith.constant 0 : index
    %c0_66 = arith.constant 0 : index
    %123 = vector.load %arg12[%c0_65, %c0_66] : memref<128x128xf32, #tpu.memory_space<vmem>>, vector<128x128xf32>
    tpu.vector_store %arg12[%c0_65, %c0_66], %122 {strides = array<i32>} : memref<128x128xf32, #tpu.memory_space<vmem>>, vector<128x128xf32>,
    %c0_67 = arith.constant 0 : index
    %c0_68 = arith.constant 0 : index
    %124 = tpu.strided_load %arg12[%c0_67, %c0_68] {strides = array<i32: 2, 1>} : memref<128x128xf32, #tpu.memory_space<vmem>>, vector<64x128xf32>
    %c1_69 = arith.constant 1 : index
    %c0_70 = arith.constant 0 : index
    %125 = tpu.strided_load %arg12[%c1_69, %c0_70] {strides = array<i32: 2, 1>} : memref<128x128xf32, #tpu.memory_space<vmem>>, vector<64x128xf32>
    %126 = arith.addf %124, %125 : vector<64x128xf32>
    %cst_71 = arith.constant 2.500000e-01 : f32
    %127 = vector.broadcast %cst_71 : f32 to vector<64x128xf32>
    %128 = arith.mulf %126, %127 : vector<64x128xf32>
    %129 = arith.truncf %128 : vector<64x128xf32> to vector<64x128xbf16>
    %c0_72 = arith.constant 0 : index
    %c0_73 = arith.constant 0 : index
    %130 = vector.load %arg6[%c0_72, %c0_73] : memref<128x128xbf16, #tpu.memory_space<vmem>>, vector<128x128xbf16>
    %cst_74 = arith.constant dense<0.000000e+00> : vector<64x128xf32>
    %131 = tpu.matmul %129, %130, %cst_74 {dimension_numbers = #tpu.dot_dimension_numbers<[1], [0], [0], [1], [0, 0, 1, 1], [], []>} : vector<64x128xbf16>, vector<128x128xbf16>, vector<64x128xf32> -> vector<64x128xf32>
    %c0_75 = arith.constant 0 : index
    %c0_76 = arith.constant 0 : index
    %132 = vector.load %arg7[%c0_75, %c0_76] : memref<1x128xf32, #tpu.memory_space<vmem>>, vector<1x128xf32>
    %133 = vector.broadcast %132 : vector<1x128xf32> to vector<64x128xf32>
    %134 = arith.addf %131, %133 : vector<64x128xf32>
    %135 = arith.extf %4 : vector<256x128xbf16> to vector<256x128xf32>
    %136 = vector.shape_cast %135 : vector<256x128xf32> to vector<8x2x16x128xf32>
    %137 = vector.extract_strided_slice %136 {offsets = [0, 0, 0, 0], sizes = [8, 1, 16, 128], strides = [1, 1, 1, 1]} : vector<8x2x16x128xf32> to vector<8x1x16x128xf32>
    %138 = vector.shape_cast %137 : vector<8x1x16x128xf32> to vector<8x16x128xf32>
    %139 = vector.extract_strided_slice %136 {offsets = [0, 1, 0, 0], sizes = [8, 1, 16, 128], strides = [1, 1, 1, 1]} : vector<8x2x16x128xf32> to vector<8x1x16x128xf32>
    %140 = vector.shape_cast %139 : vector<8x1x16x128xf32> to vector<8x16x128xf32>
    %141 = arith.addf %138, %140 : vector<8x16x128xf32>
    %142 = vector.shape_cast %141 : vector<8x16x128xf32> to vector<128x128xf32>
    %c0_77 = arith.constant 0 : index
    %c0_78 = arith.constant 0 : index
    %143 = vector.load %arg12[%c0_77, %c0_78] : memref<128x128xf32, #tpu.memory_space<vmem>>, vector<128x128xf32>
    tpu.vector_store %arg12[%c0_77, %c0_78], %142 {strides = array<i32>} : memref<128x128xf32, #tpu.memory_space<vmem>>, vector<128x128xf32>,
    %c0_79 = arith.constant 0 : index
    %c0_80 = arith.constant 0 : index
    %144 = tpu.strided_load %arg12[%c0_79, %c0_80] {strides = array<i32: 2, 1>} : memref<128x128xf32, #tpu.memory_space<vmem>>, vector<64x128xf32>
    %c1_81 = arith.constant 1 : index
    %c0_82 = arith.constant 0 : index
    %145 = tpu.strided_load %arg12[%c1_81, %c0_82] {strides = array<i32: 2, 1>} : memref<128x128xf32, #tpu.memory_space<vmem>>, vector<64x128xf32>
    %146 = arith.addf %144, %145 : vector<64x128xf32>
    %cst_83 = arith.constant 2.500000e-01 : f32
    %147 = vector.broadcast %cst_83 : f32 to vector<64x128xf32>
    %148 = arith.mulf %146, %147 : vector<64x128xf32>
    %149 = arith.truncf %148 : vector<64x128xf32> to vector<64x128xbf16>
    %c0_84 = arith.constant 0 : index
    %c0_85 = arith.constant 0 : index
    %150 = vector.load %arg8[%c0_84, %c0_85] : memref<128x128xbf16, #tpu.memory_space<vmem>>, vector<128x128xbf16>
    %cst_86 = arith.constant dense<0.000000e+00> : vector<64x128xf32>
    %151 = tpu.matmul %149, %150, %cst_86 {dimension_numbers = #tpu.dot_dimension_numbers<[1], [0], [0], [1], [0, 0, 1, 1], [], []>} : vector<64x128xbf16>, vector<128x128xbf16>, vector<64x128xf32> -> vector<64x128xf32>
    %c0_87 = arith.constant 0 : index
    %c0_88 = arith.constant 0 : index
    %152 = vector.load %arg9[%c0_87, %c0_88] : memref<1x128xf32, #tpu.memory_space<vmem>>, vector<1x128xf32>
    %153 = vector.broadcast %152 : vector<1x128xf32> to vector<64x128xf32>
    %154 = arith.addf %151, %153 : vector<64x128xf32>
    %155 = arith.addf %134, %154 : vector<64x128xf32>
    %cst_89 = arith.constant 0.000000e+00 : f32
    %156 = vector.broadcast %cst_89 : f32 to vector<64x128xf32>
    %157 = arith.maximumf %155, %156 : vector<64x128xf32>
    %158 = vector.shape_cast %157 : vector<64x128xf32> to vector<1x8x8x128xf32>
    %c0_90 = arith.constant 0 : index
    %c0_91 = arith.constant 0 : index
    %c0_92 = arith.constant 0 : index
    %c0_93 = arith.constant 0 : index
    %159 = vector.load %arg10[%c0_90, %c0_91, %c0_92, %c0_93] : memref<1x8x8x128xf32, #tpu.memory_space<vmem>>, vector<1x8x8x128xf32>
    tpu.vector_store %arg10[%c0_90, %c0_91, %c0_92, %c0_93], %158 {strides = array<i32>} : memref<1x8x8x128xf32, #tpu.memory_space<vmem>>, vector<1x8x8x128xf32>,
    return
  }
  func.func @transform_0(%arg0: i32) -> (i32, i32, i32, i32) {
    %c0_i32 = arith.constant 0 : i32
    %c0_i32_0 = arith.constant 0 : i32
    %c0_i32_1 = arith.constant 0 : i32
    %c0_i32_2 = arith.constant 0 : i32
    return %arg0, %c0_i32, %c0_i32_0, %c0_i32_1 : i32, i32, i32, i32
  }
  func.func @transform_1(%arg0: i32) -> (i32, i32) {
    %c0_i32 = arith.constant 0 : i32
    %c0_i32_0 = arith.constant 0 : i32
    %c0_i32_1 = arith.constant 0 : i32
    return %c0_i32, %c0_i32_0 : i32, i32
  }
  func.func @transform_2(%arg0: i32) -> (i32, i32) {
    %c0_i32 = arith.constant 0 : i32
    %c0_i32_0 = arith.constant 0 : i32
    %c0_i32_1 = arith.constant 0 : i32
    return %c0_i32, %c0_i32_0 : i32, i32
  }
  func.func @transform_3(%arg0: i32) -> (i32, i32, i32) {
    %c0_i32 = arith.constant 0 : i32
    %c0_i32_0 = arith.constant 0 : i32
    %c0_i32_1 = arith.constant 0 : i32
    %c0_i32_2 = arith.constant 0 : i32
    return %c0_i32, %c0_i32_0, %c0_i32_1 : i32, i32, i32
  }
  func.func @transform_4(%arg0: i32) -> (i32, i32) {
    %c0_i32 = arith.constant 0 : i32
    %c0_i32_0 = arith.constant 0 : i32
    %c0_i32_1 = arith.constant 0 : i32
    return %c0_i32, %c0_i32_0 : i32, i32
  }
  func.func @transform_5(%arg0: i32) -> (i32, i32) {
    %c0_i32 = arith.constant 0 : i32
    %c0_i32_0 = arith.constant 0 : i32
    %c0_i32_1 = arith.constant 0 : i32
    return %c0_i32, %c0_i32_0 : i32, i32
  }
  func.func @transform_6(%arg0: i32) -> (i32, i32) {
    %c0_i32 = arith.constant 0 : i32
    %c0_i32_0 = arith.constant 0 : i32
    %c0_i32_1 = arith.constant 0 : i32
    return %c0_i32, %c0_i32_0 : i32, i32
  }
  func.func @transform_7(%arg0: i32) -> (i32, i32) {
    %c0_i32 = arith.constant 0 : i32
    %c0_i32_0 = arith.constant 0 : i32
    %c0_i32_1 = arith.constant 0 : i32
    return %c0_i32, %c0_i32_0 : i32, i32
  }
  func.func @transform_8(%arg0: i32) -> (i32, i32) {
    %c0_i32 = arith.constant 0 : i32
    %c0_i32_0 = arith.constant 0 : i32
    %c0_i32_1 = arith.constant 0 : i32
    return %c0_i32, %c0_i32_0 : i32, i32
  }
  func.func @transform_9(%arg0: i32) -> (i32, i32, i32, i32) {
    %c0_i32 = arith.constant 0 : i32
    %c0_i32_0 = arith.constant 0 : i32
    %c0_i32_1 = arith.constant 0 : i32
    %c0_i32_2 = arith.constant 0 : i32
    return %arg0, %c0_i32, %c0_i32_0, %c0_i32_1 : i32, i32, i32, i32
  }
}

</mosaic_0001>

<llo_original>
// kernel: tpu_custom_call.1
$region0: #{tpu_custom_call.1}
  #allocation0 [shape = 'u32[]', space=smem, size = 0x4, offset = 0x4, fixed_abs, tag = 'smem constant byte address 0x4 - core index']
  #allocation1 [shape = 'u32[72,128]{1,0:T(1,128)}', space=vmem, size = 0x9000, scoped, tag = 'internal scratch']
  #allocation2 [shape = 'bf16[304,128]{1,0:T(8,128)(2,1)}', space=vmem, size = 0x13000, scoped, tag = 'scratch operand']
  #allocation3 [shape = 'f32[128,128]{1,0:T(8,128)}', space=vmem, size = 0x10000, scoped, tag = 'scratch operand']
  %s0 = inlined_call_operand.hbm [shape: bf16[2,16,16,128], index: 0, kind: input, shape index: {}]
  %s1 = inlined_call_operand.hbm [shape: bf16[128,128], index: 1, kind: input, shape index: {}]
  %s2 = inlined_call_operand.vmem [shape: f32[1,128], index: 2, kind: input, shape index: {}]
  %s3 = inlined_call_operand.hbm [shape: bf16[9,128,128], index: 3, kind: input, shape index: {}]
  %s4 = inlined_call_operand.vmem [shape: f32[1,128], index: 4, kind: input, shape index: {}]
  %s5 = inlined_call_operand.hbm [shape: bf16[128,128], index: 5, kind: input, shape index: {}]
  %s6 = inlined_call_operand.vmem [shape: f32[1,128], index: 6, kind: input, shape index: {}]
  %s7 = inlined_call_operand.hbm [shape: bf16[128,128], index: 7, kind: input, shape index: {}]
  %s8 = inlined_call_operand.vmem [shape: f32[1,128], index: 8, kind: input, shape index: {}]
  %s9 = inlined_call_operand.hbm [shape: f32[2,8,8,128], index: 9, kind: output, shape index: {}]
  %s10 = sld [smem:[#allocation0]]
  $region93: #{tpu_custom_call.1} parent=0
    _
  %s12 = ssub.s32 1, %s10
  %s13 = scalar_select 0, %s12, %s10
  $region1: #{tpu_custom_call.1} parent=0
    #allocation4 [shape = 'u8[131072]{0}', space=vmem, size = 0x20000, scoped, tag = 'input window, operand 0']
    #allocation5 [shape = 's32[2]{0}', space=sflag, size = 0x8, scoped, tag = 'scoped memory for tpu_custom_call.1']
    #allocation6 [shape = 's32[2]{0}', space=sflag, size = 0x8, scoped, tag = 'scoped memory for tpu_custom_call.1']
    #allocation7 [shape = 'u8[32768]{0}', space=vmem, size = 0x8000, scoped, tag = 'input window, operand 1, single buffered']
    #allocation8 [shape = 's32[1]{0}', space=sflag, size = 0x4, scoped, tag = 'scoped memory for tpu_custom_call.1']
    #allocation9 [shape = 'u8[294912]{0}', space=vmem, size = 0x48000, scoped, tag = 'input window, operand 3, single buffered']
    #allocation10 [shape = 'u8[32768]{0}', space=vmem, size = 0x8000, scoped, tag = 'input window, operand 5, single buffered']
    #allocation11 [shape = 's32[1]{0}', space=sflag, size = 0x4, scoped, tag = 'scoped memory for tpu_custom_call.1']
    #allocation12 [shape = 'u8[32768]{0}', space=vmem, size = 0x8000, scoped, tag = 'input window, operand 7, single buffered']
    #allocation13 [shape = 'u8[65536]{0}', space=vmem, size = 0x10000, scoped, tag = 'output window, operand 0']
    %14 = vsyncpa [#allocation5], 0
    %s15 = scalar_lea.sflag [#allocation5], 1
    %16 = vsyncpa %s15, 0
    %17 = vsyncpa [#allocation8], 0
    %18 = vsyncpa [#allocation11], 0
    %19 = vsyncpa [#allocation6], 0
    %s20 = scalar_lea.sflag [#allocation6], 1
    %21 = vsyncpa %s20, 0
    loop: start=0, step=1, limit=4
    $region2: #{tpu_custom_call.1} parent=1 // loop_pre_header
      _
    $region3: #{tpu_custom_call.1} parent=1 // loop_header
      %s23 = sphi 0, %s27
      %p24 = scmp.ge.s32.totalorder %s23, 4
      %s33 = sphi 0, %s35
      %s36 = sphi 0, %s33
      %s37 = sphi 0, %s36
      %s53 = sphi 0, %s37
      %s57 = sphi 0, %s57
      %s59 = sphi 0, %s57
      %s60 = sphi 0, %s59
      %s74 = sphi 0, %s60
      %s78 = sphi 0, %s78
      %s80 = sphi 0, %s78
      %s81 = sphi 0, %s80
      %s95 = sphi 0, %s81
      %s99 = sphi 0, %s99
      %s101 = sphi 0, %s99
      %s102 = sphi 0, %s101
      %s116 = sphi 0, %s102
      %s120 = sphi 0, %s120
      %s122 = sphi 0, %s120
      %s123 = sphi 0, %s122
      %s137 = sphi 0, %s123
      %s141 = sphi 0, %s141
      %s143 = sphi 0, %s141
      %s144 = sphi 0, %s143
      %s158 = sphi 0, %s144
      %s162 = sphi 0, %s162
      %s164 = sphi 0, %s162
      %s165 = sphi 0, %s164
      %s179 = sphi 0, %s165
      %s183 = sphi 0, %s183
      %s185 = sphi 0, %s183
      %s186 = sphi 0, %s185
      %s200 = sphi 0, %s186
      %s204 = sphi 0, %s204
      %s206 = sphi 0, %s204
      %s207 = sphi 0, %s206
      %s221 = sphi 0, %s207
      %s227 = sphi 0, %s229
      %s230 = sphi 0, %s227
      %s231 = sphi 0, %s230
      %s247 = sphi 0, %s231
    $region4: #{tpu_custom_call.1} parent=1 // loop_header_branch
      %26 = sbr.rel (%p24) target = $region8
    $region5: #{tpu_custom_call.1} parent=1 // loop_body
      %s28 = ssub.s32 %s23, 1
      %s29 = ssub.s32 %s23, 2
      %s30 = sadd.s32 %s23, 1
      %s31 = ssub.s32 %s23, %s30
      %p32 = scmp.eq.s32.totalorder %s31, 0
      %s34 = sadd.s32 %s33, 1
      %s35 = scalar_select %p32, %s33, %s34
      %p38 = pneg %p32
      %p39 = scmp.eq.s32.totalorder %s23, 1
      %p40 = por %p38, %p39
      %p41 = scmp.ne.s32.totalorder %s33, %s36
      %p42 = scmp.eq.s32.totalorder %s23, 0
      %p43 = por %p41, %p42
      %p44 = scmp.ne.s32.totalorder %s33, %s36
      %p45 = scmp.eq.s32.totalorder %s28, 1
      %p46 = por %p44, %p45
      %p47 = scmp.ne.s32.totalorder %s36, %s37
      %p48 = scmp.eq.s32.totalorder %s28, 0
      %p49 = por %p47, %p48
      %p50 = scmp.ne.s32.totalorder %s36, %s37
      %p51 = scmp.eq.s32.totalorder %s29, 1
      %p52 = por %p50, %p51
      %p54 = scmp.ne.s32.totalorder %s37, %s53
      %p55 = scmp.eq.s32.totalorder %s29, 0
      %p56 = por %p54, %p55
      %s58 = sadd.s32 %s57, 1
      %p61 = scmp.eq.s32.totalorder %s23, 1
      %p62 = scmp.ne.s32.totalorder %s57, %s59
      %p63 = scmp.eq.s32.totalorder %s23, 0
      %p64 = por %p62, %p63
      %p65 = scmp.ne.s32.totalorder %s57, %s59
      %p66 = scmp.eq.s32.totalorder %s28, 1
      %p67 = por %p65, %p66
      %p68 = scmp.ne.s32.totalorder %s59, %s60
      %p69 = scmp.eq.s32.totalorder %s28, 0
      %p70 = por %p68, %p69
      %p71 = scmp.ne.s32.totalorder %s59, %s60
      %p72 = scmp.eq.s32.totalorder %s29, 1
      %p73 = por %p71, %p72
      %p75 = scmp.ne.s32.totalorder %s60, %s74
      %p76 = scmp.eq.s32.totalorder %s29, 0
      %p77 = por %p75, %p76
      %s79 = sadd.s32 %s78, 1
      %p82 = scmp.eq.s32.totalorder %s23, 1
      %p83 = scmp.ne.s32.totalorder %s78, %s80
      %p84 = scmp.eq.s32.totalorder %s23, 0
      %p85 = por %p83, %p84
      %p86 = scmp.ne.s32.totalorder %s78, %s80
      %p87 = scmp.eq.s32.totalorder %s28, 1
      %p88 = por %p86, %p87
      %p89 = scmp.ne.s32.totalorder %s80, %s81
      %p90 = scmp.eq.s32.totalorder %s28, 0
      %p91 = por %p89, %p90
      %p92 = scmp.ne.s32.totalorder %s80, %s81
      %p93 = scmp.eq.s32.totalorder %s29, 1
      %p94 = por %p92, %p93
      %p96 = scmp.ne.s32.totalorder %s81, %s95
      %p97 = scmp.eq.s32.totalorder %s29, 0
      %p98 = por %p96, %p97
      %s100 = sadd.s32 %s99, 1
      %p103 = scmp.eq.s32.totalorder %s23, 1
      %p104 = scmp.ne.s32.totalorder %s99, %s101
      %p105 = scmp.eq.s32.totalorder %s23, 0
      %p106 = por %p104, %p105
      %p107 = scmp.ne.s32.totalorder %s99, %s101
      %p108 = scmp.eq.s32.totalorder %s28, 1
      %p109 = por %p107, %p108
      %p110 = scmp.ne.s32.totalorder %s101, %s102
      %p111 = scmp.eq.s32.totalorder %s28, 0
      %p112 = por %p110, %p111
      %p113 = scmp.ne.s32.totalorder %s101, %s102
      %p114 = scmp.eq.s32.totalorder %s29, 1
      %p115 = por %p113, %p114
      %p117 = scmp.ne.s32.totalorder %s102, %s116
      %p118 = scmp.eq.s32.totalorder %s29, 0
      %p119 = por %p117, %p118
      %s121 = sadd.s32 %s120, 1
      %p124 = scmp.eq.s32.totalorder %s23, 1
      %p125 = scmp.ne.s32.totalorder %s120, %s122
      %p126 = scmp.eq.s32.totalorder %s23, 0
      %p127 = por %p125, %p126
      %p128 = scmp.ne.s32.totalorder %s120, %s122
      %p129 = scmp.eq.s32.totalorder %s28, 1
      %p130 = por %p128, %p129
      %p131 = scmp.ne.s32.totalorder %s122, %s123
      %p132 = scmp.eq.s32.totalorder %s28, 0
      %p133 = por %p131, %p132
      %p134 = scmp.ne.s32.totalorder %s122, %s123
      %p135 = scmp.eq.s32.totalorder %s29, 1
      %p136 = por %p134, %p135
      %p138 = scmp.ne.s32.totalorder %s123, %s137
      %p139 = scmp.eq.s32.totalorder %s29, 0
      %p140 = por %p138, %p139
      %s142 = sadd.s32 %s141, 1
      %p145 = scmp.eq.s32.totalorder %s23, 1
      %p146 = scmp.ne.s32.totalorder %s141, %s143
      %p147 = scmp.eq.s32.totalorder %s23, 0
      %p148 = por %p146, %p147
      %p149 = scmp.ne.s32.totalorder %s141, %s143
      %p150 = scmp.eq.s32.totalorder %s28, 1
      %p151 = por %p149, %p150
      %p152 = scmp.ne.s32.totalorder %s143, %s144
      %p153 = scmp.eq.s32.totalorder %s28, 0
      %p154 = por %p152, %p153
      %p155 = scmp.ne.s32.totalorder %s143, %s144
      %p156 = scmp.eq.s32.totalorder %s29, 1
      %p157 = por %p155, %p156
      %p159 = scmp.ne.s32.totalorder %s144, %s158
      %p160 = scmp.eq.s32.totalorder %s29, 0
      %p161 = por %p159, %p160
      %s163 = sadd.s32 %s162, 1
      %p166 = scmp.eq.s32.totalorder %s23, 1
      %p167 = scmp.ne.s32.totalorder %s162, %s164
      %p168 = scmp.eq.s32.totalorder %s23, 0
      %p169 = por %p167, %p168
      %p170 = scmp.ne.s32.totalorder %s162, %s164
      %p171 = scmp.eq.s32.totalorder %s28, 1
      %p172 = por %p170, %p171
      %p173 = scmp.ne.s32.totalorder %s164, %s165
      %p174 = scmp.eq.s32.totalorder %s28, 0
      %p175 = por %p173, %p174
      %p176 = scmp.ne.s32.totalorder %s164, %s165
      %p177 = scmp.eq.s32.totalorder %s29, 1
      %p178 = por %p176, %p177
      %p180 = scmp.ne.s32.totalorder %s165, %s179
      %p181 = scmp.eq.s32.totalorder %s29, 0
      %p182 = por %p180, %p181
      %s184 = sadd.s32 %s183, 1
      %p187 = scmp.eq.s32.totalorder %s23, 1
      %p188 = scmp.ne.s32.totalorder %s183, %s185
      %p189 = scmp.eq.s32.totalorder %s23, 0
      %p190 = por %p188, %p189
      %p191 = scmp.ne.s32.totalorder %s183, %s185
      %p192 = scmp.eq.s32.totalorder %s28, 1
      %p193 = por %p191, %p192
      %p194 = scmp.ne.s32.totalorder %s185, %s186
      %p195 = scmp.eq.s32.totalorder %s28, 0
      %p196 = por %p194, %p195
      %p197 = scmp.ne.s32.totalorder %s185, %s186
      %p198 = scmp.eq.s32.totalorder %s29, 1
      %p199 = por %p197, %p198
      %p201 = scmp.ne.s32.totalorder %s186, %s200
      %p202 = scmp.eq.s32.totalorder %s29, 0
      %p203 = por %p201, %p202
      %s205 = sadd.s32 %s204, 1
      %p208 = scmp.eq.s32.totalorder %s23, 1
      %p209 = scmp.ne.s32.totalorder %s204, %s206
      %p210 = scmp.eq.s32.totalorder %s23, 0
      %p211 = por %p209, %p210
      %p212 = scmp.ne.s32.totalorder %s204, %s206
      %p213 = scmp.eq.s32.totalorder %s28, 1
      %p214 = por %p212, %p213
      %p215 = scmp.ne.s32.totalorder %s206, %s207
      %p216 = scmp.eq.s32.totalorder %s28, 0
      %p217 = por %p215, %p216
      %p218 = scmp.ne.s32.totalorder %s206, %s207
      %p219 = scmp.eq.s32.totalorder %s29, 1
      %p220 = por %p218, %p219
      %p222 = scmp.ne.s32.totalorder %s207, %s221
      %p223 = scmp.eq.s32.totalorder %s29, 0
      %p224 = por %p222, %p223
      %s225 = ssub.s32 %s23, %s30
      %p226 = scmp.eq.s32.totalorder %s225, 0
      %s228 = sadd.s32 %s227, 1
      %s229 = scalar_select %p226, %s227, %s228
      %p232 = pneg %p226
      %p233 = scmp.eq.s32.totalorder %s23, 1
      %p234 = por %p232, %p233
      %p235 = scmp.ne.s32.totalorder %s227, %s230
      %p236 = scmp.eq.s32.totalorder %s23, 0
      %p237 = por %p235, %p236
      %p238 = scmp.ne.s32.totalorder %s227, %s230
      %p239 = scmp.eq.s32.totalorder %s28, 1
      %p240 = por %p238, %p239
      %p241 = scmp.ne.s32.totalorder %s230, %s231
      %p242 = scmp.eq.s32.totalorder %s28, 0
      %p243 = por %p241, %p242
      %p244 = scmp.ne.s32.totalorder %s230, %s231
      %p245 = scmp.eq.s32.totalorder %s29, 1
      %p246 = por %p244, %p245
      %p248 = scmp.ne.s32.totalorder %s231, %s247
      %p249 = scmp.eq.s32.totalorder %s29, 0
      %p250 = por %p248, %p249
      %p251 = scmp.le.s32.totalorder 1, %s23
      %p252 = scmp.lt.s32.totalorder %s23, 3
      %p253 = pnand %p251, %p252
      %p254 = pneg %p253
      // Predicated region
      $region9: #{tpu_custom_call.1} parent=5 // pred_check
        _
      $region10: #{tpu_custom_call.1} parent=5 // pred_check_branch
        %256 = sbr.rel (%p253) target = $region12
      $region11: #{tpu_custom_call.1} parent=5 // pred_region
        %s257 = ssub.s32 %s23, 1
        // Predicated region
        $region13: #{tpu_custom_call.1} parent=11 // pred_check
          %p258 = pneg %p70
        $region14: #{tpu_custom_call.1} parent=11 // pred_check_branch
          %260 = sbr.rel (%p258) target = $region16
        $region15: #{tpu_custom_call.1} parent=11 // pred_region
          %262 = vsyncadd [#allocation8], 0
          %s263 = sshll.u32 %s1, 4
          %s264 = int_to_ptr.hbm [resolvable:$true] %s263
          %s265 = sshll.u32 [#allocation7], 4
          %s266 = int_to_ptr.vmem [resolvable:$true] %s265
          %271 = dma.hbm_to_vmem [thread:$0]  %s264, 1024, %s266, [#allocation8], 64, 64, 4
        $region16: #{tpu_custom_call.1} parent=11 // pred_fallthru
          _
        // Predicated region
        $region17: #{tpu_custom_call.1} parent=11 // pred_check
          %p272 = pneg %p91
        $region18: #{tpu_custom_call.1} parent=11 // pred_check_branch
          %274 = sbr.rel (%p272) target = $region20
        $region19: #{tpu_custom_call.1} parent=11 // pred_region
          _
        $region20: #{tpu_custom_call.1} parent=11 // pred_fallthru
          _
        // Predicated region
        $region21: #{tpu_custom_call.1} parent=11 // pred_check
          %p275 = pneg %p112
        $region22: #{tpu_custom_call.1} parent=11 // pred_check_branch
          %277 = sbr.rel (%p275) target = $region24
        $region23: #{tpu_custom_call.1} parent=11 // pred_region
          %279 = vsyncadd [#allocation8], 0
          %s280 = sshll.u32 %s3, 4
          %s281 = int_to_ptr.hbm [resolvable:$true] %s280
          %s282 = sshll.u32 [#allocation9], 4
          %s283 = int_to_ptr.vmem [resolvable:$true] %s282
          %288 = dma.hbm_to_vmem [thread:$0]  %s281, 9216, %s283, [#allocation8], 64, 64, 4
        $region24: #{tpu_custom_call.1} parent=11 // pred_fallthru
          _
        // Predicated region
        $region25: #{tpu_custom_call.1} parent=11 // pred_check
          %p289 = pneg %p133
        $region26: #{tpu_custom_call.1} parent=11 // pred_check_branch
          %291 = sbr.rel (%p289) target = $region28
        $region27: #{tpu_custom_call.1} parent=11 // pred_region
          _
        $region28: #{tpu_custom_call.1} parent=11 // pred_fallthru
          _
        // Predicated region
        $region29: #{tpu_custom_call.1} parent=11 // pred_check
          %p292 = pneg %p154
        $region30: #{tpu_custom_call.1} parent=11 // pred_check_branch
          %294 = sbr.rel (%p292) target = $region32
        $region31: #{tpu_custom_call.1} parent=11 // pred_region
          %296 = vsyncadd [#allocation11], 0
          %s297 = sshll.u32 %s5, 4
          %s298 = int_to_ptr.hbm [resolvable:$true] %s297
          %s299 = sshll.u32 [#allocation10], 4
          %s300 = int_to_ptr.vmem [resolvable:$true] %s299
          %305 = dma.hbm_to_vmem [thread:$0]  %s298, 1024, %s300, [#allocation11], 64, 64, 4
        $region32: #{tpu_custom_call.1} parent=11 // pred_fallthru
          _
        // Predicated region
        $region33: #{tpu_custom_call.1} parent=11 // pred_check
          %p306 = pneg %p175
        $region34: #{tpu_custom_call.1} parent=11 // pred_check_branch
          %308 = sbr.rel (%p306) target = $region36
        $region35: #{tpu_custom_call.1} parent=11 // pred_region
          _
        $region36: #{tpu_custom_call.1} parent=11 // pred_fallthru
          _
        // Predicated region
        $region37: #{tpu_custom_call.1} parent=11 // pred_check
          %p309 = pneg %p196
        $region38: #{tpu_custom_call.1} parent=11 // pred_check_branch
          %311 = sbr.rel (%p309) target = $region40
        $region39: #{tpu_custom_call.1} parent=11 // pred_region
          %313 = vsyncadd [#allocation11], 0
          %s314 = sshll.u32 %s7, 4
          %s315 = int_to_ptr.hbm [resolvable:$true] %s314
          %s316 = sshll.u32 [#allocation12], 4
          %s317 = int_to_ptr.vmem [resolvable:$true] %s316
          %322 = dma.hbm_to_vmem [thread:$0]  %s315, 1024, %s317, [#allocation11], 64, 64, 4
        $region40: #{tpu_custom_call.1} parent=11 // pred_fallthru
          _
        // Predicated region
        $region41: #{tpu_custom_call.1} parent=11 // pred_check
          %p323 = pneg %p217
        $region42: #{tpu_custom_call.1} parent=11 // pred_check_branch
          %325 = sbr.rel (%p323) target = $region44
        $region43: #{tpu_custom_call.1} parent=11 // pred_region
          _
        $region44: #{tpu_custom_call.1} parent=11 // pred_fallthru
          _
      $region12: #{tpu_custom_call.1} parent=5 // pred_fallthru
        _
      %p326 = scmp.lt.s32.totalorder %s23, 2
      // Predicated region
      $region45: #{tpu_custom_call.1} parent=5 // pred_check
        %p327 = pneg %p326
      $region46: #{tpu_custom_call.1} parent=5 // pred_check_branch
        %329 = sbr.rel (%p327) target = $region48
      $region47: #{tpu_custom_call.1} parent=5 // pred_region
        // Predicated region
        $region49: #{tpu_custom_call.1} parent=47 // pred_check
          %p330 = pneg %p43
        $region50: #{tpu_custom_call.1} parent=47 // pred_check_branch
          %332 = sbr.rel (%p330) target = $region52
        $region51: #{tpu_custom_call.1} parent=47 // pred_region
          %s333 = sand.u32 %s33, 1
          %s334 = scalar_lea.sflag [#allocation5], %s333
          %s335 = sand.u32 %s33, 1
          %s336 = smul.addr %s335, 128
          %s337 = scalar_lea.vmem [#allocation4], %s336
          %339 = vsyncadd %s334, 0
          %s340 = smul.addr %s23, 32
          %s341 = smul.addr %s340, 4
          %s342 = scalar_lea.hbm %s0, %s341
          %s343 = sshll.u32 %s342, 4
          %s344 = int_to_ptr.hbm [resolvable:$true] %s343
          %s345 = sshll.u32 %s337, 4
          %s346 = int_to_ptr.vmem [resolvable:$true] %s345
          %351 = dma.hbm_to_vmem [thread:$0]  %s344, 2048, %s346, %s334, 64, 64, 4
        $region52: #{tpu_custom_call.1} parent=47 // pred_fallthru
          _
      $region48: #{tpu_custom_call.1} parent=5 // pred_fallthru
        _
      %p352 = scmp.le.s32.totalorder 1, %s23
      %p353 = scmp.lt.s32.totalorder %s23, 3
      %p354 = pnand %p352, %p353
      %p355 = pneg %p354
      // Predicated region
      $region53: #{tpu_custom_call.1} parent=5 // pred_check
        _
      $region54: #{tpu_custom_call.1} parent=5 // pred_check_branch
        %357 = sbr.rel (%p354) target = $region56
      $region55: #{tpu_custom_call.1} parent=5 // pred_region
        %s358 = ssub.s32 %s23, 1
        %s359 = sand.u32 %s36, 1
        %s360 = scalar_lea.sflag [#allocation5], %s359
        %s361 = sand.u32 %s36, 1
        %s362 = smul.addr %s361, 128
        %s363 = scalar_lea.vmem [#allocation4], %s362
        // Predicated region
        $region57: #{tpu_custom_call.1} parent=55 // pred_check
          %p364 = pneg %p49
        $region58: #{tpu_custom_call.1} parent=55 // pred_check_branch
          %366 = sbr.rel (%p364) target = $region60
        $region59: #{tpu_custom_call.1} parent=55 // pred_region
          %368 = dma.done %s360, 2048
        $region60: #{tpu_custom_call.1} parent=55 // pred_fallthru
          _
        // Predicated region
        $region61: #{tpu_custom_call.1} parent=55 // pred_check
          %p369 = pneg %p70
        $region62: #{tpu_custom_call.1} parent=55 // pred_check_branch
          %371 = sbr.rel (%p369) target = $region64
        $region63: #{tpu_custom_call.1} parent=55 // pred_region
          %373 = dma.done [#allocation8], 1024
        $region64: #{tpu_custom_call.1} parent=55 // pred_fallthru
          _
        // Predicated region
        $region65: #{tpu_custom_call.1} parent=55 // pred_check
          %p374 = pneg %p112
        $region66: #{tpu_custom_call.1} parent=55 // pred_check_branch
          %376 = sbr.rel (%p374) target = $region68
        $region67: #{tpu_custom_call.1} parent=55 // pred_region
          %378 = dma.done [#allocation8], 9216
        $region68: #{tpu_custom_call.1} parent=55 // pred_fallthru
          _
        // Predicated region
        $region69: #{tpu_custom_call.1} parent=55 // pred_check
          %p379 = pneg %p154
        $region70: #{tpu_custom_call.1} parent=55 // pred_check_branch
          %381 = sbr.rel (%p379) target = $region72
        $region71: #{tpu_custom_call.1} parent=55 // pred_region
          %383 = dma.done [#allocation11], 1024
        $region72: #{tpu_custom_call.1} parent=55 // pred_fallthru
          _
        // Predicated region
        $region73: #{tpu_custom_call.1} parent=55 // pred_check
          %p384 = pneg %p196
        $region74: #{tpu_custom_call.1} parent=55 // pred_check_branch
          %386 = sbr.rel (%p384) target = $region76
        $region75: #{tpu_custom_call.1} parent=55 // pred_region
          %388 = dma.done [#allocation11], 1024
        $region76: #{tpu_custom_call.1} parent=55 // pred_fallthru
          _
        %s389 = sand.u32 %s36, 1
        %s390 = scalar_lea.sflag [#allocation5], %s389
        %s391 = sand.u32 %s36, 1
        %s392 = smul.addr %s391, 128
        %s393 = scalar_lea.vmem [#allocation4], %s392
        %p394 = pneg %p49
        %p395 = pneg %p46
        %p396 = pneg %p70
        %p397 = pneg %p67
        %p398 = pneg %p91
        %p399 = pneg %p88
        %p400 = pneg %p112
        %p401 = pneg %p109
        %p402 = pneg %p133
        %p403 = pneg %p130
        %p404 = pneg %p154
        %p405 = pneg %p151
        %p406 = pneg %p175
        %p407 = pneg %p172
        %p408 = pneg %p196
        %p409 = pneg %p193
        %p410 = pneg %p217
        %p411 = pneg %p214
        %p412 = pneg %p243
        %p413 = pneg %p240
        %s414 = sand.u32 %s230, 1
        %s415 = scalar_lea.sflag [#allocation6], %s414
        %s416 = sand.u32 %s230, 1
        %s417 = smul.addr %s416, 64
        %s418 = scalar_lea.vmem [#allocation13], %s417
        %p422 = scmp.eq.s32.totalorder %s28, 0
        // Predicated region
        $region77: #{tpu_custom_call.1} parent=55 // pred_check
          %p423 = pneg %p422
        $region78: #{tpu_custom_call.1} parent=55 // pred_check_branch
          %425 = sbr.rel (%p423) target = $region80
        $region79: #{tpu_custom_call.1} parent=55 // pred_region
          %426 = vst [vmem:[#allocation2] sm:$0xf] 0
          %427 = vst [vmem:[#allocation2 + $0x4] sm:$0xf] 0
          %428 = vst [vmem:[#allocation2 + $0x8] sm:$0xf] 0
          %429 = vst [vmem:[#allocation2 + $0x8c] sm:$0xf] 0
          %430 = vst [vmem:[#allocation2 + $0x90] sm:$0xf] 0
          %431 = vst [vmem:[#allocation2 + $0x94] sm:$0xf] 0
        $region80: #{tpu_custom_call.1} parent=55 // pred_fallthru
          _
        %v432 = vld [vmem:[%s363] sm:$0xf]
        %v433 = vld [vmem:[%s363 + $0x4] sm:$0xf]
        %v434 = vld [vmem:[%s363 + $0x8] sm:$0xf]
        %v435 = vld [vmem:[%s363 + $0xc] sm:$0xf]
        %v436 = vld [vmem:[%s363 + $0x10] sm:$0xf]
        %v437 = vld [vmem:[%s363 + $0x14] sm:$0xf]
        %v438 = vld [vmem:[%s363 + $0x18] sm:$0xf]
        %v439 = vld [vmem:[%s363 + $0x1c] sm:$0xf]
        %v440 = vld [vmem:[%s363 + $0x20] sm:$0xf]
        %v441 = vld [vmem:[%s363 + $0x24] sm:$0xf]
        %v442 = vld [vmem:[%s363 + $0x28] sm:$0xf]
        %v443 = vld [vmem:[%s363 + $0x2c] sm:$0xf]
        %v444 = vld [vmem:[%s363 + $0x30] sm:$0xf]
        %v445 = vld [vmem:[%s363 + $0x34] sm:$0xf]
        %v446 = vld [vmem:[%s363 + $0x38] sm:$0xf]
        %v447 = vld [vmem:[%s363 + $0x3c] sm:$0xf]
        %v448 = vld [vmem:[%s363 + $0x40] sm:$0xf]
        %v449 = vld [vmem:[%s363 + $0x44] sm:$0xf]
        %v450 = vld [vmem:[%s363 + $0x48] sm:$0xf]
        %v451 = vld [vmem:[%s363 + $0x4c] sm:$0xf]
        %v452 = vld [vmem:[%s363 + $0x50] sm:$0xf]
        %v453 = vld [vmem:[%s363 + $0x54] sm:$0xf]
        %v454 = vld [vmem:[%s363 + $0x58] sm:$0xf]
        %v455 = vld [vmem:[%s363 + $0x5c] sm:$0xf]
        %v456 = vld [vmem:[%s363 + $0x60] sm:$0xf]
        %v457 = vld [vmem:[%s363 + $0x64] sm:$0xf]
        %v458 = vld [vmem:[%s363 + $0x68] sm:$0xf]
        %v459 = vld [vmem:[%s363 + $0x6c] sm:$0xf]
        %v460 = vld [vmem:[%s363 + $0x70] sm:$0xf]
        %v461 = vld [vmem:[%s363 + $0x74] sm:$0xf]
        %v462 = vld [vmem:[%s363 + $0x78] sm:$0xf]
        %v463 = vld [vmem:[%s363 + $0x7c] sm:$0xf]
        %v464 = vld [vmem:[#allocation7] sm:$0xf]
        %v465 = vld [vmem:[#allocation7 + $0x4] sm:$0xf]
        %v466 = vld [vmem:[#allocation7 + $0x8] sm:$0xf]
        %v467 = vld [vmem:[#allocation7 + $0xc] sm:$0xf]
        %v468 = vld [vmem:[#allocation7 + $0x10] sm:$0xf]
        %v469 = vld [vmem:[#allocation7 + $0x14] sm:$0xf]
        %v470 = vld [vmem:[#allocation7 + $0x18] sm:$0xf]
        %v471 = vld [vmem:[#allocation7 + $0x1c] sm:$0xf]
        %v472 = vld [vmem:[#allocation7 + $0x20] sm:$0xf]
        %v473 = vld [vmem:[#allocation7 + $0x24] sm:$0xf]
        %v474 = vld [vmem:[#allocation7 + $0x28] sm:$0xf]
        %v475 = vld [vmem:[#allocation7 + $0x2c] sm:$0xf]
        %v476 = vld [vmem:[#allocation7 + $0x30] sm:$0xf]
        %v477 = vld [vmem:[#allocation7 + $0x34] sm:$0xf]
        %v478 = vld [vmem:[#allocation7 + $0x38] sm:$0xf]
        %v479 = vld [vmem:[#allocation7 + $0x3c] sm:$0xf]
        %v480 = vld [vmem:[%s2] sm:$0x1]
        %v482 = vperm.slane %v480, 0
        %v516 = vunpack.c.l.b16 %v432
        %v517 = vunpack.c.l.b16 %v433
        %v518 = vunpack.c.l.b16 %v434
        %v519 = vunpack.c.l.b16 %v435
        %v520 = vunpack.c.l.b16 %v436
        %v521 = vunpack.c.l.b16 %v437
        %v522 = vunpack.c.l.b16 %v438
        %v523 = vunpack.c.l.b16 %v439
        %v524 = vunpack.c.l.b16 %v440
        %v525 = vunpack.c.l.b16 %v441
        %v526 = vunpack.c.l.b16 %v442
        %v527 = vunpack.c.l.b16 %v443
        %v528 = vunpack.c.l.b16 %v444
        %v529 = vunpack.c.l.b16 %v445
        %v530 = vunpack.c.l.b16 %v446
        %v531 = vunpack.c.l.b16 %v447
        %v532 = vunpack.c.l.b16 %v448
        %v533 = vunpack.c.l.b16 %v449
        %v534 = vunpack.c.l.b16 %v450
        %v535 = vunpack.c.l.b16 %v451
        %v536 = vunpack.c.l.b16 %v452
        %v537 = vunpack.c.l.b16 %v453
        %v538 = vunpack.c.l.b16 %v454
        %v539 = vunpack.c.l.b16 %v455
        %v540 = vunpack.c.l.b16 %v456
        %v541 = vunpack.c.l.b16 %v457
        %v542 = vunpack.c.l.b16 %v458
        %v543 = vunpack.c.l.b16 %v459
        %v544 = vunpack.c.l.b16 %v460
        %v545 = vunpack.c.l.b16 %v461
        %v546 = vunpack.c.l.b16 %v462
        %v547 = vunpack.c.l.b16 %v463
        %v548 = vpack.c.b16 %v517, %v516
        %v549 = vpack.c.b16 %v519, %v518
        %v550 = vpack.c.b16 %v521, %v520
        %v551 = vpack.c.b16 %v523, %v522
        %v552 = vpack.c.b16 %v525, %v524
        %v553 = vpack.c.b16 %v527, %v526
        %v554 = vpack.c.b16 %v529, %v528
        %v555 = vpack.c.b16 %v531, %v530
        %v556 = vpack.c.b16 %v533, %v532
        %v557 = vpack.c.b16 %v535, %v534
        %v558 = vpack.c.b16 %v537, %v536
        %v559 = vpack.c.b16 %v539, %v538
        %v560 = vpack.c.b16 %v541, %v540
        %v561 = vpack.c.b16 %v543, %v542
        %v562 = vpack.c.b16 %v545, %v544
        %v563 = vpack.c.b16 %v547, %v546
        %v596 = vunpack.c.l.b16 %v464
        %v597 = vunpack.c.l.b16 %v465
        %v598 = vunpack.c.l.b16 %v466
        %v599 = vunpack.c.l.b16 %v467
        %v600 = vunpack.c.l.b16 %v468
        %v601 = vunpack.c.l.b16 %v469
        %v602 = vunpack.c.l.b16 %v470
        %v603 = vunpack.c.l.b16 %v471
        %v604 = vunpack.c.l.b16 %v472
        %v605 = vunpack.c.l.b16 %v473
        %v606 = vunpack.c.l.b16 %v474
        %v607 = vunpack.c.l.b16 %v475
        %v608 = vunpack.c.l.b16 %v476
        %v609 = vunpack.c.l.b16 %v477
        %v610 = vunpack.c.l.b16 %v478
        %v611 = vunpack.c.l.b16 %v479
        %v612 = vpack.c.b16 %v597, %v596
        %v613 = vpack.c.b16 %v599, %v598
        %v614 = vpack.c.b16 %v601, %v600
        %v615 = vpack.c.b16 %v603, %v602
        %v616 = vpack.c.b16 %v605, %v604
        %v617 = vpack.c.b16 %v607, %v606
        %v618 = vpack.c.b16 %v609, %v608
        %v619 = vpack.c.b16 %v611, %v610
        %628 = vmatpush.bf16.msra.mxu0 %v619
        %629 = vmatpush.bf16.msra.mxu0 %v618
        %630 = vmatpush.bf16.msra.mxu0 %v617
        %631 = vmatpush.bf16.msra.mxu0 %v616
        %632 = vmatpush.bf16.msra.mxu0 %v615
        %633 = vmatpush.bf16.msra.mxu0 %v614
        %634 = vmatpush.bf16.msra.mxu0 %v613
        %635 = vmatpush.bf16.msra.mxu0 %v612
        %636 = vmatmul.bf16.gmra.mxu0 %v548
        %v637 = vpop.f32.mrf.mxu0
        %v638 = vadd.f32 %v482, %v637
        %v639 = vpop.f32.mrf.mxu0
        %v640 = vadd.f32 %v482, %v639
        %641 = vmatmul.bf16.gmra.mxu0 %v549
        %v642 = vpop.f32.mrf.mxu0
        %v643 = vadd.f32 %v482, %v642
        %v644 = vpop.f32.mrf.mxu0
        %v645 = vadd.f32 %v482, %v644
        %646 = vmatmul.bf16.gmra.mxu0 %v550
        %v647 = vpop.f32.mrf.mxu0
        %v648 = vadd.f32 %v482, %v647
        %v649 = vpop.f32.mrf.mxu0
        %v650 = vadd.f32 %v482, %v649
        %651 = vmatmul.bf16.gmra.mxu0 %v551
        %v652 = vpop.f32.mrf.mxu0
        %v653 = vadd.f32 %v482, %v652
        %v654 = vpop.f32.mrf.mxu0
        %v655 = vadd.f32 %v482, %v654
        %656 = vmatmul.bf16.gmra.mxu0 %v552
        %v657 = vpop.f32.mrf.mxu0
        %v658 = vadd.f32 %v482, %v657
        %v659 = vpop.f32.mrf.mxu0
        %v660 = vadd.f32 %v482, %v659
        %661 = vmatmul.bf16.gmra.mxu0 %v553
        %v662 = vpop.f32.mrf.mxu0
        %v663 = vadd.f32 %v482, %v662
        %v664 = vpop.f32.mrf.mxu0
        %v665 = vadd.f32 %v482, %v664
        %666 = vmatmul.bf16.gmra.mxu0 %v554
        %v667 = vpop.f32.mrf.mxu0
        %v668 = vadd.f32 %v482, %v667
        %v669 = vpop.f32.mrf.mxu0
        %v670 = vadd.f32 %v482, %v669
        %671 = vmatmul.bf16.gmra.mxu0 %v555
        %v672 = vpop.f32.mrf.mxu0
        %v673 = vadd.f32 %v482, %v672
        %v674 = vpop.f32.mrf.mxu0
        %v675 = vadd.f32 %v482, %v674
        %676 = vmatmul.bf16.gmra.mxu0 %v556
        %v677 = vpop.f32.mrf.mxu0
        %v678 = vadd.f32 %v482, %v677
        %v679 = vpop.f32.mrf.mxu0
        %v680 = vadd.f32 %v482, %v679
        %681 = vmatmul.bf16.gmra.mxu0 %v557
        %v682 = vpop.f32.mrf.mxu0
        %v683 = vadd.f32 %v482, %v682
        %v684 = vpop.f32.mrf.mxu0
        %v685 = vadd.f32 %v482, %v684
        %686 = vmatmul.bf16.gmra.mxu0 %v558
        %v687 = vpop.f32.mrf.mxu0
        %v688 = vadd.f32 %v482, %v687
        %v689 = vpop.f32.mrf.mxu0
        %v690 = vadd.f32 %v482, %v689
        %691 = vmatmul.bf16.gmra.mxu0 %v559
        %v692 = vpop.f32.mrf.mxu0
        %v693 = vadd.f32 %v482, %v692
        %v694 = vpop.f32.mrf.mxu0
        %v695 = vadd.f32 %v482, %v694
        %696 = vmatmul.bf16.gmra.mxu0 %v560
        %v697 = vpop.f32.mrf.mxu0
        %v698 = vadd.f32 %v482, %v697
        %v699 = vpop.f32.mrf.mxu0
        %v700 = vadd.f32 %v482, %v699
        %701 = vmatmul.bf16.gmra.mxu0 %v561
        %v702 = vpop.f32.mrf.mxu0
        %v703 = vadd.f32 %v482, %v702
        %v704 = vpop.f32.mrf.mxu0
        %v705 = vadd.f32 %v482, %v704
        %706 = vmatmul.bf16.gmra.mxu0 %v562
        %v707 = vpop.f32.mrf.mxu0
        %v708 = vadd.f32 %v482, %v707
        %v709 = vpop.f32.mrf.mxu0
        %v710 = vadd.f32 %v482, %v709
        %711 = vmatmul.bf16.gmra.mxu0 %v563
        %v712 = vpop.f32.mrf.mxu0
        %v713 = vadd.f32 %v482, %v712
        %v714 = vpop.f32.mrf.mxu0
        %v715 = vadd.f32 %v482, %v714
        %716 = vdwg.mxu0
        %v717 = vmax.f32 %v638, 0.0
        %v718 = vmax.f32 %v640, 0.0
        %v719 = vmax.f32 %v643, 0.0
        %v720 = vmax.f32 %v645, 0.0
        %v721 = vmax.f32 %v648, 0.0
        %v722 = vmax.f32 %v650, 0.0
        %v723 = vmax.f32 %v653, 0.0
        %v724 = vmax.f32 %v655, 0.0
        %v725 = vmax.f32 %v658, 0.0
        %v726 = vmax.f32 %v660, 0.0
        %v727 = vmax.f32 %v663, 0.0
        %v728 = vmax.f32 %v665, 0.0
        %v729 = vmax.f32 %v668, 0.0
        %v730 = vmax.f32 %v670, 0.0
        %v731 = vmax.f32 %v673, 0.0
        %v732 = vmax.f32 %v675, 0.0
        %v733 = vmax.f32 %v678, 0.0
        %v734 = vmax.f32 %v680, 0.0
        %v735 = vmax.f32 %v683, 0.0
        %v736 = vmax.f32 %v685, 0.0
        %v737 = vmax.f32 %v688, 0.0
        %v738 = vmax.f32 %v690, 0.0
        %v739 = vmax.f32 %v693, 0.0
        %v740 = vmax.f32 %v695, 0.0
        %v741 = vmax.f32 %v698, 0.0
        %v742 = vmax.f32 %v700, 0.0
        %v743 = vmax.f32 %v703, 0.0
        %v744 = vmax.f32 %v705, 0.0
        %v745 = vmax.f32 %v708, 0.0
        %v746 = vmax.f32 %v710, 0.0
        %v747 = vmax.f32 %v713, 0.0
        %v748 = vmax.f32 %v715, 0.0
        %v749 = vpack.c.bf16 %v717, %v717
        %v750 = vpack.c.bf16 %v718, %v718
        %v751 = vpack.c.bf16 %v719, %v719
        %v752 = vpack.c.bf16 %v720, %v720
        %v753 = vpack.c.bf16 %v721, %v721
        %v754 = vpack.c.bf16 %v722, %v722
        %v755 = vpack.c.bf16 %v723, %v723
        %v756 = vpack.c.bf16 %v724, %v724
        %v757 = vpack.c.bf16 %v725, %v725
        %v758 = vpack.c.bf16 %v726, %v726
        %v759 = vpack.c.bf16 %v727, %v727
        %v760 = vpack.c.bf16 %v728, %v728
        %v761 = vpack.c.bf16 %v729, %v729
        %v762 = vpack.c.bf16 %v730, %v730
        %v763 = vpack.c.bf16 %v731, %v731
        %v764 = vpack.c.bf16 %v732, %v732
        %v765 = vpack.c.bf16 %v733, %v733
        %v766 = vpack.c.bf16 %v734, %v734
        %v767 = vpack.c.bf16 %v735, %v735
        %v768 = vpack.c.bf16 %v736, %v736
        %v769 = vpack.c.bf16 %v737, %v737
        %v770 = vpack.c.bf16 %v738, %v738
        %v771 = vpack.c.bf16 %v739, %v739
        %v772 = vpack.c.bf16 %v740, %v740
        %v773 = vpack.c.bf16 %v741, %v741
        %v774 = vpack.c.bf16 %v742, %v742
        %v775 = vpack.c.bf16 %v743, %v743
        %v776 = vpack.c.bf16 %v744, %v744
        %v777 = vpack.c.bf16 %v745, %v745
        %v778 = vpack.c.bf16 %v746, %v746
        %v779 = vpack.c.bf16 %v747, %v747
        %v780 = vpack.c.bf16 %v748, %v748
        %781 = vst [vmem:[#allocation2 + $0xc] sm:$0xf] %v749
        %782 = vst [vmem:[#allocation2 + $0x10] sm:$0xf] %v750
        %783 = vst [vmem:[#allocation2 + $0x14] sm:$0xf] %v751
        %784 = vst [vmem:[#allocation2 + $0x18] sm:$0xf] %v752
        %785 = vst [vmem:[#allocation2 + $0x1c] sm:$0xf] %v753
        %786 = vst [vmem:[#allocation2 + $0x20] sm:$0xf] %v754
        %787 = vst [vmem:[#allocation2 + $0x24] sm:$0xf] %v755
        %788 = vst [vmem:[#allocation2 + $0x28] sm:$0xf] %v756
        %789 = vst [vmem:[#allocation2 + $0x2c] sm:$0xf] %v757
        %790 = vst [vmem:[#allocation2 + $0x30] sm:$0xf] %v758
        %791 = vst [vmem:[#allocation2 + $0x34] sm:$0xf] %v759
        %792 = vst [vmem:[#allocation2 + $0x38] sm:$0xf] %v760
        %793 = vst [vmem:[#allocation2 + $0x3c] sm:$0xf] %v761
        %794 = vst [vmem:[#allocation2 + $0x40] sm:$0xf] %v762
        %795 = vst [vmem:[#allocation2 + $0x44] sm:$0xf] %v763
        %796 = vst [vmem:[#allocation2 + $0x48] sm:$0xf] %v764
        %797 = vst [vmem:[#allocation2 + $0x4c] sm:$0xf] %v765
        %798 = vst [vmem:[#allocation2 + $0x50] sm:$0xf] %v766
        %799 = vst [vmem:[#allocation2 + $0x54] sm:$0xf] %v767
        %800 = vst [vmem:[#allocation2 + $0x58] sm:$0xf] %v768
        %801 = vst [vmem:[#allocation2 + $0x5c] sm:$0xf] %v769
        %802 = vst [vmem:[#allocation2 + $0x60] sm:$0xf] %v770
        %803 = vst [vmem:[#allocation2 + $0x64] sm:$0xf] %v771
        %804 = vst [vmem:[#allocation2 + $0x68] sm:$0xf] %v772
        %805 = vst [vmem:[#allocation2 + $0x6c] sm:$0xf] %v773
        %806 = vst [vmem:[#allocation2 + $0x70] sm:$0xf] %v774
        %807 = vst [vmem:[#allocation2 + $0x74] sm:$0xf] %v775
        %808 = vst [vmem:[#allocation2 + $0x78] sm:$0xf] %v776
        %809 = vst [vmem:[#allocation2 + $0x7c] sm:$0xf] %v777
        %810 = vst [vmem:[#allocation2 + $0x80] sm:$0xf] %v778
        %811 = vst [vmem:[#allocation2 + $0x84] sm:$0xf] %v779
        %812 = vst [vmem:[#allocation2 + $0x88] sm:$0xf] %v780
        %v813 = vlaneseq
        %v814 = vshrl.u32 %v813, 7
        %v815 = vadd.s32 %v814, 8
        %v816 = vadd.s32 %v814, 16
        %v817 = vadd.s32 %v814, 24
        %v818 = vadd.s32 %v814, 32
        %v819 = vadd.s32 %v814, 40
        %v820 = vadd.s32 %v814, 48
        %v821 = vadd.s32 %v814, 56
        %v822 = vadd.s32 %v814, 64
        %v823 = vadd.s32 %v814, 72
        %v824 = vadd.s32 %v814, 80
        %v825 = vadd.s32 %v814, 88
        %v826 = vadd.s32 %v814, 96
        %v827 = vadd.s32 %v814, 104
        %v828 = vadd.s32 %v814, 112
        %v829 = vadd.s32 %v814, 120
        %v830 = vadd.s32 %v814, 128
        %v831 = vadd.s32 %v814, 136
        %v832 = vadd.s32 %v814, 144
        %v833 = vadd.s32 %v814, 152
        %v834 = vadd.s32 %v814, 160
        %v835 = vadd.s32 %v814, 168
        %v836 = vadd.s32 %v814, 176
        %v837 = vadd.s32 %v814, 184
        %v838 = vadd.s32 %v814, 192
        %v839 = vadd.s32 %v814, 200
        %v840 = vadd.s32 %v814, 208
        %v841 = vadd.s32 %v814, 216
        %v842 = vadd.s32 %v814, 224
        %v843 = vadd.s32 %v814, 232
        %v844 = vadd.s32 %v814, 240
        %v845 = vadd.s32 %v814, 248
        %vm846 = vcmp.lt.s32.totalorder %v814, 0
        %v847 = vsub.s32 0, %v814
        %v848 = vsel %vm846, %v847, %v814
        %v849 = vshrl.u32 %v848, 4
        %v850 = vand.u32 %v848, 15
        %v851 = vsub.s32 0, %v850
        %v852 = vsel %vm846, %v851, %v850
        %vm853 = vcmp.lt.s32.totalorder %v815, 0
        %v854 = vsub.s32 0, %v815
        %v855 = vsel %vm853, %v854, %v815
        %v856 = vshrl.u32 %v855, 4
        %v857 = vand.u32 %v855, 15
        %v858 = vsub.s32 0, %v857
        %v859 = vsel %vm853, %v858, %v857
        %vm860 = vcmp.lt.s32.totalorder %v816, 0
        %v861 = vsub.s32 0, %v816
        %v862 = vsel %vm860, %v861, %v816
        %v863 = vshrl.u32 %v862, 4
        %v864 = vand.u32 %v862, 15
        %v865 = vsub.s32 0, %v864
        %v866 = vsel %vm860, %v865, %v864
        %vm867 = vcmp.lt.s32.totalorder %v817, 0
        %v868 = vsub.s32 0, %v817
        %v869 = vsel %vm867, %v868, %v817
        %v870 = vshrl.u32 %v869, 4
        %v871 = vand.u32 %v869, 15
        %v872 = vsub.s32 0, %v871
        %v873 = vsel %vm867, %v872, %v871
        %vm874 = vcmp.lt.s32.totalorder %v818, 0
        %v875 = vsub.s32 0, %v818
        %v876 = vsel %vm874, %v875, %v818
        %v877 = vshrl.u32 %v876, 4
        %v878 = vand.u32 %v876, 15
        %v879 = vsub.s32 0, %v878
        %v880 = vsel %vm874, %v879, %v878
        %vm881 = vcmp.lt.s32.totalorder %v819, 0
        %v882 = vsub.s32 0, %v819
        %v883 = vsel %vm881, %v882, %v819
        %v884 = vshrl.u32 %v883, 4
        %v885 = vand.u32 %v883, 15
        %v886 = vsub.s32 0, %v885
        %v887 = vsel %vm881, %v886, %v885
        %vm888 = vcmp.lt.s32.totalorder %v820, 0
        %v889 = vsub.s32 0, %v820
        %v890 = vsel %vm888, %v889, %v820
        %v891 = vshrl.u32 %v890, 4
        %v892 = vand.u32 %v890, 15
        %v893 = vsub.s32 0, %v892
        %v894 = vsel %vm888, %v893, %v892
        %vm895 = vcmp.lt.s32.totalorder %v821, 0
        %v896 = vsub.s32 0, %v821
        %v897 = vsel %vm895, %v896, %v821
        %v898 = vshrl.u32 %v897, 4
        %v899 = vand.u32 %v897, 15
        %v900 = vsub.s32 0, %v899
        %v901 = vsel %vm895, %v900, %v899
        %vm902 = vcmp.lt.s32.totalorder %v822, 0
        %v903 = vsub.s32 0, %v822
        %v904 = vsel %vm902, %v903, %v822
        %v905 = vshrl.u32 %v904, 4
        %v906 = vand.u32 %v904, 15
        %v907 = vsub.s32 0, %v906
        %v908 = vsel %vm902, %v907, %v906
        %vm909 = vcmp.lt.s32.totalorder %v823, 0
        %v910 = vsub.s32 0, %v823
        %v911 = vsel %vm909, %v910, %v823
        %v912 = vshrl.u32 %v911, 4
        %v913 = vand.u32 %v911, 15
        %v914 = vsub.s32 0, %v913
        %v915 = vsel %vm909, %v914, %v913
        %vm916 = vcmp.lt.s32.totalorder %v824, 0
        %v917 = vsub.s32 0, %v824
        %v918 = vsel %vm916, %v917, %v824
        %v919 = vshrl.u32 %v918, 4
        %v920 = vand.u32 %v918, 15
        %v921 = vsub.s32 0, %v920
        %v922 = vsel %vm916, %v921, %v920
        %vm923 = vcmp.lt.s32.totalorder %v825, 0
        %v924 = vsub.s32 0, %v825
        %v925 = vsel %vm923, %v924, %v825
        %v926 = vshrl.u32 %v925, 4
        %v927 = vand.u32 %v925, 15
        %v928 = vsub.s32 0, %v927
        %v929 = vsel %vm923, %v928, %v927
        %vm930 = vcmp.lt.s32.totalorder %v826, 0
        %v931 = vsub.s32 0, %v826
        %v932 = vsel %vm930, %v931, %v826
        %v933 = vshrl.u32 %v932, 4
        %v934 = vand.u32 %v932, 15
        %v935 = vsub.s32 0, %v934
        %v936 = vsel %vm930, %v935, %v934
        %vm937 = vcmp.lt.s32.totalorder %v827, 0
        %v938 = vsub.s32 0, %v827
        %v939 = vsel %vm937, %v938, %v827
        %v940 = vshrl.u32 %v939, 4
        %v941 = vand.u32 %v939, 15
        %v942 = vsub.s32 0, %v941
        %v943 = vsel %vm937, %v942, %v941
        %vm944 = vcmp.lt.s32.totalorder %v828, 0
        %v945 = vsub.s32 0, %v828
        %v946 = vsel %vm944, %v945, %v828
        %v947 = vshrl.u32 %v946, 4
        %v948 = vand.u32 %v946, 15
        %v949 = vsub.s32 0, %v948
        %v950 = vsel %vm944, %v949, %v948
        %vm951 = vcmp.lt.s32.totalorder %v829, 0
        %v952 = vsub.s32 0, %v829
        %v953 = vsel %vm951, %v952, %v829
        %v954 = vshrl.u32 %v953, 4
        %v955 = vand.u32 %v953, 15
        %v956 = vsub.s32 0, %v955
        %v957 = vsel %vm951, %v956, %v955
        %vm958 = vcmp.lt.s32.totalorder %v830, 0
        %v959 = vsub.s32 0, %v830
        %v960 = vsel %vm958, %v959, %v830
        %v961 = vshrl.u32 %v960, 4
        %v962 = vand.u32 %v960, 15
        %v963 = vsub.s32 0, %v962
        %v964 = vsel %vm958, %v963, %v962
        %vm965 = vcmp.lt.s32.totalorder %v831, 0
        %v966 = vsub.s32 0, %v831
        %v967 = vsel %vm965, %v966, %v831
        %v968 = vshrl.u32 %v967, 4
        %v969 = vand.u32 %v967, 15
        %v970 = vsub.s32 0, %v969
        %v971 = vsel %vm965, %v970, %v969
        %vm972 = vcmp.lt.s32.totalorder %v832, 0
        %v973 = vsub.s32 0, %v832
        %v974 = vsel %vm972, %v973, %v832
        %v975 = vshrl.u32 %v974, 4
        %v976 = vand.u32 %v974, 15
        %v977 = vsub.s32 0, %v976
        %v978 = vsel %vm972, %v977, %v976
        %vm979 = vcmp.lt.s32.totalorder %v833, 0
        %v980 = vsub.s32 0, %v833
        %v981 = vsel %vm979, %v980, %v833
        %v982 = vshrl.u32 %v981, 4
        %v983 = vand.u32 %v981, 15
        %v984 = vsub.s32 0, %v983
        %v985 = vsel %vm979, %v984, %v983
        %vm986 = vcmp.lt.s32.totalorder %v834, 0
        %v987 = vsub.s32 0, %v834
        %v988 = vsel %vm986, %v987, %v834
        %v989 = vshrl.u32 %v988, 4
        %v990 = vand.u32 %v988, 15
        %v991 = vsub.s32 0, %v990
        %v992 = vsel %vm986, %v991, %v990
        %vm993 = vcmp.lt.s32.totalorder %v835, 0
        %v994 = vsub.s32 0, %v835
        %v995 = vsel %vm993, %v994, %v835
        %v996 = vshrl.u32 %v995, 4
        %v997 = vand.u32 %v995, 15
        %v998 = vsub.s32 0, %v997
        %v999 = vsel %vm993, %v998, %v997
        %vm1000 = vcmp.lt.s32.totalorder %v836, 0
        %v1001 = vsub.s32 0, %v836
        %v1002 = vsel %vm1000, %v1001, %v836
        %v1003 = vshrl.u32 %v1002, 4
        %v1004 = vand.u32 %v1002, 15
        %v1005 = vsub.s32 0, %v1004
        %v1006 = vsel %vm1000, %v1005, %v1004
        %vm1007 = vcmp.lt.s32.totalorder %v837, 0
        %v1008 = vsub.s32 0, %v837
        %v1009 = vsel %vm1007, %v1008, %v837
        %v1010 = vshrl.u32 %v1009, 4
        %v1011 = vand.u32 %v1009, 15
        %v1012 = vsub.s32 0, %v1011
        %v1013 = vsel %vm1007, %v1012, %v1011
        %vm1014 = vcmp.lt.s32.totalorder %v838, 0
        %v1015 = vsub.s32 0, %v838
        %v1016 = vsel %vm1014, %v1015, %v838
        %v1017 = vshrl.u32 %v1016, 4
        %v1018 = vand.u32 %v1016, 15
        %v1019 = vsub.s32 0, %v1018
        %v1020 = vsel %vm1014, %v1019, %v1018
        %vm1021 = vcmp.lt.s32.totalorder %v839, 0
        %v1022 = vsub.s32 0, %v839
        %v1023 = vsel %vm1021, %v1022, %v839
        %v1024 = vshrl.u32 %v1023, 4
        %v1025 = vand.u32 %v1023, 15
        %v1026 = vsub.s32 0, %v1025
        %v1027 = vsel %vm1021, %v1026, %v1025
        %vm1028 = vcmp.lt.s32.totalorder %v840, 0
        %v1029 = vsub.s32 0, %v840
        %v1030 = vsel %vm1028, %v1029, %v840
        %v1031 = vshrl.u32 %v1030, 4
        %v1032 = vand.u32 %v1030, 15
        %v1033 = vsub.s32 0, %v1032
        %v1034 = vsel %vm1028, %v1033, %v1032
        %vm1035 = vcmp.lt.s32.totalorder %v841, 0
        %v1036 = vsub.s32 0, %v841
        %v1037 = vsel %vm1035, %v1036, %v841
        %v1038 = vshrl.u32 %v1037, 4
        %v1039 = vand.u32 %v1037, 15
        %v1040 = vsub.s32 0, %v1039
        %v1041 = vsel %vm1035, %v1040, %v1039
        %vm1042 = vcmp.lt.s32.totalorder %v842, 0
        %v1043 = vsub.s32 0, %v842
        %v1044 = vsel %vm1042, %v1043, %v842
        %v1045 = vshrl.u32 %v1044, 4
        %v1046 = vand.u32 %v1044, 15
        %v1047 = vsub.s32 0, %v1046
        %v1048 = vsel %vm1042, %v1047, %v1046
        %vm1049 = vcmp.lt.s32.totalorder %v843, 0
        %v1050 = vsub.s32 0, %v843
        %v1051 = vsel %vm1049, %v1050, %v843
        %v1052 = vshrl.u32 %v1051, 4
        %v1053 = vand.u32 %v1051, 15
        %v1054 = vsub.s32 0, %v1053
        %v1055 = vsel %vm1049, %v1054, %v1053
        %vm1056 = vcmp.lt.s32.totalorder %v844, 0
        %v1057 = vsub.s32 0, %v844
        %v1058 = vsel %vm1056, %v1057, %v844
        %v1059 = vshrl.u32 %v1058, 4
        %v1060 = vand.u32 %v1058, 15
        %v1061 = vsub.s32 0, %v1060
        %v1062 = vsel %vm1056, %v1061, %v1060
        %vm1063 = vcmp.lt.s32.totalorder %v845, 0
        %v1064 = vsub.s32 0, %v845
        %v1065 = vsel %vm1063, %v1064, %v845
        %v1066 = vshrl.u32 %v1065, 4
        %v1067 = vand.u32 %v1065, 15
        %v1068 = vsub.s32 0, %v1067
        %v1069 = vsel %vm1063, %v1068, %v1067
        %vm1070 = vcmp.ne.s32.totalorder %v852, 0
        %vm1071 = vcmp.ne.s32.totalorder %v859, 0
        %vm1072 = vcmp.ne.s32.totalorder %v866, 0
        %vm1073 = vcmp.ne.s32.totalorder %v873, 0
        %vm1074 = vcmp.ne.s32.totalorder %v880, 0
        %vm1075 = vcmp.ne.s32.totalorder %v887, 0
        %vm1076 = vcmp.ne.s32.totalorder %v894, 0
        %vm1077 = vcmp.ne.s32.totalorder %v901, 0
        %vm1078 = vcmp.ne.s32.totalorder %v908, 0
        %vm1079 = vcmp.ne.s32.totalorder %v915, 0
        %vm1080 = vcmp.ne.s32.totalorder %v922, 0
        %vm1081 = vcmp.ne.s32.totalorder %v929, 0
        %vm1082 = vcmp.ne.s32.totalorder %v936, 0
        %vm1083 = vcmp.ne.s32.totalorder %v943, 0
        %vm1084 = vcmp.ne.s32.totalorder %v950, 0
        %vm1085 = vcmp.ne.s32.totalorder %v957, 0
        %vm1086 = vcmp.ne.s32.totalorder %v964, 0
        %vm1087 = vcmp.ne.s32.totalorder %v971, 0
        %vm1088 = vcmp.ne.s32.totalorder %v978, 0
        %vm1089 = vcmp.ne.s32.totalorder %v985, 0
        %vm1090 = vcmp.ne.s32.totalorder %v992, 0
        %vm1091 = vcmp.ne.s32.totalorder %v999, 0
        %vm1092 = vcmp.ne.s32.totalorder %v1006, 0
        %vm1093 = vcmp.ne.s32.totalorder %v1013, 0
        %vm1094 = vcmp.ne.s32.totalorder %v1020, 0
        %vm1095 = vcmp.ne.s32.totalorder %v1027, 0
        %vm1096 = vcmp.ne.s32.totalorder %v1034, 0
        %vm1097 = vcmp.ne.s32.totalorder %v1041, 0
        %vm1098 = vcmp.ne.s32.totalorder %v1048, 0
        %vm1099 = vcmp.ne.s32.totalorder %v1055, 0
        %vm1100 = vcmp.ne.s32.totalorder %v1062, 0
        %vm1101 = vcmp.ne.s32.totalorder %v1069, 0
        %vm1102 = vcmp.lt.s32.totalorder %v852, 0
        %vm1103 = vcmp.lt.s32.totalorder %v859, 0
        %vm1104 = vcmp.lt.s32.totalorder %v866, 0
        %vm1105 = vcmp.lt.s32.totalorder %v873, 0
        %vm1106 = vcmp.lt.s32.totalorder %v880, 0
        %vm1107 = vcmp.lt.s32.totalorder %v887, 0
        %vm1108 = vcmp.lt.s32.totalorder %v894, 0
        %vm1109 = vcmp.lt.s32.totalorder %v901, 0
        %vm1110 = vcmp.lt.s32.totalorder %v908, 0
        %vm1111 = vcmp.lt.s32.totalorder %v915, 0
        %vm1112 = vcmp.lt.s32.totalorder %v922, 0
        %vm1113 = vcmp.lt.s32.totalorder %v929, 0
        %vm1114 = vcmp.lt.s32.totalorder %v936, 0
        %vm1115 = vcmp.lt.s32.totalorder %v943, 0
        %vm1116 = vcmp.lt.s32.totalorder %v950, 0
        %vm1117 = vcmp.lt.s32.totalorder %v957, 0
        %vm1118 = vcmp.lt.s32.totalorder %v964, 0
        %vm1119 = vcmp.lt.s32.totalorder %v971, 0
        %vm1120 = vcmp.lt.s32.totalorder %v978, 0
        %vm1121 = vcmp.lt.s32.totalorder %v985, 0
        %vm1122 = vcmp.lt.s32.totalorder %v992, 0
        %vm1123 = vcmp.lt.s32.totalorder %v999, 0
        %vm1124 = vcmp.lt.s32.totalorder %v1006, 0
        %vm1125 = vcmp.lt.s32.totalorder %v1013, 0
        %vm1126 = vcmp.lt.s32.totalorder %v1020, 0
        %vm1127 = vcmp.lt.s32.totalorder %v1027, 0
        %vm1128 = vcmp.lt.s32.totalorder %v1034, 0
        %vm1129 = vcmp.lt.s32.totalorder %v1041, 0
        %vm1130 = vcmp.lt.s32.totalorder %v1048, 0
        %vm1131 = vcmp.lt.s32.totalorder %v1055, 0
        %vm1132 = vcmp.lt.s32.totalorder %v1062, 0
        %vm1133 = vcmp.lt.s32.totalorder %v1069, 0
        %vm1134 = vmand %vm1102, %vm1070
        %vm1135 = vmand %vm1103, %vm1071
        %vm1136 = vmand %vm1104, %vm1072
        %vm1137 = vmand %vm1105, %vm1073
        %vm1138 = vmand %vm1106, %vm1074
        %vm1139 = vmand %vm1107, %vm1075
        %vm1140 = vmand %vm1108, %vm1076
        %vm1141 = vmand %vm1109, %vm1077
        %vm1142 = vmand %vm1110, %vm1078
        %vm1143 = vmand %vm1111, %vm1079
        %vm1144 = vmand %vm1112, %vm1080
        %vm1145 = vmand %vm1113, %vm1081
        %vm1146 = vmand %vm1114, %vm1082
        %vm1147 = vmand %vm1115, %vm1083
        %vm1148 = vmand %vm1116, %vm1084
        %vm1149 = vmand %vm1117, %vm1085
        %vm1150 = vmand %vm1118, %vm1086
        %vm1151 = vmand %vm1119, %vm1087
        %vm1152 = vmand %vm1120, %vm1088
        %vm1153 = vmand %vm1121, %vm1089
        %vm1154 = vmand %vm1122, %vm1090
        %vm1155 = vmand %vm1123, %vm1091
        %vm1156 = vmand %vm1124, %vm1092
        %vm1157 = vmand %vm1125, %vm1093
        %vm1158 = vmand %vm1126, %vm1094
        %vm1159 = vmand %vm1127, %vm1095
        %vm1160 = vmand %vm1128, %vm1096
        %vm1161 = vmand %vm1129, %vm1097
        %vm1162 = vmand %vm1130, %vm1098
        %vm1163 = vmand %vm1131, %vm1099
        %vm1164 = vmand %vm1132, %vm1100
        %vm1165 = vmand %vm1133, %vm1101
        %v1166 = vadd.s32 %v852, 16
        %v1167 = vadd.s32 %v859, 16
        %v1168 = vadd.s32 %v866, 16
        %v1169 = vadd.s32 %v873, 16
        %v1170 = vadd.s32 %v880, 16
        %v1171 = vadd.s32 %v887, 16
        %v1172 = vadd.s32 %v894, 16
        %v1173 = vadd.s32 %v901, 16
        %v1174 = vadd.s32 %v908, 16
        %v1175 = vadd.s32 %v915, 16
        %v1176 = vadd.s32 %v922, 16
        %v1177 = vadd.s32 %v929, 16
        %v1178 = vadd.s32 %v936, 16
        %v1179 = vadd.s32 %v943, 16
        %v1180 = vadd.s32 %v950, 16
        %v1181 = vadd.s32 %v957, 16
        %v1182 = vadd.s32 %v964, 16
        %v1183 = vadd.s32 %v971, 16
        %v1184 = vadd.s32 %v978, 16
        %v1185 = vadd.s32 %v985, 16
        %v1186 = vadd.s32 %v992, 16
        %v1187 = vadd.s32 %v999, 16
        %v1188 = vadd.s32 %v1006, 16
        %v1189 = vadd.s32 %v1013, 16
        %v1190 = vadd.s32 %v1020, 16
        %v1191 = vadd.s32 %v1027, 16
        %v1192 = vadd.s32 %v1034, 16
        %v1193 = vadd.s32 %v1041, 16
        %v1194 = vadd.s32 %v1048, 16
        %v1195 = vadd.s32 %v1055, 16
        %v1196 = vadd.s32 %v1062, 16
        %v1197 = vadd.s32 %v1069, 16
        %v1198 = vsel %vm1134, %v1166, %v852
        %v1199 = vsel %vm1135, %v1167, %v859
        %v1200 = vsel %vm1136, %v1168, %v866
        %v1201 = vsel %vm1137, %v1169, %v873
        %v1202 = vsel %vm1138, %v1170, %v880
        %v1203 = vsel %vm1139, %v1171, %v887
        %v1204 = vsel %vm1140, %v1172, %v894
        %v1205 = vsel %vm1141, %v1173, %v901
        %v1206 = vsel %vm1142, %v1174, %v908
        %v1207 = vsel %vm1143, %v1175, %v915
        %v1208 = vsel %vm1144, %v1176, %v922
        %v1209 = vsel %vm1145, %v1177, %v929
        %v1210 = vsel %vm1146, %v1178, %v936
        %v1211 = vsel %vm1147, %v1179, %v943
        %v1212 = vsel %vm1148, %v1180, %v950
        %v1213 = vsel %vm1149, %v1181, %v957
        %v1214 = vsel %vm1150, %v1182, %v964
        %v1215 = vsel %vm1151, %v1183, %v971
        %v1216 = vsel %vm1152, %v1184, %v978
        %v1217 = vsel %vm1153, %v1185, %v985
        %v1218 = vsel %vm1154, %v1186, %v992
        %v1219 = vsel %vm1155, %v1187, %v999
        %v1220 = vsel %vm1156, %v1188, %v1006
        %v1221 = vsel %vm1157, %v1189, %v1013
        %v1222 = vsel %vm1158, %v1190, %v1020
        %v1223 = vsel %vm1159, %v1191, %v1027
        %v1224 = vsel %vm1160, %v1192, %v1034
        %v1225 = vsel %vm1161, %v1193, %v1041
        %v1226 = vsel %vm1162, %v1194, %v1048
        %v1227 = vsel %vm1163, %v1195, %v1055
        %v1228 = vsel %vm1164, %v1196, %v1062
        %v1229 = vsel %vm1165, %v1197, %v1069
        %vm1230 = vcmp.ge.s32.totalorder %v1198, 1
        %vm1231 = vcmp.ge.s32.totalorder %v1199, 1
        %vm1232 = vcmp.ge.s32.totalorder %v1200, 1
        %vm1233 = vcmp.ge.s32.totalorder %v1201, 1
        %vm1234 = vcmp.ge.s32.totalorder %v1202, 1
        %vm1235 = vcmp.ge.s32.totalorder %v1203, 1
        %vm1236 = vcmp.ge.s32.totalorder %v1204, 1
        %vm1237 = vcmp.ge.s32.totalorder %v1205, 1
        %vm1238 = vcmp.ge.s32.totalorder %v1206, 1
        %vm1239 = vcmp.ge.s32.totalorder %v1207, 1
        %vm1240 = vcmp.ge.s32.totalorder %v1208, 1
        %vm1241 = vcmp.ge.s32.totalorder %v1209, 1
        %vm1242 = vcmp.ge.s32.totalorder %v1210, 1
        %vm1243 = vcmp.ge.s32.totalorder %v1211, 1
        %vm1244 = vcmp.ge.s32.totalorder %v1212, 1
        %vm1245 = vcmp.ge.s32.totalorder %v1213, 1
        %vm1246 = vcmp.ge.s32.totalorder %v1214, 1
        %vm1247 = vcmp.ge.s32.totalorder %v1215, 1
        %vm1248 = vcmp.ge.s32.totalorder %v1216, 1
        %vm1249 = vcmp.ge.s32.totalorder %v1217, 1
        %vm1250 = vcmp.ge.s32.totalorder %v1218, 1
        %vm1251 = vcmp.ge.s32.totalorder %v1219, 1
        %vm1252 = vcmp.ge.s32.totalorder %v1220, 1
        %vm1253 = vcmp.ge.s32.totalorder %v1221, 1
        %vm1254 = vcmp.ge.s32.totalorder %v1222, 1
        %vm1255 = vcmp.ge.s32.totalorder %v1223, 1
        %vm1256 = vcmp.ge.s32.totalorder %v1224, 1
        %vm1257 = vcmp.ge.s32.totalorder %v1225, 1
        %vm1258 = vcmp.ge.s32.totalorder %v1226, 1
        %vm1259 = vcmp.ge.s32.totalorder %v1227, 1
        %vm1260 = vcmp.ge.s32.totalorder %v1228, 1
        %vm1261 = vcmp.ge.s32.totalorder %v1229, 1
        %vm1262 = vcmp.le.s32.totalorder %v1198, 14
        %vm1263 = vcmp.le.s32.totalorder %v1199, 14
        %vm1264 = vcmp.le.s32.totalorder %v1200, 14
        %vm1265 = vcmp.le.s32.totalorder %v1201, 14
        %vm1266 = vcmp.le.s32.totalorder %v1202, 14
        %vm1267 = vcmp.le.s32.totalorder %v1203, 14
        %vm1268 = vcmp.le.s32.totalorder %v1204, 14
        %vm1269 = vcmp.le.s32.totalorder %v1205, 14
        %vm1270 = vcmp.le.s32.totalorder %v1206, 14
        %vm1271 = vcmp.le.s32.totalorder %v1207, 14
        %vm1272 = vcmp.le.s32.totalorder %v1208, 14
        %vm1273 = vcmp.le.s32.totalorder %v1209, 14
        %vm1274 = vcmp.le.s32.totalorder %v1210, 14
        %vm1275 = vcmp.le.s32.totalorder %v1211, 14
        %vm1276 = vcmp.le.s32.totalorder %v1212, 14
        %vm1277 = vcmp.le.s32.totalorder %v1213, 14
        %vm1278 = vcmp.le.s32.totalorder %v1214, 14
        %vm1279 = vcmp.le.s32.totalorder %v1215, 14
        %vm1280 = vcmp.le.s32.totalorder %v1216, 14
        %vm1281 = vcmp.le.s32.totalorder %v1217, 14
        %vm1282 = vcmp.le.s32.totalorder %v1218, 14
        %vm1283 = vcmp.le.s32.totalorder %v1219, 14
        %vm1284 = vcmp.le.s32.totalorder %v1220, 14
        %vm1285 = vcmp.le.s32.totalorder %v1221, 14
        %vm1286 = vcmp.le.s32.totalorder %v1222, 14
        %vm1287 = vcmp.le.s32.totalorder %v1223, 14
        %vm1288 = vcmp.le.s32.totalorder %v1224, 14
        %vm1289 = vcmp.le.s32.totalorder %v1225, 14
        %vm1290 = vcmp.le.s32.totalorder %v1226, 14
        %vm1291 = vcmp.le.s32.totalorder %v1227, 14
        %vm1292 = vcmp.le.s32.totalorder %v1228, 14
        %vm1293 = vcmp.le.s32.totalorder %v1229, 14
        %v1294 = vld [vmem:[#allocation2] sm:$0x8]
        %v1295 = vld [vmem:[#allocation2 + $0x4] sm:$0xf]
        %v1296 = vld [vmem:[#allocation2 + $0x8] sm:$0xf]
        %v1297 = vld [vmem:[#allocation2 + $0xc] sm:$0xf]
        %v1298 = vld [vmem:[#allocation2 + $0x10] sm:$0xf]
        %v1299 = vld [vmem:[#allocation2 + $0x14] sm:$0xf]
        %v1300 = vld [vmem:[#allocation2 + $0x18] sm:$0xf]
        %v1301 = vld [vmem:[#allocation2 + $0x1c] sm:$0xf]
        %v1302 = vld [vmem:[#allocation2 + $0x20] sm:$0xf]
        %v1303 = vld [vmem:[#allocation2 + $0x24] sm:$0xf]
        %v1304 = vld [vmem:[#allocation2 + $0x28] sm:$0xf]
        %v1305 = vld [vmem:[#allocation2 + $0x2c] sm:$0xf]
        %v1306 = vld [vmem:[#allocation2 + $0x30] sm:$0xf]
        %v1307 = vld [vmem:[#allocation2 + $0x34] sm:$0xf]
        %v1308 = vld [vmem:[#allocation2 + $0x38] sm:$0xf]
        %v1309 = vld [vmem:[#allocation2 + $0x3c] sm:$0xf]
        %v1310 = vld [vmem:[#allocation2 + $0x40] sm:$0xf]
        %v1311 = vld [vmem:[#allocation2 + $0x44] sm:$0xf]
        %v1312 = vld [vmem:[#allocation2 + $0x48] sm:$0xf]
        %v1313 = vld [vmem:[#allocation2 + $0x4c] sm:$0xf]
        %v1314 = vld [vmem:[#allocation2 + $0x50] sm:$0xf]
        %v1315 = vld [vmem:[#allocation2 + $0x54] sm:$0xf]
        %v1316 = vld [vmem:[#allocation2 + $0x58] sm:$0xf]
        %v1317 = vld [vmem:[#allocation2 + $0x5c] sm:$0xf]
        %v1318 = vld [vmem:[#allocation2 + $0x60] sm:$0xf]
        %v1319 = vld [vmem:[#allocation2 + $0x64] sm:$0xf]
        %v1320 = vld [vmem:[#allocation2 + $0x68] sm:$0xf]
        %v1321 = vld [vmem:[#allocation2 + $0x6c] sm:$0xf]
        %v1322 = vld [vmem:[#allocation2 + $0x70] sm:$0xf]
        %v1323 = vld [vmem:[#allocation2 + $0x74] sm:$0xf]
        %v1324 = vld [vmem:[#allocation2 + $0x78] sm:$0xf]
        %v1325 = vld [vmem:[#allocation2 + $0x7c] sm:$0xf]
        %v1326 = vld [vmem:[#allocation2 + $0x80] sm:$0xf]
        %v1327 = vsel %vm1230, 1, 0
        %v1328 = vsel %vm1231, 1, 0
        %v1329 = vsel %vm1232, 1, 0
        %v1330 = vsel %vm1233, 1, 0
        %v1331 = vsel %vm1234, 1, 0
        %v1332 = vsel %vm1235, 1, 0
        %v1333 = vsel %vm1236, 1, 0
        %v1334 = vsel %vm1237, 1, 0
        %v1335 = vsel %vm1238, 1, 0
        %v1336 = vsel %vm1239, 1, 0
        %v1337 = vsel %vm1240, 1, 0
        %v1338 = vsel %vm1241, 1, 0
        %v1339 = vsel %vm1242, 1, 0
        %v1340 = vsel %vm1243, 1, 0
        %v1341 = vsel %vm1244, 1, 0
        %v1342 = vsel %vm1245, 1, 0
        %v1343 = vsel %vm1246, 1, 0
        %v1344 = vsel %vm1247, 1, 0
        %v1345 = vsel %vm1248, 1, 0
        %v1346 = vsel %vm1249, 1, 0
        %v1347 = vsel %vm1250, 1, 0
        %v1348 = vsel %vm1251, 1, 0
        %v1349 = vsel %vm1252, 1, 0
        %v1350 = vsel %vm1253, 1, 0
        %v1351 = vsel %vm1254, 1, 0
        %v1352 = vsel %vm1255, 1, 0
        %v1353 = vsel %vm1256, 1, 0
        %v1354 = vsel %vm1257, 1, 0
        %v1355 = vsel %vm1258, 1, 0
        %v1356 = vsel %vm1259, 1, 0
        %v1357 = vsel %vm1260, 1, 0
        %v1358 = vsel %vm1261, 1, 0
        %vm1359 = vcmp.eq.s32.totalorder %v1327, 1
        %vm1360 = vcmp.eq.s32.totalorder %v1328, 1
        %vm1361 = vcmp.eq.s32.totalorder %v1329, 1
        %vm1362 = vcmp.eq.s32.totalorder %v1330, 1
        %vm1363 = vcmp.eq.s32.totalorder %v1331, 1
        %vm1364 = vcmp.eq.s32.totalorder %v1332, 1
        %vm1365 = vcmp.eq.s32.totalorder %v1333, 1
        %vm1366 = vcmp.eq.s32.totalorder %v1334, 1
        %vm1367 = vcmp.eq.s32.totalorder %v1335, 1
        %vm1368 = vcmp.eq.s32.totalorder %v1336, 1
        %vm1369 = vcmp.eq.s32.totalorder %v1337, 1
        %vm1370 = vcmp.eq.s32.totalorder %v1338, 1
        %vm1371 = vcmp.eq.s32.totalorder %v1339, 1
        %vm1372 = vcmp.eq.s32.totalorder %v1340, 1
        %vm1373 = vcmp.eq.s32.totalorder %v1341, 1
        %vm1374 = vcmp.eq.s32.totalorder %v1342, 1
        %vm1375 = vcmp.eq.s32.totalorder %v1343, 1
        %vm1376 = vcmp.eq.s32.totalorder %v1344, 1
        %vm1377 = vcmp.eq.s32.totalorder %v1345, 1
        %vm1378 = vcmp.eq.s32.totalorder %v1346, 1
        %vm1379 = vcmp.eq.s32.totalorder %v1347, 1
        %vm1380 = vcmp.eq.s32.totalorder %v1348, 1
        %vm1381 = vcmp.eq.s32.totalorder %v1349, 1
        %vm1382 = vcmp.eq.s32.totalorder %v1350, 1
        %vm1383 = vcmp.eq.s32.totalorder %v1351, 1
        %vm1384 = vcmp.eq.s32.totalorder %v1352, 1
        %vm1385 = vcmp.eq.s32.totalorder %v1353, 1
        %vm1386 = vcmp.eq.s32.totalorder %v1354, 1
        %vm1387 = vcmp.eq.s32.totalorder %v1355, 1
        %vm1388 = vcmp.eq.s32.totalorder %v1356, 1
        %vm1389 = vcmp.eq.s32.totalorder %v1357, 1
        %vm1390 = vcmp.eq.s32.totalorder %v1358, 1
        %vm1391 = vmpackc.low %vm1359, %vm1359
        %vm1392 = vmpackc.low %vm1360, %vm1360
        %vm1393 = vmpackc.low %vm1361, %vm1361
        %vm1394 = vmpackc.low %vm1362, %vm1362
        %vm1395 = vmpackc.low %vm1363, %vm1363
        %vm1396 = vmpackc.low %vm1364, %vm1364
        %vm1397 = vmpackc.low %vm1365, %vm1365
        %vm1398 = vmpackc.low %vm1366, %vm1366
        %vm1399 = vmpackc.low %vm1367, %vm1367
        %vm1400 = vmpackc.low %vm1368, %vm1368
        %vm1401 = vmpackc.low %vm1369, %vm1369
        %vm1402 = vmpackc.low %vm1370, %vm1370
        %vm1403 = vmpackc.low %vm1371, %vm1371
        %vm1404 = vmpackc.low %vm1372, %vm1372
        %vm1405 = vmpackc.low %vm1373, %vm1373
        %vm1406 = vmpackc.low %vm1374, %vm1374
        %vm1407 = vmpackc.low %vm1375, %vm1375
        %vm1408 = vmpackc.low %vm1376, %vm1376
        %vm1409 = vmpackc.low %vm1377, %vm1377
        %vm1410 = vmpackc.low %vm1378, %vm1378
        %vm1411 = vmpackc.low %vm1379, %vm1379
        %vm1412 = vmpackc.low %vm1380, %vm1380
        %vm1413 = vmpackc.low %vm1381, %vm1381
        %vm1414 = vmpackc.low %vm1382, %vm1382
        %vm1415 = vmpackc.low %vm1383, %vm1383
        %vm1416 = vmpackc.low %vm1384, %vm1384
        %vm1417 = vmpackc.low %vm1385, %vm1385
        %vm1418 = vmpackc.low %vm1386, %vm1386
        %vm1419 = vmpackc.low %vm1387, %vm1387
        %vm1420 = vmpackc.low %vm1388, %vm1388
        %vm1421 = vmpackc.low %vm1389, %vm1389
        %vm1422 = vmpackc.low %vm1390, %vm1390
        %v1423 = vsel %vm1391, 65537, 0
        %v1424 = vsel %vm1392, 65537, 0
        %v1425 = vsel %vm1393, 65537, 0
        %v1426 = vsel %vm1394, 65537, 0
        %v1427 = vsel %vm1395, 65537, 0
        %v1428 = vsel %vm1396, 65537, 0
        %v1429 = vsel %vm1397, 65537, 0
        %v1430 = vsel %vm1398, 65537, 0
        %v1431 = vsel %vm1399, 65537, 0
        %v1432 = vsel %vm1400, 65537, 0
        %v1433 = vsel %vm1401, 65537, 0
        %v1434 = vsel %vm1402, 65537, 0
        %v1435 = vsel %vm1403, 65537, 0
        %v1436 = vsel %vm1404, 65537, 0
        %v1437 = vsel %vm1405, 65537, 0
        %v1438 = vsel %vm1406, 65537, 0
        %v1439 = vsel %vm1407, 65537, 0
        %v1440 = vsel %vm1408, 65537, 0
        %v1441 = vsel %vm1409, 65537, 0
        %v1442 = vsel %vm1410, 65537, 0
        %v1443 = vsel %vm1411, 65537, 0
        %v1444 = vsel %vm1412, 65537, 0
        %v1445 = vsel %vm1413, 65537, 0
        %v1446 = vsel %vm1414, 65537, 0
        %v1447 = vsel %vm1415, 65537, 0
        %v1448 = vsel %vm1416, 65537, 0
        %v1449 = vsel %vm1417, 65537, 0
        %v1450 = vsel %vm1418, 65537, 0
        %v1451 = vsel %vm1419, 65537, 0
        %v1452 = vsel %vm1420, 65537, 0
        %v1453 = vsel %vm1421, 65537, 0
        %v1454 = vsel %vm1422, 65537, 0
        %vm1455 = vsmask.f32 3328
        %vm1456 = vsmask.f32 7440
        %vm1457 = vmor %vm1455, %vm1456
        %v1459 = vshll.u32 %v1423, 16
        %v1461 = vrot.slane %v1459, 5
        %v1462 = vshrl.u32 %v1423, 16
        %v1464 = vrot.slane %v1462, 4
        %v1465 = vor.u32 %v1464, %v1461
        %v1466 = vrot.slane %v1465, 4
        %v1468 = vshll.u32 %v1424, 16
        %v1470 = vrot.slane %v1468, 5
        %v1471 = vsel %vm1457, %v1466, %v1470
        %v1472 = vshrl.u32 %v1424, 16
        %v1474 = vrot.slane %v1472, 4
        %v1475 = vor.u32 %v1474, %v1470
        %v1476 = vrot.slane %v1475, 4
        %v1478 = vshll.u32 %v1425, 16
        %v1480 = vrot.slane %v1478, 5
        %v1481 = vsel %vm1457, %v1476, %v1480
        %v1482 = vshrl.u32 %v1425, 16
        %v1484 = vrot.slane %v1482, 4
        %v1485 = vor.u32 %v1484, %v1480
        %v1486 = vrot.slane %v1485, 4
        %v1488 = vshll.u32 %v1426, 16
        %v1490 = vrot.slane %v1488, 5
        %v1491 = vsel %vm1457, %v1486, %v1490
        %v1492 = vshrl.u32 %v1426, 16
        %v1494 = vrot.slane %v1492, 4
        %v1495 = vor.u32 %v1494, %v1490
        %v1496 = vrot.slane %v1495, 4
        %v1498 = vshll.u32 %v1427, 16
        %v1500 = vrot.slane %v1498, 5
        %v1501 = vsel %vm1457, %v1496, %v1500
        %v1502 = vshrl.u32 %v1427, 16
        %v1504 = vrot.slane %v1502, 4
        %v1505 = vor.u32 %v1504, %v1500
        %v1506 = vrot.slane %v1505, 4
        %v1508 = vshll.u32 %v1428, 16
        %v1510 = vrot.slane %v1508, 5
        %v1511 = vsel %vm1457, %v1506, %v1510
        %v1512 = vshrl.u32 %v1428, 16
        %v1514 = vrot.slane %v1512, 4
        %v1515 = vor.u32 %v1514, %v1510
        %v1516 = vrot.slane %v1515, 4
        %v1518 = vshll.u32 %v1429, 16
        %v1520 = vrot.slane %v1518, 5
        %v1521 = vsel %vm1457, %v1516, %v1520
        %v1522 = vshrl.u32 %v1429, 16
        %v1524 = vrot.slane %v1522, 4
        %v1525 = vor.u32 %v1524, %v1520
        %v1526 = vrot.slane %v1525, 4
        %v1528 = vshll.u32 %v1430, 16
        %v1530 = vrot.slane %v1528, 5
        %v1531 = vsel %vm1457, %v1526, %v1530
        %v1532 = vshrl.u32 %v1430, 16
        %v1534 = vrot.slane %v1532, 4
        %v1535 = vor.u32 %v1534, %v1530
        %v1536 = vrot.slane %v1535, 4
        %v1538 = vshll.u32 %v1431, 16
        %v1540 = vrot.slane %v1538, 5
        %v1541 = vsel %vm1457, %v1536, %v1540
        %v1542 = vshrl.u32 %v1431, 16
        %v1544 = vrot.slane %v1542, 4
        %v1545 = vor.u32 %v1544, %v1540
        %v1546 = vrot.slane %v1545, 4
        %v1548 = vshll.u32 %v1432, 16
        %v1550 = vrot.slane %v1548, 5
        %v1551 = vsel %vm1457, %v1546, %v1550
        %v1552 = vshrl.u32 %v1432, 16
        %v1554 = vrot.slane %v1552, 4
        %v1555 = vor.u32 %v1554, %v1550
        %v1556 = vrot.slane %v1555, 4
        %v1558 = vshll.u32 %v1433, 16
        %v1560 = vrot.slane %v1558, 5
        %v1561 = vsel %vm1457, %v1556, %v1560
        %v1562 = vshrl.u32 %v1433, 16
        %v1564 = vrot.slane %v1562, 4
        %v1565 = vor.u32 %v1564, %v1560
        %v1566 = vrot.slane %v1565, 4
        %v1568 = vshll.u32 %v1434, 16
        %v1570 = vrot.slane %v1568, 5
        %v1571 = vsel %vm1457, %v1566, %v1570
        %v1572 = vshrl.u32 %v1434, 16
        %v1574 = vrot.slane %v1572, 4
        %v1575 = vor.u32 %v1574, %v1570
        %v1576 = vrot.slane %v1575, 4
        %v1578 = vshll.u32 %v1435, 16
        %v1580 = vrot.slane %v1578, 5
        %v1581 = vsel %vm1457, %v1576, %v1580
        %v1582 = vshrl.u32 %v1435, 16
        %v1584 = vrot.slane %v1582, 4
        %v1585 = vor.u32 %v1584, %v1580
        %v1586 = vrot.slane %v1585, 4
        %v1588 = vshll.u32 %v1436, 16
        %v1590 = vrot.slane %v1588, 5
        %v1591 = vsel %vm1457, %v1586, %v1590
        %v1592 = vshrl.u32 %v1436, 16
        %v1594 = vrot.slane %v1592, 4
        %v1595 = vor.u32 %v1594, %v1590
        %v1596 = vrot.slane %v1595, 4
        %v1598 = vshll.u32 %v1437, 16
        %v1600 = vrot.slane %v1598, 5
        %v1601 = vsel %vm1457, %v1596, %v1600
        %v1602 = vshrl.u32 %v1437, 16
        %v1604 = vrot.slane %v1602, 4
        %v1605 = vor.u32 %v1604, %v1600
        %v1606 = vrot.slane %v1605, 4
        %v1608 = vshll.u32 %v1438, 16
        %v1610 = vrot.slane %v1608, 5
        %v1611 = vsel %vm1457, %v1606, %v1610
        %v1612 = vshrl.u32 %v1438, 16
        %v1614 = vrot.slane %v1612, 4
        %v1615 = vor.u32 %v1614, %v1610
        %v1616 = vrot.slane %v1615, 4
        %v1618 = vshll.u32 %v1439, 16
        %v1620 = vrot.slane %v1618, 5
        %v1621 = vsel %vm1457, %v1616, %v1620
        %v1622 = vshrl.u32 %v1439, 16
        %v1624 = vrot.slane %v1622, 4
        %v1625 = vor.u32 %v1624, %v1620
        %v1626 = vrot.slane %v1625, 4
        %v1628 = vshll.u32 %v1440, 16
        %v1630 = vrot.slane %v1628, 5
        %v1631 = vsel %vm1457, %v1626, %v1630
        %v1632 = vshrl.u32 %v1440, 16
        %v1634 = vrot.slane %v1632, 4
        %v1635 = vor.u32 %v1634, %v1630
        %v1636 = vrot.slane %v1635, 4
        %v1638 = vshll.u32 %v1441, 16
        %v1640 = vrot.slane %v1638, 5
        %v1641 = vsel %vm1457, %v1636, %v1640
        %v1642 = vshrl.u32 %v1441, 16
        %v1644 = vrot.slane %v1642, 4
        %v1645 = vor.u32 %v1644, %v1640
        %v1646 = vrot.slane %v1645, 4
        %v1648 = vshll.u32 %v1442, 16
        %v1650 = vrot.slane %v1648, 5
        %v1651 = vsel %vm1457, %v1646, %v1650
        %v1652 = vshrl.u32 %v1442, 16
        %v1654 = vrot.slane %v1652, 4
        %v1655 = vor.u32 %v1654, %v1650
        %v1656 = vrot.slane %v1655, 4
        %v1658 = vshll.u32 %v1443, 16
        %v1660 = vrot.slane %v1658, 5
        %v1661 = vsel %vm1457, %v1656, %v1660
        %v1662 = vshrl.u32 %v1443, 16
        %v1664 = vrot.slane %v1662, 4
        %v1665 = vor.u32 %v1664, %v1660
        %v1666 = vrot.slane %v1665, 4
        %v1668 = vshll.u32 %v1444, 16
        %v1670 = vrot.slane %v1668, 5
        %v1671 = vsel %vm1457, %v1666, %v1670
        %v1672 = vshrl.u32 %v1444, 16
        %v1674 = vrot.slane %v1672, 4
        %v1675 = vor.u32 %v1674, %v1670
        %v1676 = vrot.slane %v1675, 4
        %v1678 = vshll.u32 %v1445, 16
        %v1680 = vrot.slane %v1678, 5
        %v1681 = vsel %vm1457, %v1676, %v1680
        %v1682 = vshrl.u32 %v1445, 16
        %v1684 = vrot.slane %v1682, 4
        %v1685 = vor.u32 %v1684, %v1680
        %v1686 = vrot.slane %v1685, 4
        %v1688 = vshll.u32 %v1446, 16
        %v1690 = vrot.slane %v1688, 5
        %v1691 = vsel %vm1457, %v1686, %v1690
        %v1692 = vshrl.u32 %v1446, 16
        %v1694 = vrot.slane %v1692, 4
        %v1695 = vor.u32 %v1694, %v1690
        %v1696 = vrot.slane %v1695, 4
        %v1698 = vshll.u32 %v1447, 16
        %v1700 = vrot.slane %v1698, 5
        %v1701 = vsel %vm1457, %v1696, %v1700
        %v1702 = vshrl.u32 %v1447, 16
        %v1704 = vrot.slane %v1702, 4
        %v1705 = vor.u32 %v1704, %v1700
        %v1706 = vrot.slane %v1705, 4
        %v1708 = vshll.u32 %v1448, 16
        %v1710 = vrot.slane %v1708, 5
        %v1711 = vsel %vm1457, %v1706, %v1710
        %v1712 = vshrl.u32 %v1448, 16
        %v1714 = vrot.slane %v1712, 4
        %v1715 = vor.u32 %v1714, %v1710
        %v1716 = vrot.slane %v1715, 4
        %v1718 = vshll.u32 %v1449, 16
        %v1720 = vrot.slane %v1718, 5
        %v1721 = vsel %vm1457, %v1716, %v1720
        %v1722 = vshrl.u32 %v1449, 16
        %v1724 = vrot.slane %v1722, 4
        %v1725 = vor.u32 %v1724, %v1720
        %v1726 = vrot.slane %v1725, 4
        %v1728 = vshll.u32 %v1450, 16
        %v1730 = vrot.slane %v1728, 5
        %v1731 = vsel %vm1457, %v1726, %v1730
        %v1732 = vshrl.u32 %v1450, 16
        %v1734 = vrot.slane %v1732, 4
        %v1735 = vor.u32 %v1734, %v1730
        %v1736 = vrot.slane %v1735, 4
        %v1738 = vshll.u32 %v1451, 16
        %v1740 = vrot.slane %v1738, 5
        %v1741 = vsel %vm1457, %v1736, %v1740
        %v1742 = vshrl.u32 %v1451, 16
        %v1744 = vrot.slane %v1742, 4
        %v1745 = vor.u32 %v1744, %v1740
        %v1746 = vrot.slane %v1745, 4
        %v1748 = vshll.u32 %v1452, 16
        %v1750 = vrot.slane %v1748, 5
        %v1751 = vsel %vm1457, %v1746, %v1750
        %v1752 = vshrl.u32 %v1452, 16
        %v1754 = vrot.slane %v1752, 4
        %v1755 = vor.u32 %v1754, %v1750
        %v1756 = vrot.slane %v1755, 4
        %v1758 = vshll.u32 %v1453, 16
        %v1760 = vrot.slane %v1758, 5
        %v1761 = vsel %vm1457, %v1756, %v1760
        %v1762 = vshrl.u32 %v1453, 16
        %v1764 = vrot.slane %v1762, 4
        %v1765 = vor.u32 %v1764, %v1760
        %v1766 = vrot.slane %v1765, 4
        %v1768 = vshll.u32 %v1454, 16
        %v1770 = vrot.slane %v1768, 5
        %v1771 = vsel %vm1457, %v1766, %v1770
        %v1772 = vshrl.u32 %v1454, 16
        %v1774 = vrot.slane %v1772, 4
        %v1775 = vor.u32 %v1774, %v1770
        %v1776 = vrot.slane %v1775, 4
        %v1777 = vunpack.c.l.b16 %v1461
        %v1778 = vunpack.c.h.b16 %v1461
        %v1779 = vunpack.c.l.b16 0
        %v1780 = vunpack.c.h.b16 0
        %vm1781 = vcmp.ne.s32.totalorder %v1777, %v1779
        %vm1782 = vcmp.ne.s32.totalorder %v1778, %v1780
        %vm1783 = vmpackc.low %vm1782, %vm1781
        %v1784 = vunpack.c.l.b16 %v1471
        %v1785 = vunpack.c.h.b16 %v1471
        %v1786 = vunpack.c.l.b16 0
        %v1787 = vunpack.c.h.b16 0
        %vm1788 = vcmp.ne.s32.totalorder %v1784, %v1786
        %vm1789 = vcmp.ne.s32.totalorder %v1785, %v1787
        %vm1790 = vmpackc.low %vm1789, %vm1788
        %v1791 = vunpack.c.l.b16 %v1481
        %v1792 = vunpack.c.h.b16 %v1481
        %v1793 = vunpack.c.l.b16 0
        %v1794 = vunpack.c.h.b16 0
        %vm1795 = vcmp.ne.s32.totalorder %v1791, %v1793
        %vm1796 = vcmp.ne.s32.totalorder %v1792, %v1794
        %vm1797 = vmpackc.low %vm1796, %vm1795
        %v1798 = vunpack.c.l.b16 %v1491
        %v1799 = vunpack.c.h.b16 %v1491
        %v1800 = vunpack.c.l.b16 0
        %v1801 = vunpack.c.h.b16 0
        %vm1802 = vcmp.ne.s32.totalorder %v1798, %v1800
        %vm1803 = vcmp.ne.s32.totalorder %v1799, %v1801
        %vm1804 = vmpackc.low %vm1803, %vm1802
        %v1805 = vunpack.c.l.b16 %v1501
        %v1806 = vunpack.c.h.b16 %v1501
        %v1807 = vunpack.c.l.b16 0
        %v1808 = vunpack.c.h.b16 0
        %vm1809 = vcmp.ne.s32.totalorder %v1805, %v1807
        %vm1810 = vcmp.ne.s32.totalorder %v1806, %v1808
        %vm1811 = vmpackc.low %vm1810, %vm1809
        %v1812 = vunpack.c.l.b16 %v1511
        %v1813 = vunpack.c.h.b16 %v1511
        %v1814 = vunpack.c.l.b16 0
        %v1815 = vunpack.c.h.b16 0
        %vm1816 = vcmp.ne.s32.totalorder %v1812, %v1814
        %vm1817 = vcmp.ne.s32.totalorder %v1813, %v1815
        %vm1818 = vmpackc.low %vm1817, %vm1816
        %v1819 = vunpack.c.l.b16 %v1521
        %v1820 = vunpack.c.h.b16 %v1521
        %v1821 = vunpack.c.l.b16 0
        %v1822 = vunpack.c.h.b16 0
        %vm1823 = vcmp.ne.s32.totalorder %v1819, %v1821
        %vm1824 = vcmp.ne.s32.totalorder %v1820, %v1822
        %vm1825 = vmpackc.low %vm1824, %vm1823
        %v1826 = vunpack.c.l.b16 %v1531
        %v1827 = vunpack.c.h.b16 %v1531
        %v1828 = vunpack.c.l.b16 0
        %v1829 = vunpack.c.h.b16 0
        %vm1830 = vcmp.ne.s32.totalorder %v1826, %v1828
        %vm1831 = vcmp.ne.s32.totalorder %v1827, %v1829
        %vm1832 = vmpackc.low %vm1831, %vm1830
        %v1833 = vunpack.c.l.b16 %v1541
        %v1834 = vunpack.c.h.b16 %v1541
        %v1835 = vunpack.c.l.b16 0
        %v1836 = vunpack.c.h.b16 0
        %vm1837 = vcmp.ne.s32.totalorder %v1833, %v1835
        %vm1838 = vcmp.ne.s32.totalorder %v1834, %v1836
        %vm1839 = vmpackc.low %vm1838, %vm1837
        %v1840 = vunpack.c.l.b16 %v1551
        %v1841 = vunpack.c.h.b16 %v1551
        %v1842 = vunpack.c.l.b16 0
        %v1843 = vunpack.c.h.b16 0
        %vm1844 = vcmp.ne.s32.totalorder %v1840, %v1842
        %vm1845 = vcmp.ne.s32.totalorder %v1841, %v1843
        %vm1846 = vmpackc.low %vm1845, %vm1844
        %v1847 = vunpack.c.l.b16 %v1561
        %v1848 = vunpack.c.h.b16 %v1561
        %v1849 = vunpack.c.l.b16 0
        %v1850 = vunpack.c.h.b16 0
        %vm1851 = vcmp.ne.s32.totalorder %v1847, %v1849
        %vm1852 = vcmp.ne.s32.totalorder %v1848, %v1850
        %vm1853 = vmpackc.low %vm1852, %vm1851
        %v1854 = vunpack.c.l.b16 %v1571
        %v1855 = vunpack.c.h.b16 %v1571
        %v1856 = vunpack.c.l.b16 0
        %v1857 = vunpack.c.h.b16 0
        %vm1858 = vcmp.ne.s32.totalorder %v1854, %v1856
        %vm1859 = vcmp.ne.s32.totalorder %v1855, %v1857
        %vm1860 = vmpackc.low %vm1859, %vm1858
        %v1861 = vunpack.c.l.b16 %v1581
        %v1862 = vunpack.c.h.b16 %v1581
        %v1863 = vunpack.c.l.b16 0
        %v1864 = vunpack.c.h.b16 0
        %vm1865 = vcmp.ne.s32.totalorder %v1861, %v1863
        %vm1866 = vcmp.ne.s32.totalorder %v1862, %v1864
        %vm1867 = vmpackc.low %vm1866, %vm1865
        %v1868 = vunpack.c.l.b16 %v1591
        %v1869 = vunpack.c.h.b16 %v1591
        %v1870 = vunpack.c.l.b16 0
        %v1871 = vunpack.c.h.b16 0
        %vm1872 = vcmp.ne.s32.totalorder %v1868, %v1870
        %vm1873 = vcmp.ne.s32.totalorder %v1869, %v1871
        %vm1874 = vmpackc.low %vm1873, %vm1872
        %v1875 = vunpack.c.l.b16 %v1601
        %v1876 = vunpack.c.h.b16 %v1601
        %v1877 = vunpack.c.l.b16 0
        %v1878 = vunpack.c.h.b16 0
        %vm1879 = vcmp.ne.s32.totalorder %v1875, %v1877
        %vm1880 = vcmp.ne.s32.totalorder %v1876, %v1878
        %vm1881 = vmpackc.low %vm1880, %vm1879
        %v1882 = vunpack.c.l.b16 %v1611
        %v1883 = vunpack.c.h.b16 %v1611
        %v1884 = vunpack.c.l.b16 0
        %v1885 = vunpack.c.h.b16 0
        %vm1886 = vcmp.ne.s32.totalorder %v1882, %v1884
        %vm1887 = vcmp.ne.s32.totalorder %v1883, %v1885
        %vm1888 = vmpackc.low %vm1887, %vm1886
        %v1889 = vunpack.c.l.b16 %v1621
        %v1890 = vunpack.c.h.b16 %v1621
        %v1891 = vunpack.c.l.b16 0
        %v1892 = vunpack.c.h.b16 0
        %vm1893 = vcmp.ne.s32.totalorder %v1889, %v1891
        %vm1894 = vcmp.ne.s32.totalorder %v1890, %v1892
        %vm1895 = vmpackc.low %vm1894, %vm1893
        %v1896 = vunpack.c.l.b16 %v1631
        %v1897 = vunpack.c.h.b16 %v1631
        %v1898 = vunpack.c.l.b16 0
        %v1899 = vunpack.c.h.b16 0
        %vm1900 = vcmp.ne.s32.totalorder %v1896, %v1898
        %vm1901 = vcmp.ne.s32.totalorder %v1897, %v1899
        %vm1902 = vmpackc.low %vm1901, %vm1900
        %v1903 = vunpack.c.l.b16 %v1641
        %v1904 = vunpack.c.h.b16 %v1641
        %v1905 = vunpack.c.l.b16 0
        %v1906 = vunpack.c.h.b16 0
        %vm1907 = vcmp.ne.s32.totalorder %v1903, %v1905
        %vm1908 = vcmp.ne.s32.totalorder %v1904, %v1906
        %vm1909 = vmpackc.low %vm1908, %vm1907
        %v1910 = vunpack.c.l.b16 %v1651
        %v1911 = vunpack.c.h.b16 %v1651
        %v1912 = vunpack.c.l.b16 0
        %v1913 = vunpack.c.h.b16 0
        %vm1914 = vcmp.ne.s32.totalorder %v1910, %v1912
        %vm1915 = vcmp.ne.s32.totalorder %v1911, %v1913
        %vm1916 = vmpackc.low %vm1915, %vm1914
        %v1917 = vunpack.c.l.b16 %v1661
        %v1918 = vunpack.c.h.b16 %v1661
        %v1919 = vunpack.c.l.b16 0
        %v1920 = vunpack.c.h.b16 0
        %vm1921 = vcmp.ne.s32.totalorder %v1917, %v1919
        %vm1922 = vcmp.ne.s32.totalorder %v1918, %v1920
        %vm1923 = vmpackc.low %vm1922, %vm1921
        %v1924 = vunpack.c.l.b16 %v1671
        %v1925 = vunpack.c.h.b16 %v1671
        %v1926 = vunpack.c.l.b16 0
        %v1927 = vunpack.c.h.b16 0
        %vm1928 = vcmp.ne.s32.totalorder %v1924, %v1926
        %vm1929 = vcmp.ne.s32.totalorder %v1925, %v1927
        %vm1930 = vmpackc.low %vm1929, %vm1928
        %v1931 = vunpack.c.l.b16 %v1681
        %v1932 = vunpack.c.h.b16 %v1681
        %v1933 = vunpack.c.l.b16 0
        %v1934 = vunpack.c.h.b16 0
        %vm1935 = vcmp.ne.s32.totalorder %v1931, %v1933
        %vm1936 = vcmp.ne.s32.totalorder %v1932, %v1934
        %vm1937 = vmpackc.low %vm1936, %vm1935
        %v1938 = vunpack.c.l.b16 %v1691
        %v1939 = vunpack.c.h.b16 %v1691
        %v1940 = vunpack.c.l.b16 0
        %v1941 = vunpack.c.h.b16 0
        %vm1942 = vcmp.ne.s32.totalorder %v1938, %v1940
        %vm1943 = vcmp.ne.s32.totalorder %v1939, %v1941
        %vm1944 = vmpackc.low %vm1943, %vm1942
        %v1945 = vunpack.c.l.b16 %v1701
        %v1946 = vunpack.c.h.b16 %v1701
        %v1947 = vunpack.c.l.b16 0
        %v1948 = vunpack.c.h.b16 0
        %vm1949 = vcmp.ne.s32.totalorder %v1945, %v1947
        %vm1950 = vcmp.ne.s32.totalorder %v1946, %v1948
        %vm1951 = vmpackc.low %vm1950, %vm1949
        %v1952 = vunpack.c.l.b16 %v1711
        %v1953 = vunpack.c.h.b16 %v1711
        %v1954 = vunpack.c.l.b16 0
        %v1955 = vunpack.c.h.b16 0
        %vm1956 = vcmp.ne.s32.totalorder %v1952, %v1954
        %vm1957 = vcmp.ne.s32.totalorder %v1953, %v1955
        %vm1958 = vmpackc.low %vm1957, %vm1956
        %v1959 = vunpack.c.l.b16 %v1721
        %v1960 = vunpack.c.h.b16 %v1721
        %v1961 = vunpack.c.l.b16 0
        %v1962 = vunpack.c.h.b16 0
        %vm1963 = vcmp.ne.s32.totalorder %v1959, %v1961
        %vm1964 = vcmp.ne.s32.totalorder %v1960, %v1962
        %vm1965 = vmpackc.low %vm1964, %vm1963
        %v1966 = vunpack.c.l.b16 %v1731
        %v1967 = vunpack.c.h.b16 %v1731
        %v1968 = vunpack.c.l.b16 0
        %v1969 = vunpack.c.h.b16 0
        %vm1970 = vcmp.ne.s32.totalorder %v1966, %v1968
        %vm1971 = vcmp.ne.s32.totalorder %v1967, %v1969
        %vm1972 = vmpackc.low %vm1971, %vm1970
        %v1973 = vunpack.c.l.b16 %v1741
        %v1974 = vunpack.c.h.b16 %v1741
        %v1975 = vunpack.c.l.b16 0
        %v1976 = vunpack.c.h.b16 0
        %vm1977 = vcmp.ne.s32.totalorder %v1973, %v1975
        %vm1978 = vcmp.ne.s32.totalorder %v1974, %v1976
        %vm1979 = vmpackc.low %vm1978, %vm1977
        %v1980 = vunpack.c.l.b16 %v1751
        %v1981 = vunpack.c.h.b16 %v1751
        %v1982 = vunpack.c.l.b16 0
        %v1983 = vunpack.c.h.b16 0
        %vm1984 = vcmp.ne.s32.totalorder %v1980, %v1982
        %vm1985 = vcmp.ne.s32.totalorder %v1981, %v1983
        %vm1986 = vmpackc.low %vm1985, %vm1984
        %v1987 = vunpack.c.l.b16 %v1761
        %v1988 = vunpack.c.h.b16 %v1761
        %v1989 = vunpack.c.l.b16 0
        %v1990 = vunpack.c.h.b16 0
        %vm1991 = vcmp.ne.s32.totalorder %v1987, %v1989
        %vm1992 = vcmp.ne.s32.totalorder %v1988, %v1990
        %vm1993 = vmpackc.low %vm1992, %vm1991
        %v1994 = vunpack.c.l.b16 %v1771
        %v1995 = vunpack.c.h.b16 %v1771
        %v1996 = vunpack.c.l.b16 0
        %v1997 = vunpack.c.h.b16 0
        %vm1998 = vcmp.ne.s32.totalorder %v1994, %v1996
        %vm1999 = vcmp.ne.s32.totalorder %v1995, %v1997
        %vm2000 = vmpackc.low %vm1999, %vm1998
        %v2001 = vunpack.c.l.b16 %v1776
        %v2002 = vunpack.c.h.b16 %v1776
        %v2003 = vunpack.c.l.b16 0
        %v2004 = vunpack.c.h.b16 0
        %vm2005 = vcmp.ne.s32.totalorder %v2001, %v2003
        %vm2006 = vcmp.ne.s32.totalorder %v2002, %v2004
        %vm2007 = vmpackc.low %vm2006, %vm2005
        %v2008 = vsel %vm1783, %v1294, 0
        %v2009 = vsel %vm1790, %v1295, 0
        %v2010 = vsel %vm1797, %v1296, 0
        %v2011 = vsel %vm1804, %v1297, 0
        %v2012 = vsel %vm1811, %v1298, 0
        %v2013 = vsel %vm1818, %v1299, 0
        %v2014 = vsel %vm1825, %v1300, 0
        %v2015 = vsel %vm1832, %v1301, 0
        %v2016 = vsel %vm1839, %v1302, 0
        %v2017 = vsel %vm1846, %v1303, 0
        %v2018 = vsel %vm1853, %v1304, 0
        %v2019 = vsel %vm1860, %v1305, 0
        %v2020 = vsel %vm1867, %v1306, 0
        %v2021 = vsel %vm1874, %v1307, 0
        %v2022 = vsel %vm1881, %v1308, 0
        %v2023 = vsel %vm1888, %v1309, 0
        %v2024 = vsel %vm1895, %v1310, 0
        %v2025 = vsel %vm1902, %v1311, 0
        %v2026 = vsel %vm1909, %v1312, 0
        %v2027 = vsel %vm1916, %v1313, 0
        %v2028 = vsel %vm1923, %v1314, 0
        %v2029 = vsel %vm1930, %v1315, 0
        %v2030 = vsel %vm1937, %v1316, 0
        %v2031 = vsel %vm1944, %v1317, 0
        %v2032 = vsel %vm1951, %v1318, 0
        %v2033 = vsel %vm1958, %v1319, 0
        %v2034 = vsel %vm1965, %v1320, 0
        %v2035 = vsel %vm1972, %v1321, 0
        %v2036 = vsel %vm1979, %v1322, 0
        %v2037 = vsel %vm1986, %v1323, 0
        %v2038 = vsel %vm1993, %v1324, 0
        %v2039 = vsel %vm2000, %v1325, 0
        %v2040 = vsel %vm2007, %v1326, 0
        %v2041 = vld [vmem:[#allocation9] sm:$0xf]
        %v2042 = vld [vmem:[#allocation9 + $0x4] sm:$0xf]
        %v2043 = vld [vmem:[#allocation9 + $0x8] sm:$0xf]
        %v2044 = vld [vmem:[#allocation9 + $0xc] sm:$0xf]
        %v2045 = vld [vmem:[#allocation9 + $0x10] sm:$0xf]
        %v2046 = vld [vmem:[#allocation9 + $0x14] sm:$0xf]
        %v2047 = vld [vmem:[#allocation9 + $0x18] sm:$0xf]
        %v2048 = vld [vmem:[#allocation9 + $0x1c] sm:$0xf]
        %v2049 = vld [vmem:[#allocation9 + $0x20] sm:$0xf]
        %v2050 = vld [vmem:[#allocation9 + $0x24] sm:$0xf]
        %v2051 = vld [vmem:[#allocation9 + $0x28] sm:$0xf]
        %v2052 = vld [vmem:[#allocation9 + $0x2c] sm:$0xf]
        %v2053 = vld [vmem:[#allocation9 + $0x30] sm:$0xf]
        %v2054 = vld [vmem:[#allocation9 + $0x34] sm:$0xf]
        %v2055 = vld [vmem:[#allocation9 + $0x38] sm:$0xf]
        %v2056 = vld [vmem:[#allocation9 + $0x3c] sm:$0xf]
        %s2057 = scalar_lea.vmem [#allocation9], 64
        %v2058 = vld [vmem:[%s2057] sm:$0xf]
        %v2059 = vld [vmem:[%s2057 + $0x4] sm:$0xf]
        %v2060 = vld [vmem:[%s2057 + $0x8] sm:$0xf]
        %v2061 = vld [vmem:[%s2057 + $0xc] sm:$0xf]
        %v2062 = vld [vmem:[%s2057 + $0x10] sm:$0xf]
        %v2063 = vld [vmem:[%s2057 + $0x14] sm:$0xf]
        %v2064 = vld [vmem:[%s2057 + $0x18] sm:$0xf]
        %v2065 = vld [vmem:[%s2057 + $0x1c] sm:$0xf]
        %v2066 = vld [vmem:[%s2057 + $0x20] sm:$0xf]
        %v2067 = vld [vmem:[%s2057 + $0x24] sm:$0xf]
        %v2068 = vld [vmem:[%s2057 + $0x28] sm:$0xf]
        %v2069 = vld [vmem:[%s2057 + $0x2c] sm:$0xf]
        %v2070 = vld [vmem:[%s2057 + $0x30] sm:$0xf]
        %v2071 = vld [vmem:[%s2057 + $0x34] sm:$0xf]
        %v2072 = vld [vmem:[%s2057 + $0x38] sm:$0xf]
        %v2073 = vld [vmem:[%s2057 + $0x3c] sm:$0xf]
        %v2106 = vunpack.c.l.b16 %v1295
        %v2107 = vunpack.c.l.b16 %v1296
        %v2108 = vunpack.c.l.b16 %v1297
        %v2109 = vunpack.c.l.b16 %v1298
        %v2110 = vunpack.c.l.b16 %v1299
        %v2111 = vunpack.c.l.b16 %v1300
        %v2112 = vunpack.c.l.b16 %v1301
        %v2113 = vunpack.c.l.b16 %v1302
        %v2114 = vunpack.c.l.b16 %v1303
        %v2115 = vunpack.c.l.b16 %v1304
        %v2116 = vunpack.c.l.b16 %v1305
        %v2117 = vunpack.c.l.b16 %v1306
        %v2118 = vunpack.c.l.b16 %v1307
        %v2119 = vunpack.c.l.b16 %v1308
        %v2120 = vunpack.c.l.b16 %v1309
        %v2121 = vunpack.c.l.b16 %v1310
        %v2122 = vunpack.c.l.b16 %v1311
        %v2123 = vunpack.c.l.b16 %v1312
        %v2124 = vunpack.c.l.b16 %v1313
        %v2125 = vunpack.c.l.b16 %v1314
        %v2126 = vunpack.c.l.b16 %v1315
        %v2127 = vunpack.c.l.b16 %v1316
        %v2128 = vunpack.c.l.b16 %v1317
        %v2129 = vunpack.c.l.b16 %v1318
        %v2130 = vunpack.c.l.b16 %v1319
        %v2131 = vunpack.c.l.b16 %v1320
        %v2132 = vunpack.c.l.b16 %v1321
        %v2133 = vunpack.c.l.b16 %v1322
        %v2134 = vunpack.c.l.b16 %v1323
        %v2135 = vunpack.c.l.b16 %v1324
        %v2136 = vunpack.c.l.b16 %v1325
        %v2137 = vunpack.c.l.b16 %v1326
        %v2138 = vpack.c.b16 %v2107, %v2106
        %v2139 = vpack.c.b16 %v2109, %v2108
        %v2140 = vpack.c.b16 %v2111, %v2110
        %v2141 = vpack.c.b16 %v2113, %v2112
        %v2142 = vpack.c.b16 %v2115, %v2114
        %v2143 = vpack.c.b16 %v2117, %v2116
        %v2144 = vpack.c.b16 %v2119, %v2118
        %v2145 = vpack.c.b16 %v2121, %v2120
        %v2146 = vpack.c.b16 %v2123, %v2122
        %v2147 = vpack.c.b16 %v2125, %v2124
        %v2148 = vpack.c.b16 %v2127, %v2126
        %v2149 = vpack.c.b16 %v2129, %v2128
        %v2150 = vpack.c.b16 %v2131, %v2130
        %v2151 = vpack.c.b16 %v2133, %v2132
        %v2152 = vpack.c.b16 %v2135, %v2134
        %v2153 = vpack.c.b16 %v2137, %v2136
        %v2186 = vunpack.c.l.b16 %v2058
        %v2187 = vunpack.c.l.b16 %v2059
        %v2188 = vunpack.c.l.b16 %v2060
        %v2189 = vunpack.c.l.b16 %v2061
        %v2190 = vunpack.c.l.b16 %v2062
        %v2191 = vunpack.c.l.b16 %v2063
        %v2192 = vunpack.c.l.b16 %v2064
        %v2193 = vunpack.c.l.b16 %v2065
        %v2194 = vunpack.c.l.b16 %v2066
        %v2195 = vunpack.c.l.b16 %v2067
        %v2196 = vunpack.c.l.b16 %v2068
        %v2197 = vunpack.c.l.b16 %v2069
        %v2198 = vunpack.c.l.b16 %v2070
        %v2199 = vunpack.c.l.b16 %v2071
        %v2200 = vunpack.c.l.b16 %v2072
        %v2201 = vunpack.c.l.b16 %v2073
        %v2202 = vpack.c.b16 %v2187, %v2186
        %v2203 = vpack.c.b16 %v2189, %v2188
        %v2204 = vpack.c.b16 %v2191, %v2190
        %v2205 = vpack.c.b16 %v2193, %v2192
        %v2206 = vpack.c.b16 %v2195, %v2194
        %v2207 = vpack.c.b16 %v2197, %v2196
        %v2208 = vpack.c.b16 %v2199, %v2198
        %v2209 = vpack.c.b16 %v2201, %v2200
        %2218 = vmatpush.bf16.msra.mxu0 %v2209
        %2219 = vmatpush.bf16.msra.mxu0 %v2208
        %2220 = vmatpush.bf16.msra.mxu0 %v2207
        %2221 = vmatpush.bf16.msra.mxu0 %v2206
        %2222 = vmatpush.bf16.msra.mxu0 %v2205
        %2223 = vmatpush.bf16.msra.mxu0 %v2204
        %2224 = vmatpush.bf16.msra.mxu0 %v2203
        %2225 = vmatpush.bf16.msra.mxu0 %v2202
        %2226 = vmatmul.bf16.gmra.mxu0 %v2138
        %v2227 = vpop.f32.mrf.mxu0
        %v2228 = vadd.f32 0.0, %v2227
        %v2229 = vpop.f32.mrf.mxu0
        %v2230 = vadd.f32 0.0, %v2229
        %2231 = vmatmul.bf16.gmra.mxu0 %v2139
        %v2232 = vpop.f32.mrf.mxu0
        %v2233 = vadd.f32 0.0, %v2232
        %v2234 = vpop.f32.mrf.mxu0
        %v2235 = vadd.f32 0.0, %v2234
        %2236 = vmatmul.bf16.gmra.mxu0 %v2140
        %v2237 = vpop.f32.mrf.mxu0
        %v2238 = vadd.f32 0.0, %v2237
        %v2239 = vpop.f32.mrf.mxu0
        %v2240 = vadd.f32 0.0, %v2239
        %2241 = vmatmul.bf16.gmra.mxu0 %v2141
        %v2242 = vpop.f32.mrf.mxu0
        %v2243 = vadd.f32 0.0, %v2242
        %v2244 = vpop.f32.mrf.mxu0
        %v2245 = vadd.f32 0.0, %v2244
        %2246 = vmatmul.bf16.gmra.mxu0 %v2142
        %v2247 = vpop.f32.mrf.mxu0
        %v2248 = vadd.f32 0.0, %v2247
        %v2249 = vpop.f32.mrf.mxu0
        %v2250 = vadd.f32 0.0, %v2249
        %2251 = vmatmul.bf16.gmra.mxu0 %v2143
        %v2252 = vpop.f32.mrf.mxu0
        %v2253 = vadd.f32 0.0, %v2252
        %v2254 = vpop.f32.mrf.mxu0
        %v2255 = vadd.f32 0.0, %v2254
        %2256 = vmatmul.bf16.gmra.mxu0 %v2144
        %v2257 = vpop.f32.mrf.mxu0
        %v2258 = vadd.f32 0.0, %v2257
        %v2259 = vpop.f32.mrf.mxu0
        %v2260 = vadd.f32 0.0, %v2259
        %2261 = vmatmul.bf16.gmra.mxu0 %v2145
        %v2262 = vpop.f32.mrf.mxu0
        %v2263 = vadd.f32 0.0, %v2262
        %v2264 = vpop.f32.mrf.mxu0
        %v2265 = vadd.f32 0.0, %v2264
        %2266 = vmatmul.bf16.gmra.mxu0 %v2146
        %v2267 = vpop.f32.mrf.mxu0
        %v2268 = vadd.f32 0.0, %v2267
        %v2269 = vpop.f32.mrf.mxu0
        %v2270 = vadd.f32 0.0, %v2269
        %2271 = vmatmul.bf16.gmra.mxu0 %v2147
        %v2272 = vpop.f32.mrf.mxu0
        %v2273 = vadd.f32 0.0, %v2272
        %v2274 = vpop.f32.mrf.mxu0
        %v2275 = vadd.f32 0.0, %v2274
        %2276 = vmatmul.bf16.gmra.mxu0 %v2148
        %v2277 = vpop.f32.mrf.mxu0
        %v2278 = vadd.f32 0.0, %v2277
        %v2279 = vpop.f32.mrf.mxu0
        %v2280 = vadd.f32 0.0, %v2279
        %2281 = vmatmul.bf16.gmra.mxu0 %v2149
        %v2282 = vpop.f32.mrf.mxu0
        %v2283 = vadd.f32 0.0, %v2282
        %v2284 = vpop.f32.mrf.mxu0
        %v2285 = vadd.f32 0.0, %v2284
        %2286 = vmatmul.bf16.gmra.mxu0 %v2150
        %v2287 = vpop.f32.mrf.mxu0
        %v2288 = vadd.f32 0.0, %v2287
        %v2289 = vpop.f32.mrf.mxu0
        %v2290 = vadd.f32 0.0, %v2289
        %2291 = vmatmul.bf16.gmra.mxu0 %v2151
        %v2292 = vpop.f32.mrf.mxu0
        %v2293 = vadd.f32 0.0, %v2292
        %v2294 = vpop.f32.mrf.mxu0
        %v2295 = vadd.f32 0.0, %v2294
        %2296 = vmatmul.bf16.gmra.mxu0 %v2152
        %v2297 = vpop.f32.mrf.mxu0
        %v2298 = vadd.f32 0.0, %v2297
        %v2299 = vpop.f32.mrf.mxu0
        %v2300 = vadd.f32 0.0, %v2299
        %2301 = vmatmul.bf16.gmra.mxu0 %v2153
        %v2302 = vpop.f32.mrf.mxu0
        %v2303 = vadd.f32 0.0, %v2302
        %v2304 = vpop.f32.mrf.mxu0
        %v2305 = vadd.f32 0.0, %v2304
        %2306 = vdwg.mxu0
        %v2340 = vunpack.c.l.b16 %v2008
        %v2341 = vunpack.c.l.b16 %v2009
        %v2342 = vunpack.c.l.b16 %v2010
        %v2343 = vunpack.c.l.b16 %v2011
        %v2344 = vunpack.c.l.b16 %v2012
        %v2345 = vunpack.c.l.b16 %v2013
        %v2346 = vunpack.c.l.b16 %v2014
        %v2347 = vunpack.c.l.b16 %v2015
        %v2348 = vunpack.c.l.b16 %v2016
        %v2349 = vunpack.c.l.b16 %v2017
        %v2350 = vunpack.c.l.b16 %v2018
        %v2351 = vunpack.c.l.b16 %v2019
        %v2352 = vunpack.c.l.b16 %v2020
        %v2353 = vunpack.c.l.b16 %v2021
        %v2354 = vunpack.c.l.b16 %v2022
        %v2355 = vunpack.c.l.b16 %v2023
        %v2356 = vunpack.c.l.b16 %v2024
        %v2357 = vunpack.c.l.b16 %v2025
        %v2358 = vunpack.c.l.b16 %v2026
        %v2359 = vunpack.c.l.b16 %v2027
        %v2360 = vunpack.c.l.b16 %v2028
        %v2361 = vunpack.c.l.b16 %v2029
        %v2362 = vunpack.c.l.b16 %v2030
        %v2363 = vunpack.c.l.b16 %v2031
        %v2364 = vunpack.c.l.b16 %v2032
        %v2365 = vunpack.c.l.b16 %v2033
        %v2366 = vunpack.c.l.b16 %v2034
        %v2367 = vunpack.c.l.b16 %v2035
        %v2368 = vunpack.c.l.b16 %v2036
        %v2369 = vunpack.c.l.b16 %v2037
        %v2370 = vunpack.c.l.b16 %v2038
        %v2371 = vunpack.c.l.b16 %v2039
        %v2372 = vunpack.c.l.b16 %v2040
        %v2373 = vpack.c.b16 %v2341, %v2340
        %v2374 = vpack.c.b16 %v2343, %v2342
        %v2375 = vpack.c.b16 %v2345, %v2344
        %v2376 = vpack.c.b16 %v2347, %v2346
        %v2377 = vpack.c.b16 %v2349, %v2348
        %v2378 = vpack.c.b16 %v2351, %v2350
        %v2379 = vpack.c.b16 %v2353, %v2352
        %v2380 = vpack.c.b16 %v2355, %v2354
        %v2381 = vpack.c.b16 %v2357, %v2356
        %v2382 = vpack.c.b16 %v2359, %v2358
        %v2383 = vpack.c.b16 %v2361, %v2360
        %v2384 = vpack.c.b16 %v2363, %v2362
        %v2385 = vpack.c.b16 %v2365, %v2364
        %v2386 = vpack.c.b16 %v2367, %v2366
        %v2387 = vpack.c.b16 %v2369, %v2368
        %v2388 = vpack.c.b16 %v2371, %v2370
        %v2389 = vpack.c.b16 %v2372, %v2372
        %vm2390 = vsmask.f32 4352
        %v2392 = vshrl.u32 %v2373, 16
        %v2394 = vrot.slane %v2392, 3
        %v2395 = vshll.u32 %v2373, 16
        %v2397 = vrot.slane %v2395, 4
        %v2398 = vor.u32 %v2394, %v2397
        %v2400 = vshrl.u32 %v2374, 16
        %v2402 = vrot.slane %v2400, 3
        %v2403 = vshll.u32 %v2374, 16
        %v2405 = vrot.slane %v2403, 4
        %v2406 = vor.u32 %v2402, %v2405
        %v2407 = vsel %vm2390, %v2398, %v2406
        %v2409 = vshrl.u32 %v2375, 16
        %v2411 = vrot.slane %v2409, 3
        %v2412 = vshll.u32 %v2375, 16
        %v2414 = vrot.slane %v2412, 4
        %v2415 = vor.u32 %v2411, %v2414
        %v2416 = vsel %vm2390, %v2406, %v2415
        %v2418 = vshrl.u32 %v2376, 16
        %v2420 = vrot.slane %v2418, 3
        %v2421 = vshll.u32 %v2376, 16
        %v2423 = vrot.slane %v2421, 4
        %v2424 = vor.u32 %v2420, %v2423
        %v2425 = vsel %vm2390, %v2415, %v2424
        %v2427 = vshrl.u32 %v2377, 16
        %v2429 = vrot.slane %v2427, 3
        %v2430 = vshll.u32 %v2377, 16
        %v2432 = vrot.slane %v2430, 4
        %v2433 = vor.u32 %v2429, %v2432
        %v2434 = vsel %vm2390, %v2424, %v2433
        %v2436 = vshrl.u32 %v2378, 16
        %v2438 = vrot.slane %v2436, 3
        %v2439 = vshll.u32 %v2378, 16
        %v2441 = vrot.slane %v2439, 4
        %v2442 = vor.u32 %v2438, %v2441
        %v2443 = vsel %vm2390, %v2433, %v2442
        %v2445 = vshrl.u32 %v2379, 16
        %v2447 = vrot.slane %v2445, 3
        %v2448 = vshll.u32 %v2379, 16
        %v2450 = vrot.slane %v2448, 4
        %v2451 = vor.u32 %v2447, %v2450
        %v2452 = vsel %vm2390, %v2442, %v2451
        %v2454 = vshrl.u32 %v2380, 16
        %v2456 = vrot.slane %v2454, 3
        %v2457 = vshll.u32 %v2380, 16
        %v2459 = vrot.slane %v2457, 4
        %v2460 = vor.u32 %v2456, %v2459
        %v2461 = vsel %vm2390, %v2451, %v2460
        %v2463 = vshrl.u32 %v2381, 16
        %v2465 = vrot.slane %v2463, 3
        %v2466 = vshll.u32 %v2381, 16
        %v2468 = vrot.slane %v2466, 4
        %v2469 = vor.u32 %v2465, %v2468
        %v2470 = vsel %vm2390, %v2460, %v2469
        %v2472 = vshrl.u32 %v2382, 16
        %v2474 = vrot.slane %v2472, 3
        %v2475 = vshll.u32 %v2382, 16
        %v2477 = vrot.slane %v2475, 4
        %v2478 = vor.u32 %v2474, %v2477
        %v2479 = vsel %vm2390, %v2469, %v2478
        %v2481 = vshrl.u32 %v2383, 16
        %v2483 = vrot.slane %v2481, 3
        %v2484 = vshll.u32 %v2383, 16
        %v2486 = vrot.slane %v2484, 4
        %v2487 = vor.u32 %v2483, %v2486
        %v2488 = vsel %vm2390, %v2478, %v2487
        %v2490 = vshrl.u32 %v2384, 16
        %v2492 = vrot.slane %v2490, 3
        %v2493 = vshll.u32 %v2384, 16
        %v2495 = vrot.slane %v2493, 4
        %v2496 = vor.u32 %v2492, %v2495
        %v2497 = vsel %vm2390, %v2487, %v2496
        %v2499 = vshrl.u32 %v2385, 16
        %v2501 = vrot.slane %v2499, 3
        %v2502 = vshll.u32 %v2385, 16
        %v2504 = vrot.slane %v2502, 4
        %v2505 = vor.u32 %v2501, %v2504
        %v2506 = vsel %vm2390, %v2496, %v2505
        %v2508 = vshrl.u32 %v2386, 16
        %v2510 = vrot.slane %v2508, 3
        %v2511 = vshll.u32 %v2386, 16
        %v2513 = vrot.slane %v2511, 4
        %v2514 = vor.u32 %v2510, %v2513
        %v2515 = vsel %vm2390, %v2505, %v2514
        %v2517 = vshrl.u32 %v2387, 16
        %v2519 = vrot.slane %v2517, 3
        %v2520 = vshll.u32 %v2387, 16
        %v2522 = vrot.slane %v2520, 4
        %v2523 = vor.u32 %v2519, %v2522
        %v2524 = vsel %vm2390, %v2514, %v2523
        %v2526 = vshrl.u32 %v2388, 16
        %v2528 = vrot.slane %v2526, 3
        %v2529 = vshll.u32 %v2388, 16
        %v2531 = vrot.slane %v2529, 4
        %v2532 = vor.u32 %v2528, %v2531
        %v2533 = vsel %vm2390, %v2523, %v2532
        %v2535 = vshrl.u32 %v2389, 16
        %v2537 = vrot.slane %v2535, 3
        %v2538 = vshll.u32 %v2389, 16
        %v2540 = vrot.slane %v2538, 4
        %v2541 = vor.u32 %v2537, %v2540
        %v2542 = vsel %vm2390, %v2532, %v2541
        %v2575 = vunpack.c.l.b16 %v2041
        %v2576 = vunpack.c.l.b16 %v2042
        %v2577 = vunpack.c.l.b16 %v2043
        %v2578 = vunpack.c.l.b16 %v2044
        %v2579 = vunpack.c.l.b16 %v2045
        %v2580 = vunpack.c.l.b16 %v2046
        %v2581 = vunpack.c.l.b16 %v2047
        %v2582 = vunpack.c.l.b16 %v2048
        %v2583 = vunpack.c.l.b16 %v2049
        %v2584 = vunpack.c.l.b16 %v2050
        %v2585 = vunpack.c.l.b16 %v2051
        %v2586 = vunpack.c.l.b16 %v2052
        %v2587 = vunpack.c.l.b16 %v2053
        %v2588 = vunpack.c.l.b16 %v2054
        %v2589 = vunpack.c.l.b16 %v2055
        %v2590 = vunpack.c.l.b16 %v2056
        %v2591 = vpack.c.b16 %v2576, %v2575
        %v2592 = vpack.c.b16 %v2578, %v2577
        %v2593 = vpack.c.b16 %v2580, %v2579
        %v2594 = vpack.c.b16 %v2582, %v2581
        %v2595 = vpack.c.b16 %v2584, %v2583
        %v2596 = vpack.c.b16 %v2586, %v2585
        %v2597 = vpack.c.b16 %v2588, %v2587
        %v2598 = vpack.c.b16 %v2590, %v2589
        %2607 = vmatpush.bf16.msra.mxu0 %v2598
        %2608 = vmatpush.bf16.msra.mxu0 %v2597
        %2609 = vmatpush.bf16.msra.mxu0 %v2596
        %2610 = vmatpush.bf16.msra.mxu0 %v2595
        %2611 = vmatpush.bf16.msra.mxu0 %v2594
        %2612 = vmatpush.bf16.msra.mxu0 %v2593
        %2613 = vmatpush.bf16.msra.mxu0 %v2592
        %2614 = vmatpush.bf16.msra.mxu0 %v2591
        %2615 = vmatmul.bf16.gmra.mxu0 %v2407
        %v2616 = vpop.f32.mrf.mxu0
        %v2617 = vadd.f32 %v2228, %v2616
        %v2618 = vpop.f32.mrf.mxu0
        %v2619 = vadd.f32 %v2230, %v2618
        %2620 = vmatmul.bf16.gmra.mxu0 %v2416
        %v2621 = vpop.f32.mrf.mxu0
        %v2622 = vadd.f32 %v2233, %v2621
        %v2623 = vpop.f32.mrf.mxu0
        %v2624 = vadd.f32 %v2235, %v2623
        %2625 = vmatmul.bf16.gmra.mxu0 %v2425
        %v2626 = vpop.f32.mrf.mxu0
        %v2627 = vadd.f32 %v2238, %v2626
        %v2628 = vpop.f32.mrf.mxu0
        %v2629 = vadd.f32 %v2240, %v2628
        %2630 = vmatmul.bf16.gmra.mxu0 %v2434
        %v2631 = vpop.f32.mrf.mxu0
        %v2632 = vadd.f32 %v2243, %v2631
        %v2633 = vpop.f32.mrf.mxu0
        %v2634 = vadd.f32 %v2245, %v2633
        %2635 = vmatmul.bf16.gmra.mxu0 %v2443
        %v2636 = vpop.f32.mrf.mxu0
        %v2637 = vadd.f32 %v2248, %v2636
        %v2638 = vpop.f32.mrf.mxu0
        %v2639 = vadd.f32 %v2250, %v2638
        %2640 = vmatmul.bf16.gmra.mxu0 %v2452
        %v2641 = vpop.f32.mrf.mxu0
        %v2642 = vadd.f32 %v2253, %v2641
        %v2643 = vpop.f32.mrf.mxu0
        %v2644 = vadd.f32 %v2255, %v2643
        %2645 = vmatmul.bf16.gmra.mxu0 %v2461
        %v2646 = vpop.f32.mrf.mxu0
        %v2647 = vadd.f32 %v2258, %v2646
        %v2648 = vpop.f32.mrf.mxu0
        %v2649 = vadd.f32 %v2260, %v2648
        %2650 = vmatmul.bf16.gmra.mxu0 %v2470
        %v2651 = vpop.f32.mrf.mxu0
        %v2652 = vadd.f32 %v2263, %v2651
        %v2653 = vpop.f32.mrf.mxu0
        %v2654 = vadd.f32 %v2265, %v2653
        %2655 = vmatmul.bf16.gmra.mxu0 %v2479
        %v2656 = vpop.f32.mrf.mxu0
        %v2657 = vadd.f32 %v2268, %v2656
        %v2658 = vpop.f32.mrf.mxu0
        %v2659 = vadd.f32 %v2270, %v2658
        %2660 = vmatmul.bf16.gmra.mxu0 %v2488
        %v2661 = vpop.f32.mrf.mxu0
        %v2662 = vadd.f32 %v2273, %v2661
        %v2663 = vpop.f32.mrf.mxu0
        %v2664 = vadd.f32 %v2275, %v2663
        %2665 = vmatmul.bf16.gmra.mxu0 %v2497
        %v2666 = vpop.f32.mrf.mxu0
        %v2667 = vadd.f32 %v2278, %v2666
        %v2668 = vpop.f32.mrf.mxu0
        %v2669 = vadd.f32 %v2280, %v2668
        %2670 = vmatmul.bf16.gmra.mxu0 %v2506
        %v2671 = vpop.f32.mrf.mxu0
        %v2672 = vadd.f32 %v2283, %v2671
        %v2673 = vpop.f32.mrf.mxu0
        %v2674 = vadd.f32 %v2285, %v2673
        %2675 = vmatmul.bf16.gmra.mxu0 %v2515
        %v2676 = vpop.f32.mrf.mxu0
        %v2677 = vadd.f32 %v2288, %v2676
        %v2678 = vpop.f32.mrf.mxu0
        %v2679 = vadd.f32 %v2290, %v2678
        %2680 = vmatmul.bf16.gmra.mxu0 %v2524
        %v2681 = vpop.f32.mrf.mxu0
        %v2682 = vadd.f32 %v2293, %v2681
        %v2683 = vpop.f32.mrf.mxu0
        %v2684 = vadd.f32 %v2295, %v2683
        %2685 = vmatmul.bf16.gmra.mxu0 %v2533
        %v2686 = vpop.f32.mrf.mxu0
        %v2687 = vadd.f32 %v2298, %v2686
        %v2688 = vpop.f32.mrf.mxu0
        %v2689 = vadd.f32 %v2300, %v2688
        %2690 = vmatmul.bf16.gmra.mxu0 %v2542
        %v2691 = vpop.f32.mrf.mxu0
        %v2692 = vadd.f32 %v2303, %v2691
        %v2693 = vpop.f32.mrf.mxu0
        %v2694 = vadd.f32 %v2305, %v2693
        %2695 = vdwg.mxu0
        %v2696 = vld [vmem:[#allocation2 + $0x4] sm:$0xf]
        %v2697 = vld [vmem:[#allocation2 + $0x8] sm:$0xf]
        %v2698 = vld [vmem:[#allocation2 + $0xc] sm:$0xf]
        %v2699 = vld [vmem:[#allocation2 + $0x10] sm:$0xf]
        %v2700 = vld [vmem:[#allocation2 + $0x14] sm:$0xf]
        %v2701 = vld [vmem:[#allocation2 + $0x18] sm:$0xf]
        %v2702 = vld [vmem:[#allocation2 + $0x1c] sm:$0xf]
        %v2703 = vld [vmem:[#allocation2 + $0x20] sm:$0xf]
        %v2704 = vld [vmem:[#allocation2 + $0x24] sm:$0xf]
        %v2705 = vld [vmem:[#allocation2 + $0x28] sm:$0xf]
        %v2706 = vld [vmem:[#allocation2 + $0x2c] sm:$0xf]
        %v2707 = vld [vmem:[#allocation2 + $0x30] sm:$0xf]
        %v2708 = vld [vmem:[#allocation2 + $0x34] sm:$0xf]
        %v2709 = vld [vmem:[#allocation2 + $0x38] sm:$0xf]
        %v2710 = vld [vmem:[#allocation2 + $0x3c] sm:$0xf]
        %v2711 = vld [vmem:[#allocation2 + $0x40] sm:$0xf]
        %v2712 = vld [vmem:[#allocation2 + $0x44] sm:$0xf]
        %v2713 = vld [vmem:[#allocation2 + $0x48] sm:$0xf]
        %v2714 = vld [vmem:[#allocation2 + $0x4c] sm:$0xf]
        %v2715 = vld [vmem:[#allocation2 + $0x50] sm:$0xf]
        %v2716 = vld [vmem:[#allocation2 + $0x54] sm:$0xf]
        %v2717 = vld [vmem:[#allocation2 + $0x58] sm:$0xf]
        %v2718 = vld [vmem:[#allocation2 + $0x5c] sm:$0xf]
        %v2719 = vld [vmem:[#allocation2 + $0x60] sm:$0xf]
        %v2720 = vld [vmem:[#allocation2 + $0x64] sm:$0xf]
        %v2721 = vld [vmem:[#allocation2 + $0x68] sm:$0xf]
        %v2722 = vld [vmem:[#allocation2 + $0x6c] sm:$0xf]
        %v2723 = vld [vmem:[#allocation2 + $0x70] sm:$0xf]
        %v2724 = vld [vmem:[#allocation2 + $0x74] sm:$0xf]
        %v2725 = vld [vmem:[#allocation2 + $0x78] sm:$0xf]
        %v2726 = vld [vmem:[#allocation2 + $0x7c] sm:$0xf]
        %v2727 = vld [vmem:[#allocation2 + $0x80] sm:$0xf]
        %v2728 = vld [vmem:[#allocation2 + $0x84] sm:$0x1]
        %v2729 = vsel %vm1262, 1, 0
        %v2730 = vsel %vm1263, 1, 0
        %v2731 = vsel %vm1264, 1, 0
        %v2732 = vsel %vm1265, 1, 0
        %v2733 = vsel %vm1266, 1, 0
        %v2734 = vsel %vm1267, 1, 0
        %v2735 = vsel %vm1268, 1, 0
        %v2736 = vsel %vm1269, 1, 0
        %v2737 = vsel %vm1270, 1, 0
        %v2738 = vsel %vm1271, 1, 0
        %v2739 = vsel %vm1272, 1, 0
        %v2740 = vsel %vm1273, 1, 0
        %v2741 = vsel %vm1274, 1, 0
        %v2742 = vsel %vm1275, 1, 0
        %v2743 = vsel %vm1276, 1, 0
        %v2744 = vsel %vm1277, 1, 0
        %v2745 = vsel %vm1278, 1, 0
        %v2746 = vsel %vm1279, 1, 0
        %v2747 = vsel %vm1280, 1, 0
        %v2748 = vsel %vm1281, 1, 0
        %v2749 = vsel %vm1282, 1, 0
        %v2750 = vsel %vm1283, 1, 0
        %v2751 = vsel %vm1284, 1, 0
        %v2752 = vsel %vm1285, 1, 0
        %v2753 = vsel %vm1286, 1, 0
        %v2754 = vsel %vm1287, 1, 0
        %v2755 = vsel %vm1288, 1, 0
        %v2756 = vsel %vm1289, 1, 0
        %v2757 = vsel %vm1290, 1, 0
        %v2758 = vsel %vm1291, 1, 0
        %v2759 = vsel %vm1292, 1, 0
        %v2760 = vsel %vm1293, 1, 0
        %vm2761 = vcmp.eq.s32.totalorder %v2729, 1
        %vm2762 = vcmp.eq.s32.totalorder %v2730, 1
        %vm2763 = vcmp.eq.s32.totalorder %v2731, 1
        %vm2764 = vcmp.eq.s32.totalorder %v2732, 1
        %vm2765 = vcmp.eq.s32.totalorder %v2733, 1
        %vm2766 = vcmp.eq.s32.totalorder %v2734, 1
        %vm2767 = vcmp.eq.s32.totalorder %v2735, 1
        %vm2768 = vcmp.eq.s32.totalorder %v2736, 1
        %vm2769 = vcmp.eq.s32.totalorder %v2737, 1
        %vm2770 = vcmp.eq.s32.totalorder %v2738, 1
        %vm2771 = vcmp.eq.s32.totalorder %v2739, 1
        %vm2772 = vcmp.eq.s32.totalorder %v2740, 1
        %vm2773 = vcmp.eq.s32.totalorder %v2741, 1
        %vm2774 = vcmp.eq.s32.totalorder %v2742, 1
        %vm2775 = vcmp.eq.s32.totalorder %v2743, 1
        %vm2776 = vcmp.eq.s32.totalorder %v2744, 1
        %vm2777 = vcmp.eq.s32.totalorder %v2745, 1
        %vm2778 = vcmp.eq.s32.totalorder %v2746, 1
        %vm2779 = vcmp.eq.s32.totalorder %v2747, 1
        %vm2780 = vcmp.eq.s32.totalorder %v2748, 1
        %vm2781 = vcmp.eq.s32.totalorder %v2749, 1
        %vm2782 = vcmp.eq.s32.totalorder %v2750, 1
        %vm2783 = vcmp.eq.s32.totalorder %v2751, 1
        %vm2784 = vcmp.eq.s32.totalorder %v2752, 1
        %vm2785 = vcmp.eq.s32.totalorder %v2753, 1
        %vm2786 = vcmp.eq.s32.totalorder %v2754, 1
        %vm2787 = vcmp.eq.s32.totalorder %v2755, 1
        %vm2788 = vcmp.eq.s32.totalorder %v2756, 1
        %vm2789 = vcmp.eq.s32.totalorder %v2757, 1
        %vm2790 = vcmp.eq.s32.totalorder %v2758, 1
        %vm2791 = vcmp.eq.s32.totalorder %v2759, 1
        %vm2792 = vcmp.eq.s32.totalorder %v2760, 1
        %vm2793 = vmpackc.low %vm2761, %vm2761
        %vm2794 = vmpackc.low %vm2762, %vm2762
        %vm2795 = vmpackc.low %vm2763, %vm2763
        %vm2796 = vmpackc.low %vm2764, %vm2764
        %vm2797 = vmpackc.low %vm2765, %vm2765
        %vm2798 = vmpackc.low %vm2766, %vm2766
        %vm2799 = vmpackc.low %vm2767, %vm2767
        %vm2800 = vmpackc.low %vm2768, %vm2768
        %vm2801 = vmpackc.low %vm2769, %vm2769
        %vm2802 = vmpackc.low %vm2770, %vm2770
        %vm2803 = vmpackc.low %vm2771, %vm2771
        %vm2804 = vmpackc.low %vm2772, %vm2772
        %vm2805 = vmpackc.low %vm2773, %vm2773
        %vm2806 = vmpackc.low %vm2774, %vm2774
        %vm2807 = vmpackc.low %vm2775, %vm2775
        %vm2808 = vmpackc.low %vm2776, %vm2776
        %vm2809 = vmpackc.low %vm2777, %vm2777
        %vm2810 = vmpackc.low %vm2778, %vm2778
        %vm2811 = vmpackc.low %vm2779, %vm2779
        %vm2812 = vmpackc.low %vm2780, %vm2780
        %vm2813 = vmpackc.low %vm2781, %vm2781
        %vm2814 = vmpackc.low %vm2782, %vm2782
        %vm2815 = vmpackc.low %vm2783, %vm2783
        %vm2816 = vmpackc.low %vm2784, %vm2784
        %vm2817 = vmpackc.low %vm2785, %vm2785
        %vm2818 = vmpackc.low %vm2786, %vm2786
        %vm2819 = vmpackc.low %vm2787, %vm2787
        %vm2820 = vmpackc.low %vm2788, %vm2788
        %vm2821 = vmpackc.low %vm2789, %vm2789
        %vm2822 = vmpackc.low %vm2790, %vm2790
        %vm2823 = vmpackc.low %vm2791, %vm2791
        %vm2824 = vmpackc.low %vm2792, %vm2792
        %v2825 = vsel %vm2793, 65537, 0
        %v2826 = vsel %vm2794, 65537, 0
        %v2827 = vsel %vm2795, 65537, 0
        %v2828 = vsel %vm2796, 65537, 0
        %v2829 = vsel %vm2797, 65537, 0
        %v2830 = vsel %vm2798, 65537, 0
        %v2831 = vsel %vm2799, 65537, 0
        %v2832 = vsel %vm2800, 65537, 0
        %v2833 = vsel %vm2801, 65537, 0
        %v2834 = vsel %vm2802, 65537, 0
        %v2835 = vsel %vm2803, 65537, 0
        %v2836 = vsel %vm2804, 65537, 0
        %v2837 = vsel %vm2805, 65537, 0
        %v2838 = vsel %vm2806, 65537, 0
        %v2839 = vsel %vm2807, 65537, 0
        %v2840 = vsel %vm2808, 65537, 0
        %v2841 = vsel %vm2809, 65537, 0
        %v2842 = vsel %vm2810, 65537, 0
        %v2843 = vsel %vm2811, 65537, 0
        %v2844 = vsel %vm2812, 65537, 0
        %v2845 = vsel %vm2813, 65537, 0
        %v2846 = vsel %vm2814, 65537, 0
        %v2847 = vsel %vm2815, 65537, 0
        %v2848 = vsel %vm2816, 65537, 0
        %v2849 = vsel %vm2817, 65537, 0
        %v2850 = vsel %vm2818, 65537, 0
        %v2851 = vsel %vm2819, 65537, 0
        %v2852 = vsel %vm2820, 65537, 0
        %v2853 = vsel %vm2821, 65537, 0
        %v2854 = vsel %vm2822, 65537, 0
        %v2855 = vsel %vm2823, 65537, 0
        %v2856 = vsel %vm2824, 65537, 0
        %vm2857 = vsmask.f32 256
        %vm2858 = vsmask.f32 4368
        %vm2859 = vmor %vm2857, %vm2858
        %v2861 = vshrl.u32 %v2825, 16
        %v2863 = vrot.slane %v2861, 7
        %v2864 = vshll.u32 %v2825, 16
        %v2866 = vor.u32 %v2863, %v2864
        %v2867 = vrot.slane %v2863, 4
        %v2869 = vshrl.u32 %v2826, 16
        %v2871 = vrot.slane %v2869, 7
        %v2872 = vshll.u32 %v2826, 16
        %v2874 = vor.u32 %v2871, %v2872
        %v2875 = vsel %vm2859, %v2867, %v2874
        %v2876 = vrot.slane %v2871, 4
        %v2878 = vshrl.u32 %v2827, 16
        %v2880 = vrot.slane %v2878, 7
        %v2881 = vshll.u32 %v2827, 16
        %v2883 = vor.u32 %v2880, %v2881
        %v2884 = vsel %vm2859, %v2876, %v2883
        %v2885 = vrot.slane %v2880, 4
        %v2887 = vshrl.u32 %v2828, 16
        %v2889 = vrot.slane %v2887, 7
        %v2890 = vshll.u32 %v2828, 16
        %v2892 = vor.u32 %v2889, %v2890
        %v2893 = vsel %vm2859, %v2885, %v2892
        %v2894 = vrot.slane %v2889, 4
        %v2896 = vshrl.u32 %v2829, 16
        %v2898 = vrot.slane %v2896, 7
        %v2899 = vshll.u32 %v2829, 16
        %v2901 = vor.u32 %v2898, %v2899
        %v2902 = vsel %vm2859, %v2894, %v2901
        %v2903 = vrot.slane %v2898, 4
        %v2905 = vshrl.u32 %v2830, 16
        %v2907 = vrot.slane %v2905, 7
        %v2908 = vshll.u32 %v2830, 16
        %v2910 = vor.u32 %v2907, %v2908
        %v2911 = vsel %vm2859, %v2903, %v2910
        %v2912 = vrot.slane %v2907, 4
        %v2914 = vshrl.u32 %v2831, 16
        %v2916 = vrot.slane %v2914, 7
        %v2917 = vshll.u32 %v2831, 16
        %v2919 = vor.u32 %v2916, %v2917
        %v2920 = vsel %vm2859, %v2912, %v2919
        %v2921 = vrot.slane %v2916, 4
        %v2923 = vshrl.u32 %v2832, 16
        %v2925 = vrot.slane %v2923, 7
        %v2926 = vshll.u32 %v2832, 16
        %v2928 = vor.u32 %v2925, %v2926
        %v2929 = vsel %vm2859, %v2921, %v2928
        %v2930 = vrot.slane %v2925, 4
        %v2932 = vshrl.u32 %v2833, 16
        %v2934 = vrot.slane %v2932, 7
        %v2935 = vshll.u32 %v2833, 16
        %v2937 = vor.u32 %v2934, %v2935
        %v2938 = vsel %vm2859, %v2930, %v2937
        %v2939 = vrot.slane %v2934, 4
        %v2941 = vshrl.u32 %v2834, 16
        %v2943 = vrot.slane %v2941, 7
        %v2944 = vshll.u32 %v2834, 16
        %v2946 = vor.u32 %v2943, %v2944
        %v2947 = vsel %vm2859, %v2939, %v2946
        %v2948 = vrot.slane %v2943, 4
        %v2950 = vshrl.u32 %v2835, 16
        %v2952 = vrot.slane %v2950, 7
        %v2953 = vshll.u32 %v2835, 16
        %v2955 = vor.u32 %v2952, %v2953
        %v2956 = vsel %vm2859, %v2948, %v2955
        %v2957 = vrot.slane %v2952, 4
        %v2959 = vshrl.u32 %v2836, 16
        %v2961 = vrot.slane %v2959, 7
        %v2962 = vshll.u32 %v2836, 16
        %v2964 = vor.u32 %v2961, %v2962
        %v2965 = vsel %vm2859, %v2957, %v2964
        %v2966 = vrot.slane %v2961, 4
        %v2968 = vshrl.u32 %v2837, 16
        %v2970 = vrot.slane %v2968, 7
        %v2971 = vshll.u32 %v2837, 16
        %v2973 = vor.u32 %v2970, %v2971
        %v2974 = vsel %vm2859, %v2966, %v2973
        %v2975 = vrot.slane %v2970, 4
        %v2977 = vshrl.u32 %v2838, 16
        %v2979 = vrot.slane %v2977, 7
        %v2980 = vshll.u32 %v2838, 16
        %v2982 = vor.u32 %v2979, %v2980
        %v2983 = vsel %vm2859, %v2975, %v2982
        %v2984 = vrot.slane %v2979, 4
        %v2986 = vshrl.u32 %v2839, 16
        %v2988 = vrot.slane %v2986, 7
        %v2989 = vshll.u32 %v2839, 16
        %v2991 = vor.u32 %v2988, %v2989
        %v2992 = vsel %vm2859, %v2984, %v2991
        %v2993 = vrot.slane %v2988, 4
        %v2995 = vshrl.u32 %v2840, 16
        %v2997 = vrot.slane %v2995, 7
        %v2998 = vshll.u32 %v2840, 16
        %v3000 = vor.u32 %v2997, %v2998
        %v3001 = vsel %vm2859, %v2993, %v3000
        %v3002 = vrot.slane %v2997, 4
        %v3004 = vshrl.u32 %v2841, 16
        %v3006 = vrot.slane %v3004, 7
        %v3007 = vshll.u32 %v2841, 16
        %v3009 = vor.u32 %v3006, %v3007
        %v3010 = vsel %vm2859, %v3002, %v3009
        %v3011 = vrot.slane %v3006, 4
        %v3013 = vshrl.u32 %v2842, 16
        %v3015 = vrot.slane %v3013, 7
        %v3016 = vshll.u32 %v2842, 16
        %v3018 = vor.u32 %v3015, %v3016
        %v3019 = vsel %vm2859, %v3011, %v3018
        %v3020 = vrot.slane %v3015, 4
        %v3022 = vshrl.u32 %v2843, 16
        %v3024 = vrot.slane %v3022, 7
        %v3025 = vshll.u32 %v2843, 16
        %v3027 = vor.u32 %v3024, %v3025
        %v3028 = vsel %vm2859, %v3020, %v3027
        %v3029 = vrot.slane %v3024, 4
        %v3031 = vshrl.u32 %v2844, 16
        %v3033 = vrot.slane %v3031, 7
        %v3034 = vshll.u32 %v2844, 16
        %v3036 = vor.u32 %v3033, %v3034
        %v3037 = vsel %vm2859, %v3029, %v3036
        %v3038 = vrot.slane %v3033, 4
        %v3040 = vshrl.u32 %v2845, 16
        %v3042 = vrot.slane %v3040, 7
        %v3043 = vshll.u32 %v2845, 16
        %v3045 = vor.u32 %v3042, %v3043
        %v3046 = vsel %vm2859, %v3038, %v3045
        %v3047 = vrot.slane %v3042, 4
        %v3049 = vshrl.u32 %v2846, 16
        %v3051 = vrot.slane %v3049, 7
        %v3052 = vshll.u32 %v2846, 16
        %v3054 = vor.u32 %v3051, %v3052
        %v3055 = vsel %vm2859, %v3047, %v3054
        %v3056 = vrot.slane %v3051, 4
        %v3058 = vshrl.u32 %v2847, 16
        %v3060 = vrot.slane %v3058, 7
        %v3061 = vshll.u32 %v2847, 16
        %v3063 = vor.u32 %v3060, %v3061
        %v3064 = vsel %vm2859, %v3056, %v3063
        %v3065 = vrot.slane %v3060, 4
        %v3067 = vshrl.u32 %v2848, 16
        %v3069 = vrot.slane %v3067, 7
        %v3070 = vshll.u32 %v2848, 16
        %v3072 = vor.u32 %v3069, %v3070
        %v3073 = vsel %vm2859, %v3065, %v3072
        %v3074 = vrot.slane %v3069, 4
        %v3076 = vshrl.u32 %v2849, 16
        %v3078 = vrot.slane %v3076, 7
        %v3079 = vshll.u32 %v2849, 16
        %v3081 = vor.u32 %v3078, %v3079
        %v3082 = vsel %vm2859, %v3074, %v3081
        %v3083 = vrot.slane %v3078, 4
        %v3085 = vshrl.u32 %v2850, 16
        %v3087 = vrot.slane %v3085, 7
        %v3088 = vshll.u32 %v2850, 16
        %v3090 = vor.u32 %v3087, %v3088
        %v3091 = vsel %vm2859, %v3083, %v3090
        %v3092 = vrot.slane %v3087, 4
        %v3094 = vshrl.u32 %v2851, 16
        %v3096 = vrot.slane %v3094, 7
        %v3097 = vshll.u32 %v2851, 16
        %v3099 = vor.u32 %v3096, %v3097
        %v3100 = vsel %vm2859, %v3092, %v3099
        %v3101 = vrot.slane %v3096, 4
        %v3103 = vshrl.u32 %v2852, 16
        %v3105 = vrot.slane %v3103, 7
        %v3106 = vshll.u32 %v2852, 16
        %v3108 = vor.u32 %v3105, %v3106
        %v3109 = vsel %vm2859, %v3101, %v3108
        %v3110 = vrot.slane %v3105, 4
        %v3112 = vshrl.u32 %v2853, 16
        %v3114 = vrot.slane %v3112, 7
        %v3115 = vshll.u32 %v2853, 16
        %v3117 = vor.u32 %v3114, %v3115
        %v3118 = vsel %vm2859, %v3110, %v3117
        %v3119 = vrot.slane %v3114, 4
        %v3121 = vshrl.u32 %v2854, 16
        %v3123 = vrot.slane %v3121, 7
        %v3124 = vshll.u32 %v2854, 16
        %v3126 = vor.u32 %v3123, %v3124
        %v3127 = vsel %vm2859, %v3119, %v3126
        %v3128 = vrot.slane %v3123, 4
        %v3130 = vshrl.u32 %v2855, 16
        %v3132 = vrot.slane %v3130, 7
        %v3133 = vshll.u32 %v2855, 16
        %v3135 = vor.u32 %v3132, %v3133
        %v3136 = vsel %vm2859, %v3128, %v3135
        %v3137 = vrot.slane %v3132, 4
        %v3139 = vshrl.u32 %v2856, 16
        %v3141 = vrot.slane %v3139, 7
        %v3142 = vshll.u32 %v2856, 16
        %v3144 = vor.u32 %v3141, %v3142
        %v3145 = vsel %vm2859, %v3137, %v3144
        %v3146 = vrot.slane %v3141, 4
        %v3147 = vunpack.c.l.b16 %v2866
        %v3148 = vunpack.c.h.b16 %v2866
        %v3149 = vunpack.c.l.b16 0
        %v3150 = vunpack.c.h.b16 0
        %vm3151 = vcmp.ne.s32.totalorder %v3147, %v3149
        %vm3152 = vcmp.ne.s32.totalorder %v3148, %v3150
        %vm3153 = vmpackc.low %vm3152, %vm3151
        %v3154 = vunpack.c.l.b16 %v2875
        %v3155 = vunpack.c.h.b16 %v2875
        %v3156 = vunpack.c.l.b16 0
        %v3157 = vunpack.c.h.b16 0
        %vm3158 = vcmp.ne.s32.totalorder %v3154, %v3156
        %vm3159 = vcmp.ne.s32.totalorder %v3155, %v3157
        %vm3160 = vmpackc.low %vm3159, %vm3158
        %v3161 = vunpack.c.l.b16 %v2884
        %v3162 = vunpack.c.h.b16 %v2884
        %v3163 = vunpack.c.l.b16 0
        %v3164 = vunpack.c.h.b16 0
        %vm3165 = vcmp.ne.s32.totalorder %v3161, %v3163
        %vm3166 = vcmp.ne.s32.totalorder %v3162, %v3164
        %vm3167 = vmpackc.low %vm3166, %vm3165
        %v3168 = vunpack.c.l.b16 %v2893
        %v3169 = vunpack.c.h.b16 %v2893
        %v3170 = vunpack.c.l.b16 0
        %v3171 = vunpack.c.h.b16 0
        %vm3172 = vcmp.ne.s32.totalorder %v3168, %v3170
        %vm3173 = vcmp.ne.s32.totalorder %v3169, %v3171
        %vm3174 = vmpackc.low %vm3173, %vm3172
        %v3175 = vunpack.c.l.b16 %v2902
        %v3176 = vunpack.c.h.b16 %v2902
        %v3177 = vunpack.c.l.b16 0
        %v3178 = vunpack.c.h.b16 0
        %vm3179 = vcmp.ne.s32.totalorder %v3175, %v3177
        %vm3180 = vcmp.ne.s32.totalorder %v3176, %v3178
        %vm3181 = vmpackc.low %vm3180, %vm3179
        %v3182 = vunpack.c.l.b16 %v2911
        %v3183 = vunpack.c.h.b16 %v2911
        %v3184 = vunpack.c.l.b16 0
        %v3185 = vunpack.c.h.b16 0
        %vm3186 = vcmp.ne.s32.totalorder %v3182, %v3184
        %vm3187 = vcmp.ne.s32.totalorder %v3183, %v3185
        %vm3188 = vmpackc.low %vm3187, %vm3186
        %v3189 = vunpack.c.l.b16 %v2920
        %v3190 = vunpack.c.h.b16 %v2920
        %v3191 = vunpack.c.l.b16 0
        %v3192 = vunpack.c.h.b16 0
        %vm3193 = vcmp.ne.s32.totalorder %v3189, %v3191
        %vm3194 = vcmp.ne.s32.totalorder %v3190, %v3192
        %vm3195 = vmpackc.low %vm3194, %vm3193
        %v3196 = vunpack.c.l.b16 %v2929
        %v3197 = vunpack.c.h.b16 %v2929
        %v3198 = vunpack.c.l.b16 0
        %v3199 = vunpack.c.h.b16 0
        %vm3200 = vcmp.ne.s32.totalorder %v3196, %v3198
        %vm3201 = vcmp.ne.s32.totalorder %v3197, %v3199
        %vm3202 = vmpackc.low %vm3201, %vm3200
        %v3203 = vunpack.c.l.b16 %v2938
        %v3204 = vunpack.c.h.b16 %v2938
        %v3205 = vunpack.c.l.b16 0
        %v3206 = vunpack.c.h.b16 0
        %vm3207 = vcmp.ne.s32.totalorder %v3203, %v3205
        %vm3208 = vcmp.ne.s32.totalorder %v3204, %v3206
        %vm3209 = vmpackc.low %vm3208, %vm3207
        %v3210 = vunpack.c.l.b16 %v2947
        %v3211 = vunpack.c.h.b16 %v2947
        %v3212 = vunpack.c.l.b16 0
        %v3213 = vunpack.c.h.b16 0
        %vm3214 = vcmp.ne.s32.totalorder %v3210, %v3212
        %vm3215 = vcmp.ne.s32.totalorder %v3211, %v3213
        %vm3216 = vmpackc.low %vm3215, %vm3214
        %v3217 = vunpack.c.l.b16 %v2956
        %v3218 = vunpack.c.h.b16 %v2956
        %v3219 = vunpack.c.l.b16 0
        %v3220 = vunpack.c.h.b16 0
        %vm3221 = vcmp.ne.s32.totalorder %v3217, %v3219
        %vm3222 = vcmp.ne.s32.totalorder %v3218, %v3220
        %vm3223 = vmpackc.low %vm3222, %vm3221
        %v3224 = vunpack.c.l.b16 %v2965
        %v3225 = vunpack.c.h.b16 %v2965
        %v3226 = vunpack.c.l.b16 0
        %v3227 = vunpack.c.h.b16 0
        %vm3228 = vcmp.ne.s32.totalorder %v3224, %v3226
        %vm3229 = vcmp.ne.s32.totalorder %v3225, %v3227
        %vm3230 = vmpackc.low %vm3229, %vm3228
        %v3231 = vunpack.c.l.b16 %v2974
        %v3232 = vunpack.c.h.b16 %v2974
        %v3233 = vunpack.c.l.b16 0
        %v3234 = vunpack.c.h.b16 0
        %vm3235 = vcmp.ne.s32.totalorder %v3231, %v3233
        %vm3236 = vcmp.ne.s32.totalorder %v3232, %v3234
        %vm3237 = vmpackc.low %vm3236, %vm3235
        %v3238 = vunpack.c.l.b16 %v2983
        %v3239 = vunpack.c.h.b16 %v2983
        %v3240 = vunpack.c.l.b16 0
        %v3241 = vunpack.c.h.b16 0
        %vm3242 = vcmp.ne.s32.totalorder %v3238, %v3240
        %vm3243 = vcmp.ne.s32.totalorder %v3239, %v3241
        %vm3244 = vmpackc.low %vm3243, %vm3242
        %v3245 = vunpack.c.l.b16 %v2992
        %v3246 = vunpack.c.h.b16 %v2992
        %v3247 = vunpack.c.l.b16 0
        %v3248 = vunpack.c.h.b16 0
        %vm3249 = vcmp.ne.s32.totalorder %v3245, %v3247
        %vm3250 = vcmp.ne.s32.totalorder %v3246, %v3248
        %vm3251 = vmpackc.low %vm3250, %vm3249
        %v3252 = vunpack.c.l.b16 %v3001
        %v3253 = vunpack.c.h.b16 %v3001
        %v3254 = vunpack.c.l.b16 0
        %v3255 = vunpack.c.h.b16 0
        %vm3256 = vcmp.ne.s32.totalorder %v3252, %v3254
        %vm3257 = vcmp.ne.s32.totalorder %v3253, %v3255
        %vm3258 = vmpackc.low %vm3257, %vm3256
        %v3259 = vunpack.c.l.b16 %v3010
        %v3260 = vunpack.c.h.b16 %v3010
        %v3261 = vunpack.c.l.b16 0
        %v3262 = vunpack.c.h.b16 0
        %vm3263 = vcmp.ne.s32.totalorder %v3259, %v3261
        %vm3264 = vcmp.ne.s32.totalorder %v3260, %v3262
        %vm3265 = vmpackc.low %vm3264, %vm3263
        %v3266 = vunpack.c.l.b16 %v3019
        %v3267 = vunpack.c.h.b16 %v3019
        %v3268 = vunpack.c.l.b16 0
        %v3269 = vunpack.c.h.b16 0
        %vm3270 = vcmp.ne.s32.totalorder %v3266, %v3268
        %vm3271 = vcmp.ne.s32.totalorder %v3267, %v3269
        %vm3272 = vmpackc.low %vm3271, %vm3270
        %v3273 = vunpack.c.l.b16 %v3028
        %v3274 = vunpack.c.h.b16 %v3028
        %v3275 = vunpack.c.l.b16 0
        %v3276 = vunpack.c.h.b16 0
        %vm3277 = vcmp.ne.s32.totalorder %v3273, %v3275
        %vm3278 = vcmp.ne.s32.totalorder %v3274, %v3276
        %vm3279 = vmpackc.low %vm3278, %vm3277
        %v3280 = vunpack.c.l.b16 %v3037
        %v3281 = vunpack.c.h.b16 %v3037
        %v3282 = vunpack.c.l.b16 0
        %v3283 = vunpack.c.h.b16 0
        %vm3284 = vcmp.ne.s32.totalorder %v3280, %v3282
        %vm3285 = vcmp.ne.s32.totalorder %v3281, %v3283
        %vm3286 = vmpackc.low %vm3285, %vm3284
        %v3287 = vunpack.c.l.b16 %v3046
        %v3288 = vunpack.c.h.b16 %v3046
        %v3289 = vunpack.c.l.b16 0
        %v3290 = vunpack.c.h.b16 0
        %vm3291 = vcmp.ne.s32.totalorder %v3287, %v3289
        %vm3292 = vcmp.ne.s32.totalorder %v3288, %v3290
        %vm3293 = vmpackc.low %vm3292, %vm3291
        %v3294 = vunpack.c.l.b16 %v3055
        %v3295 = vunpack.c.h.b16 %v3055
        %v3296 = vunpack.c.l.b16 0
        %v3297 = vunpack.c.h.b16 0
        %vm3298 = vcmp.ne.s32.totalorder %v3294, %v3296
        %vm3299 = vcmp.ne.s32.totalorder %v3295, %v3297
        %vm3300 = vmpackc.low %vm3299, %vm3298
        %v3301 = vunpack.c.l.b16 %v3064
        %v3302 = vunpack.c.h.b16 %v3064
        %v3303 = vunpack.c.l.b16 0
        %v3304 = vunpack.c.h.b16 0
        %vm3305 = vcmp.ne.s32.totalorder %v3301, %v3303
        %vm3306 = vcmp.ne.s32.totalorder %v3302, %v3304
        %vm3307 = vmpackc.low %vm3306, %vm3305
        %v3308 = vunpack.c.l.b16 %v3073
        %v3309 = vunpack.c.h.b16 %v3073
        %v3310 = vunpack.c.l.b16 0
        %v3311 = vunpack.c.h.b16 0
        %vm3312 = vcmp.ne.s32.totalorder %v3308, %v3310
        %vm3313 = vcmp.ne.s32.totalorder %v3309, %v3311
        %vm3314 = vmpackc.low %vm3313, %vm3312
        %v3315 = vunpack.c.l.b16 %v3082
        %v3316 = vunpack.c.h.b16 %v3082
        %v3317 = vunpack.c.l.b16 0
        %v3318 = vunpack.c.h.b16 0
        %vm3319 = vcmp.ne.s32.totalorder %v3315, %v3317
        %vm3320 = vcmp.ne.s32.totalorder %v3316, %v3318
        %vm3321 = vmpackc.low %vm3320, %vm3319
        %v3322 = vunpack.c.l.b16 %v3091
        %v3323 = vunpack.c.h.b16 %v3091
        %v3324 = vunpack.c.l.b16 0
        %v3325 = vunpack.c.h.b16 0
        %vm3326 = vcmp.ne.s32.totalorder %v3322, %v3324
        %vm3327 = vcmp.ne.s32.totalorder %v3323, %v3325
        %vm3328 = vmpackc.low %vm3327, %vm3326
        %v3329 = vunpack.c.l.b16 %v3100
        %v3330 = vunpack.c.h.b16 %v3100
        %v3331 = vunpack.c.l.b16 0
        %v3332 = vunpack.c.h.b16 0
        %vm3333 = vcmp.ne.s32.totalorder %v3329, %v3331
        %vm3334 = vcmp.ne.s32.totalorder %v3330, %v3332
        %vm3335 = vmpackc.low %vm3334, %vm3333
        %v3336 = vunpack.c.l.b16 %v3109
        %v3337 = vunpack.c.h.b16 %v3109
        %v3338 = vunpack.c.l.b16 0
        %v3339 = vunpack.c.h.b16 0
        %vm3340 = vcmp.ne.s32.totalorder %v3336, %v3338
        %vm3341 = vcmp.ne.s32.totalorder %v3337, %v3339
        %vm3342 = vmpackc.low %vm3341, %vm3340
        %v3343 = vunpack.c.l.b16 %v3118
        %v3344 = vunpack.c.h.b16 %v3118
        %v3345 = vunpack.c.l.b16 0
        %v3346 = vunpack.c.h.b16 0
        %vm3347 = vcmp.ne.s32.totalorder %v3343, %v3345
        %vm3348 = vcmp.ne.s32.totalorder %v3344, %v3346
        %vm3349 = vmpackc.low %vm3348, %vm3347
        %v3350 = vunpack.c.l.b16 %v3127
        %v3351 = vunpack.c.h.b16 %v3127
        %v3352 = vunpack.c.l.b16 0
        %v3353 = vunpack.c.h.b16 0
        %vm3354 = vcmp.ne.s32.totalorder %v3350, %v3352
        %vm3355 = vcmp.ne.s32.totalorder %v3351, %v3353
        %vm3356 = vmpackc.low %vm3355, %vm3354
        %v3357 = vunpack.c.l.b16 %v3136
        %v3358 = vunpack.c.h.b16 %v3136
        %v3359 = vunpack.c.l.b16 0
        %v3360 = vunpack.c.h.b16 0
        %vm3361 = vcmp.ne.s32.totalorder %v3357, %v3359
        %vm3362 = vcmp.ne.s32.totalorder %v3358, %v3360
        %vm3363 = vmpackc.low %vm3362, %vm3361
        %v3364 = vunpack.c.l.b16 %v3145
        %v3365 = vunpack.c.h.b16 %v3145
        %v3366 = vunpack.c.l.b16 0
        %v3367 = vunpack.c.h.b16 0
        %vm3368 = vcmp.ne.s32.totalorder %v3364, %v3366
        %vm3369 = vcmp.ne.s32.totalorder %v3365, %v3367
        %vm3370 = vmpackc.low %vm3369, %vm3368
        %v3371 = vunpack.c.l.b16 %v3146
        %v3372 = vunpack.c.h.b16 %v3146
        %v3373 = vunpack.c.l.b16 0
        %v3374 = vunpack.c.h.b16 0
        %vm3375 = vcmp.ne.s32.totalorder %v3371, %v3373
        %vm3376 = vcmp.ne.s32.totalorder %v3372, %v3374
        %vm3377 = vmpackc.low %vm3376, %vm3375
        %v3378 = vsel %vm3153, %v2696, 0
        %v3379 = vsel %vm3160, %v2697, 0
        %v3380 = vsel %vm3167, %v2698, 0
        %v3381 = vsel %vm3174, %v2699, 0
        %v3382 = vsel %vm3181, %v2700, 0
        %v3383 = vsel %vm3188, %v2701, 0
        %v3384 = vsel %vm3195, %v2702, 0
        %v3385 = vsel %vm3202, %v2703, 0
        %v3386 = vsel %vm3209, %v2704, 0
        %v3387 = vsel %vm3216, %v2705, 0
        %v3388 = vsel %vm3223, %v2706, 0
        %v3389 = vsel %vm3230, %v2707, 0
        %v3390 = vsel %vm3237, %v2708, 0
        %v3391 = vsel %vm3244, %v2709, 0
        %v3392 = vsel %vm3251, %v2710, 0
        %v3393 = vsel %vm3258, %v2711, 0
        %v3394 = vsel %vm3265, %v2712, 0
        %v3395 = vsel %vm3272, %v2713, 0
        %v3396 = vsel %vm3279, %v2714, 0
        %v3397 = vsel %vm3286, %v2715, 0
        %v3398 = vsel %vm3293, %v2716, 0
        %v3399 = vsel %vm3300, %v2717, 0
        %v3400 = vsel %vm3307, %v2718, 0
        %v3401 = vsel %vm3314, %v2719, 0
        %v3402 = vsel %vm3321, %v2720, 0
        %v3403 = vsel %vm3328, %v2721, 0
        %v3404 = vsel %vm3335, %v2722, 0
        %v3405 = vsel %vm3342, %v2723, 0
        %v3406 = vsel %vm3349, %v2724, 0
        %v3407 = vsel %vm3356, %v2725, 0
        %v3408 = vsel %vm3363, %v2726, 0
        %v3409 = vsel %vm3370, %v2727, 0
        %v3410 = vsel %vm3377, %v2728, 0
        %s3411 = scalar_lea.vmem [#allocation9], 128
        %v3412 = vld [vmem:[%s3411] sm:$0xf]
        %v3413 = vld [vmem:[%s3411 + $0x4] sm:$0xf]
        %v3414 = vld [vmem:[%s3411 + $0x8] sm:$0xf]
        %v3415 = vld [vmem:[%s3411 + $0xc] sm:$0xf]
        %v3416 = vld [vmem:[%s3411 + $0x10] sm:$0xf]
        %v3417 = vld [vmem:[%s3411 + $0x14] sm:$0xf]
        %v3418 = vld [vmem:[%s3411 + $0x18] sm:$0xf]
        %v3419 = vld [vmem:[%s3411 + $0x1c] sm:$0xf]
        %v3420 = vld [vmem:[%s3411 + $0x20] sm:$0xf]
        %v3421 = vld [vmem:[%s3411 + $0x24] sm:$0xf]
        %v3422 = vld [vmem:[%s3411 + $0x28] sm:$0xf]
        %v3423 = vld [vmem:[%s3411 + $0x2c] sm:$0xf]
        %v3424 = vld [vmem:[%s3411 + $0x30] sm:$0xf]
        %v3425 = vld [vmem:[%s3411 + $0x34] sm:$0xf]
        %v3426 = vld [vmem:[%s3411 + $0x38] sm:$0xf]
        %v3427 = vld [vmem:[%s3411 + $0x3c] sm:$0xf]
        %v3461 = vunpack.c.l.b16 %v3378
        %v3462 = vunpack.c.l.b16 %v3379
        %v3463 = vunpack.c.l.b16 %v3380
        %v3464 = vunpack.c.l.b16 %v3381
        %v3465 = vunpack.c.l.b16 %v3382
        %v3466 = vunpack.c.l.b16 %v3383
        %v3467 = vunpack.c.l.b16 %v3384
        %v3468 = vunpack.c.l.b16 %v3385
        %v3469 = vunpack.c.l.b16 %v3386
        %v3470 = vunpack.c.l.b16 %v3387
        %v3471 = vunpack.c.l.b16 %v3388
        %v3472 = vunpack.c.l.b16 %v3389
        %v3473 = vunpack.c.l.b16 %v3390
        %v3474 = vunpack.c.l.b16 %v3391
        %v3475 = vunpack.c.l.b16 %v3392
        %v3476 = vunpack.c.l.b16 %v3393
        %v3477 = vunpack.c.l.b16 %v3394
        %v3478 = vunpack.c.l.b16 %v3395
        %v3479 = vunpack.c.l.b16 %v3396
        %v3480 = vunpack.c.l.b16 %v3397
        %v3481 = vunpack.c.l.b16 %v3398
        %v3482 = vunpack.c.l.b16 %v3399
        %v3483 = vunpack.c.l.b16 %v3400
        %v3484 = vunpack.c.l.b16 %v3401
        %v3485 = vunpack.c.l.b16 %v3402
        %v3486 = vunpack.c.l.b16 %v3403
        %v3487 = vunpack.c.l.b16 %v3404
        %v3488 = vunpack.c.l.b16 %v3405
        %v3489 = vunpack.c.l.b16 %v3406
        %v3490 = vunpack.c.l.b16 %v3407
        %v3491 = vunpack.c.l.b16 %v3408
        %v3492 = vunpack.c.l.b16 %v3409
        %v3493 = vunpack.c.l.b16 %v3410
        %v3494 = vpack.c.b16 %v3462, %v3461
        %v3495 = vpack.c.b16 %v3464, %v3463
        %v3496 = vpack.c.b16 %v3466, %v3465
        %v3497 = vpack.c.b16 %v3468, %v3467
        %v3498 = vpack.c.b16 %v3470, %v3469
        %v3499 = vpack.c.b16 %v3472, %v3471
        %v3500 = vpack.c.b16 %v3474, %v3473
        %v3501 = vpack.c.b16 %v3476, %v3475
        %v3502 = vpack.c.b16 %v3478, %v3477
        %v3503 = vpack.c.b16 %v3480, %v3479
        %v3504 = vpack.c.b16 %v3482, %v3481
        %v3505 = vpack.c.b16 %v3484, %v3483
        %v3506 = vpack.c.b16 %v3486, %v3485
        %v3507 = vpack.c.b16 %v3488, %v3487
        %v3508 = vpack.c.b16 %v3490, %v3489
        %v3509 = vpack.c.b16 %v3492, %v3491
        %v3510 = vpack.c.b16 %v3493, %v3493
        %vm3511 = vsmask.f32 7424
        %v3513 = vshrl.u32 %v3494, 16
        %v3515 = vshll.u32 %v3494, 16
        %v3517 = vrot.slane %v3515, 1
        %v3518 = vor.u32 %v3513, %v3517
        %v3520 = vshll.u32 %v3495, 16
        %v3522 = vrot.slane %v3520, 1
        %v3523 = vsel %vm3511, %v3518, %v3522
        %v3524 = vshrl.u32 %v3495, 16
        %v3526 = vor.u32 %v3524, %v3522
        %v3528 = vshll.u32 %v3496, 16
        %v3530 = vrot.slane %v3528, 1
        %v3531 = vsel %vm3511, %v3526, %v3530
        %v3532 = vshrl.u32 %v3496, 16
        %v3534 = vor.u32 %v3532, %v3530
        %v3536 = vshll.u32 %v3497, 16
        %v3538 = vrot.slane %v3536, 1
        %v3539 = vsel %vm3511, %v3534, %v3538
        %v3540 = vshrl.u32 %v3497, 16
        %v3542 = vor.u32 %v3540, %v3538
        %v3544 = vshll.u32 %v3498, 16
        %v3546 = vrot.slane %v3544, 1
        %v3547 = vsel %vm3511, %v3542, %v3546
        %v3548 = vshrl.u32 %v3498, 16
        %v3550 = vor.u32 %v3548, %v3546
        %v3552 = vshll.u32 %v3499, 16
        %v3554 = vrot.slane %v3552, 1
        %v3555 = vsel %vm3511, %v3550, %v3554
        %v3556 = vshrl.u32 %v3499, 16
        %v3558 = vor.u32 %v3556, %v3554
        %v3560 = vshll.u32 %v3500, 16
        %v3562 = vrot.slane %v3560, 1
        %v3563 = vsel %vm3511, %v3558, %v3562
        %v3564 = vshrl.u32 %v3500, 16
        %v3566 = vor.u32 %v3564, %v3562
        %v3568 = vshll.u32 %v3501, 16
        %v3570 = vrot.slane %v3568, 1
        %v3571 = vsel %vm3511, %v3566, %v3570
        %v3572 = vshrl.u32 %v3501, 16
        %v3574 = vor.u32 %v3572, %v3570
        %v3576 = vshll.u32 %v3502, 16
        %v3578 = vrot.slane %v3576, 1
        %v3579 = vsel %vm3511, %v3574, %v3578
        %v3580 = vshrl.u32 %v3502, 16
        %v3582 = vor.u32 %v3580, %v3578
        %v3584 = vshll.u32 %v3503, 16
        %v3586 = vrot.slane %v3584, 1
        %v3587 = vsel %vm3511, %v3582, %v3586
        %v3588 = vshrl.u32 %v3503, 16
        %v3590 = vor.u32 %v3588, %v3586
        %v3592 = vshll.u32 %v3504, 16
        %v3594 = vrot.slane %v3592, 1
        %v3595 = vsel %vm3511, %v3590, %v3594
        %v3596 = vshrl.u32 %v3504, 16
        %v3598 = vor.u32 %v3596, %v3594
        %v3600 = vshll.u32 %v3505, 16
        %v3602 = vrot.slane %v3600, 1
        %v3603 = vsel %vm3511, %v3598, %v3602
        %v3604 = vshrl.u32 %v3505, 16
        %v3606 = vor.u32 %v3604, %v3602
        %v3608 = vshll.u32 %v3506, 16
        %v3610 = vrot.slane %v3608, 1
        %v3611 = vsel %vm3511, %v3606, %v3610
        %v3612 = vshrl.u32 %v3506, 16
        %v3614 = vor.u32 %v3612, %v3610
        %v3616 = vshll.u32 %v3507, 16
        %v3618 = vrot.slane %v3616, 1
        %v3619 = vsel %vm3511, %v3614, %v3618
        %v3620 = vshrl.u32 %v3507, 16
        %v3622 = vor.u32 %v3620, %v3618
        %v3624 = vshll.u32 %v3508, 16
        %v3626 = vrot.slane %v3624, 1
        %v3627 = vsel %vm3511, %v3622, %v3626
        %v3628 = vshrl.u32 %v3508, 16
        %v3630 = vor.u32 %v3628, %v3626
        %v3632 = vshll.u32 %v3509, 16
        %v3634 = vrot.slane %v3632, 1
        %v3635 = vsel %vm3511, %v3630, %v3634
        %v3636 = vshrl.u32 %v3509, 16
        %v3638 = vor.u32 %v3636, %v3634
        %v3640 = vshll.u32 %v3510, 16
        %v3642 = vrot.slane %v3640, 1
        %v3643 = vsel %vm3511, %v3638, %v3642
        %v3676 = vunpack.c.l.b16 %v3412
        %v3677 = vunpack.c.l.b16 %v3413
        %v3678 = vunpack.c.l.b16 %v3414
        %v3679 = vunpack.c.l.b16 %v3415
        %v3680 = vunpack.c.l.b16 %v3416
        %v3681 = vunpack.c.l.b16 %v3417
        %v3682 = vunpack.c.l.b16 %v3418
        %v3683 = vunpack.c.l.b16 %v3419
        %v3684 = vunpack.c.l.b16 %v3420
        %v3685 = vunpack.c.l.b16 %v3421
        %v3686 = vunpack.c.l.b16 %v3422
        %v3687 = vunpack.c.l.b16 %v3423
        %v3688 = vunpack.c.l.b16 %v3424
        %v3689 = vunpack.c.l.b16 %v3425
        %v3690 = vunpack.c.l.b16 %v3426
        %v3691 = vunpack.c.l.b16 %v3427
        %v3692 = vpack.c.b16 %v3677, %v3676
        %v3693 = vpack.c.b16 %v3679, %v3678
        %v3694 = vpack.c.b16 %v3681, %v3680
        %v3695 = vpack.c.b16 %v3683, %v3682
        %v3696 = vpack.c.b16 %v3685, %v3684
        %v3697 = vpack.c.b16 %v3687, %v3686
        %v3698 = vpack.c.b16 %v3689, %v3688
        %v3699 = vpack.c.b16 %v3691, %v3690
        %3708 = vmatpush.bf16.msra.mxu0 %v3699
        %3709 = vmatpush.bf16.msra.mxu0 %v3698
        %3710 = vmatpush.bf16.msra.mxu0 %v3697
        %3711 = vmatpush.bf16.msra.mxu0 %v3696
        %3712 = vmatpush.bf16.msra.mxu0 %v3695
        %3713 = vmatpush.bf16.msra.mxu0 %v3694
        %3714 = vmatpush.bf16.msra.mxu0 %v3693
        %3715 = vmatpush.bf16.msra.mxu0 %v3692
        %3716 = vmatmul.bf16.gmra.mxu0 %v3523
        %v3717 = vpop.f32.mrf.mxu0
        %v3718 = vadd.f32 0.0, %v3717
        %v3719 = vpop.f32.mrf.mxu0
        %v3720 = vadd.f32 0.0, %v3719
        %3721 = vmatmul.bf16.gmra.mxu0 %v3531
        %v3722 = vpop.f32.mrf.mxu0
        %v3723 = vadd.f32 0.0, %v3722
        %v3724 = vpop.f32.mrf.mxu0
        %v3725 = vadd.f32 0.0, %v3724
        %3726 = vmatmul.bf16.gmra.mxu0 %v3539
        %v3727 = vpop.f32.mrf.mxu0
        %v3728 = vadd.f32 0.0, %v3727
        %v3729 = vpop.f32.mrf.mxu0
        %v3730 = vadd.f32 0.0, %v3729
        %3731 = vmatmul.bf16.gmra.mxu0 %v3547
        %v3732 = vpop.f32.mrf.mxu0
        %v3733 = vadd.f32 0.0, %v3732
        %v3734 = vpop.f32.mrf.mxu0
        %v3735 = vadd.f32 0.0, %v3734
        %3736 = vmatmul.bf16.gmra.mxu0 %v3555
        %v3737 = vpop.f32.mrf.mxu0
        %v3738 = vadd.f32 0.0, %v3737
        %v3739 = vpop.f32.mrf.mxu0
        %v3740 = vadd.f32 0.0, %v3739
        %3741 = vmatmul.bf16.gmra.mxu0 %v3563
        %v3742 = vpop.f32.mrf.mxu0
        %v3743 = vadd.f32 0.0, %v3742
        %v3744 = vpop.f32.mrf.mxu0
        %v3745 = vadd.f32 0.0, %v3744
        %3746 = vmatmul.bf16.gmra.mxu0 %v3571
        %v3747 = vpop.f32.mrf.mxu0
        %v3748 = vadd.f32 0.0, %v3747
        %v3749 = vpop.f32.mrf.mxu0
        %v3750 = vadd.f32 0.0, %v3749
        %3751 = vmatmul.bf16.gmra.mxu0 %v3579
        %v3752 = vpop.f32.mrf.mxu0
        %v3753 = vadd.f32 0.0, %v3752
        %v3754 = vpop.f32.mrf.mxu0
        %v3755 = vadd.f32 0.0, %v3754
        %3756 = vmatmul.bf16.gmra.mxu0 %v3587
        %v3757 = vpop.f32.mrf.mxu0
        %v3758 = vadd.f32 0.0, %v3757
        %v3759 = vpop.f32.mrf.mxu0
        %v3760 = vadd.f32 0.0, %v3759
        %3761 = vmatmul.bf16.gmra.mxu0 %v3595
        %v3762 = vpop.f32.mrf.mxu0
        %v3763 = vadd.f32 0.0, %v3762
        %v3764 = vpop.f32.mrf.mxu0
        %v3765 = vadd.f32 0.0, %v3764
        %3766 = vmatmul.bf16.gmra.mxu0 %v3603
        %v3767 = vpop.f32.mrf.mxu0
        %v3768 = vadd.f32 0.0, %v3767
        %v3769 = vpop.f32.mrf.mxu0
        %v3770 = vadd.f32 0.0, %v3769
        %3771 = vmatmul.bf16.gmra.mxu0 %v3611
        %v3772 = vpop.f32.mrf.mxu0
        %v3773 = vadd.f32 0.0, %v3772
        %v3774 = vpop.f32.mrf.mxu0
        %v3775 = vadd.f32 0.0, %v3774
        %3776 = vmatmul.bf16.gmra.mxu0 %v3619
        %v3777 = vpop.f32.mrf.mxu0
        %v3778 = vadd.f32 0.0, %v3777
        %v3779 = vpop.f32.mrf.mxu0
        %v3780 = vadd.f32 0.0, %v3779
        %3781 = vmatmul.bf16.gmra.mxu0 %v3627
        %v3782 = vpop.f32.mrf.mxu0
        %v3783 = vadd.f32 0.0, %v3782
        %v3784 = vpop.f32.mrf.mxu0
        %v3785 = vadd.f32 0.0, %v3784
        %3786 = vmatmul.bf16.gmra.mxu0 %v3635
        %v3787 = vpop.f32.mrf.mxu0
        %v3788 = vadd.f32 0.0, %v3787
        %v3789 = vpop.f32.mrf.mxu0
        %v3790 = vadd.f32 0.0, %v3789
        %3791 = vmatmul.bf16.gmra.mxu0 %v3643
        %v3792 = vpop.f32.mrf.mxu0
        %v3793 = vadd.f32 0.0, %v3792
        %v3794 = vpop.f32.mrf.mxu0
        %v3795 = vadd.f32 0.0, %v3794
        %3796 = vdwg.mxu0
        %v3797 = vadd.f32 %v2617, %v3718
        %v3798 = vadd.f32 %v2619, %v3720
        %v3799 = vadd.f32 %v2622, %v3723
        %v3800 = vadd.f32 %v2624, %v3725
        %v3801 = vadd.f32 %v2627, %v3728
        %v3802 = vadd.f32 %v2629, %v3730
        %v3803 = vadd.f32 %v2632, %v3733
        %v3804 = vadd.f32 %v2634, %v3735
        %v3805 = vadd.f32 %v2637, %v3738
        %v3806 = vadd.f32 %v2639, %v3740
        %v3807 = vadd.f32 %v2642, %v3743
        %v3808 = vadd.f32 %v2644, %v3745
        %v3809 = vadd.f32 %v2647, %v3748
        %v3810 = vadd.f32 %v2649, %v3750
        %v3811 = vadd.f32 %v2652, %v3753
        %v3812 = vadd.f32 %v2654, %v3755
        %v3813 = vadd.f32 %v2657, %v3758
        %v3814 = vadd.f32 %v2659, %v3760
        %v3815 = vadd.f32 %v2662, %v3763
        %v3816 = vadd.f32 %v2664, %v3765
        %v3817 = vadd.f32 %v2667, %v3768
        %v3818 = vadd.f32 %v2669, %v3770
        %v3819 = vadd.f32 %v2672, %v3773
        %v3820 = vadd.f32 %v2674, %v3775
        %v3821 = vadd.f32 %v2677, %v3778
        %v3822 = vadd.f32 %v2679, %v3780
        %v3823 = vadd.f32 %v2682, %v3783
        %v3824 = vadd.f32 %v2684, %v3785
        %v3825 = vadd.f32 %v2687, %v3788
        %v3826 = vadd.f32 %v2689, %v3790
        %v3827 = vadd.f32 %v2692, %v3793
        %v3828 = vadd.f32 %v2694, %v3795
        %v3829 = vld [vmem:[#allocation2 + $0x8] sm:$0x8]
        %v3830 = vld [vmem:[#allocation2 + $0xc] sm:$0xf]
        %v3831 = vld [vmem:[#allocation2 + $0x10] sm:$0xf]
        %v3832 = vld [vmem:[#allocation2 + $0x14] sm:$0xf]
        %v3833 = vld [vmem:[#allocation2 + $0x18] sm:$0xf]
        %v3834 = vld [vmem:[#allocation2 + $0x1c] sm:$0xf]
        %v3835 = vld [vmem:[#allocation2 + $0x20] sm:$0xf]
        %v3836 = vld [vmem:[#allocation2 + $0x24] sm:$0xf]
        %v3837 = vld [vmem:[#allocation2 + $0x28] sm:$0xf]
        %v3838 = vld [vmem:[#allocation2 + $0x2c] sm:$0xf]
        %v3839 = vld [vmem:[#allocation2 + $0x30] sm:$0xf]
        %v3840 = vld [vmem:[#allocation2 + $0x34] sm:$0xf]
        %v3841 = vld [vmem:[#allocation2 + $0x38] sm:$0xf]
        %v3842 = vld [vmem:[#allocation2 + $0x3c] sm:$0xf]
        %v3843 = vld [vmem:[#allocation2 + $0x40] sm:$0xf]
        %v3844 = vld [vmem:[#allocation2 + $0x44] sm:$0xf]
        %v3845 = vld [vmem:[#allocation2 + $0x48] sm:$0xf]
        %v3846 = vld [vmem:[#allocation2 + $0x4c] sm:$0xf]
        %v3847 = vld [vmem:[#allocation2 + $0x50] sm:$0xf]
        %v3848 = vld [vmem:[#allocation2 + $0x54] sm:$0xf]
        %v3849 = vld [vmem:[#allocation2 + $0x58] sm:$0xf]
        %v3850 = vld [vmem:[#allocation2 + $0x5c] sm:$0xf]
        %v3851 = vld [vmem:[#allocation2 + $0x60] sm:$0xf]
        %v3852 = vld [vmem:[#allocation2 + $0x64] sm:$0xf]
        %v3853 = vld [vmem:[#allocation2 + $0x68] sm:$0xf]
        %v3854 = vld [vmem:[#allocation2 + $0x6c] sm:$0xf]
        %v3855 = vld [vmem:[#allocation2 + $0x70] sm:$0xf]
        %v3856 = vld [vmem:[#allocation2 + $0x74] sm:$0xf]
        %v3857 = vld [vmem:[#allocation2 + $0x78] sm:$0xf]
        %v3858 = vld [vmem:[#allocation2 + $0x7c] sm:$0xf]
        %v3859 = vld [vmem:[#allocation2 + $0x80] sm:$0xf]
        %v3860 = vld [vmem:[#allocation2 + $0x84] sm:$0xf]
        %v3861 = vld [vmem:[#allocation2 + $0x88] sm:$0xf]
        %v3862 = vsel %vm1783, %v3829, 0
        %v3863 = vsel %vm1790, %v3830, 0
        %v3864 = vsel %vm1797, %v3831, 0
        %v3865 = vsel %vm1804, %v3832, 0
        %v3866 = vsel %vm1811, %v3833, 0
        %v3867 = vsel %vm1818, %v3834, 0
        %v3868 = vsel %vm1825, %v3835, 0
        %v3869 = vsel %vm1832, %v3836, 0
        %v3870 = vsel %vm1839, %v3837, 0
        %v3871 = vsel %vm1846, %v3838, 0
        %v3872 = vsel %vm1853, %v3839, 0
        %v3873 = vsel %vm1860, %v3840, 0
        %v3874 = vsel %vm1867, %v3841, 0
        %v3875 = vsel %vm1874, %v3842, 0
        %v3876 = vsel %vm1881, %v3843, 0
        %v3877 = vsel %vm1888, %v3844, 0
        %v3878 = vsel %vm1895, %v3845, 0
        %v3879 = vsel %vm1902, %v3846, 0
        %v3880 = vsel %vm1909, %v3847, 0
        %v3881 = vsel %vm1916, %v3848, 0
        %v3882 = vsel %vm1923, %v3849, 0
        %v3883 = vsel %vm1930, %v3850, 0
        %v3884 = vsel %vm1937, %v3851, 0
        %v3885 = vsel %vm1944, %v3852, 0
        %v3886 = vsel %vm1951, %v3853, 0
        %v3887 = vsel %vm1958, %v3854, 0
        %v3888 = vsel %vm1965, %v3855, 0
        %v3889 = vsel %vm1972, %v3856, 0
        %v3890 = vsel %vm1979, %v3857, 0
        %v3891 = vsel %vm1986, %v3858, 0
        %v3892 = vsel %vm1993, %v3859, 0
        %v3893 = vsel %vm2000, %v3860, 0
        %v3894 = vsel %vm2007, %v3861, 0
        %s3895 = scalar_lea.vmem [#allocation9], 192
        %v3896 = vld [vmem:[%s3895] sm:$0xf]
        %v3897 = vld [vmem:[%s3895 + $0x4] sm:$0xf]
        %v3898 = vld [vmem:[%s3895 + $0x8] sm:$0xf]
        %v3899 = vld [vmem:[%s3895 + $0xc] sm:$0xf]
        %v3900 = vld [vmem:[%s3895 + $0x10] sm:$0xf]
        %v3901 = vld [vmem:[%s3895 + $0x14] sm:$0xf]
        %v3902 = vld [vmem:[%s3895 + $0x18] sm:$0xf]
        %v3903 = vld [vmem:[%s3895 + $0x1c] sm:$0xf]
        %v3904 = vld [vmem:[%s3895 + $0x20] sm:$0xf]
        %v3905 = vld [vmem:[%s3895 + $0x24] sm:$0xf]
        %v3906 = vld [vmem:[%s3895 + $0x28] sm:$0xf]
        %v3907 = vld [vmem:[%s3895 + $0x2c] sm:$0xf]
        %v3908 = vld [vmem:[%s3895 + $0x30] sm:$0xf]
        %v3909 = vld [vmem:[%s3895 + $0x34] sm:$0xf]
        %v3910 = vld [vmem:[%s3895 + $0x38] sm:$0xf]
        %v3911 = vld [vmem:[%s3895 + $0x3c] sm:$0xf]
        %v3945 = vunpack.c.l.b16 %v3862
        %v3946 = vunpack.c.l.b16 %v3863
        %v3947 = vunpack.c.l.b16 %v3864
        %v3948 = vunpack.c.l.b16 %v3865
        %v3949 = vunpack.c.l.b16 %v3866
        %v3950 = vunpack.c.l.b16 %v3867
        %v3951 = vunpack.c.l.b16 %v3868
        %v3952 = vunpack.c.l.b16 %v3869
        %v3953 = vunpack.c.l.b16 %v3870
        %v3954 = vunpack.c.l.b16 %v3871
        %v3955 = vunpack.c.l.b16 %v3872
        %v3956 = vunpack.c.l.b16 %v3873
        %v3957 = vunpack.c.l.b16 %v3874
        %v3958 = vunpack.c.l.b16 %v3875
        %v3959 = vunpack.c.l.b16 %v3876
        %v3960 = vunpack.c.l.b16 %v3877
        %v3961 = vunpack.c.l.b16 %v3878
        %v3962 = vunpack.c.l.b16 %v3879
        %v3963 = vunpack.c.l.b16 %v3880
        %v3964 = vunpack.c.l.b16 %v3881
        %v3965 = vunpack.c.l.b16 %v3882
        %v3966 = vunpack.c.l.b16 %v3883
        %v3967 = vunpack.c.l.b16 %v3884
        %v3968 = vunpack.c.l.b16 %v3885
        %v3969 = vunpack.c.l.b16 %v3886
        %v3970 = vunpack.c.l.b16 %v3887
        %v3971 = vunpack.c.l.b16 %v3888
        %v3972 = vunpack.c.l.b16 %v3889
        %v3973 = vunpack.c.l.b16 %v3890
        %v3974 = vunpack.c.l.b16 %v3891
        %v3975 = vunpack.c.l.b16 %v3892
        %v3976 = vunpack.c.l.b16 %v3893
        %v3977 = vunpack.c.l.b16 %v3894
        %v3978 = vpack.c.b16 %v3946, %v3945
        %v3979 = vpack.c.b16 %v3948, %v3947
        %v3980 = vpack.c.b16 %v3950, %v3949
        %v3981 = vpack.c.b16 %v3952, %v3951
        %v3982 = vpack.c.b16 %v3954, %v3953
        %v3983 = vpack.c.b16 %v3956, %v3955
        %v3984 = vpack.c.b16 %v3958, %v3957
        %v3985 = vpack.c.b16 %v3960, %v3959
        %v3986 = vpack.c.b16 %v3962, %v3961
        %v3987 = vpack.c.b16 %v3964, %v3963
        %v3988 = vpack.c.b16 %v3966, %v3965
        %v3989 = vpack.c.b16 %v3968, %v3967
        %v3990 = vpack.c.b16 %v3970, %v3969
        %v3991 = vpack.c.b16 %v3972, %v3971
        %v3992 = vpack.c.b16 %v3974, %v3973
        %v3993 = vpack.c.b16 %v3976, %v3975
        %v3994 = vpack.c.b16 %v3977, %v3977
        %v3996 = vshrl.u32 %v3978, 16
        %v3998 = vrot.slane %v3996, 3
        %v3999 = vshll.u32 %v3978, 16
        %v4001 = vrot.slane %v3999, 4
        %v4002 = vor.u32 %v3998, %v4001
        %v4004 = vshrl.u32 %v3979, 16
        %v4006 = vrot.slane %v4004, 3
        %v4007 = vshll.u32 %v3979, 16
        %v4009 = vrot.slane %v4007, 4
        %v4010 = vor.u32 %v4006, %v4009
        %v4011 = vsel %vm2390, %v4002, %v4010
        %v4013 = vshrl.u32 %v3980, 16
        %v4015 = vrot.slane %v4013, 3
        %v4016 = vshll.u32 %v3980, 16
        %v4018 = vrot.slane %v4016, 4
        %v4019 = vor.u32 %v4015, %v4018
        %v4020 = vsel %vm2390, %v4010, %v4019
        %v4022 = vshrl.u32 %v3981, 16
        %v4024 = vrot.slane %v4022, 3
        %v4025 = vshll.u32 %v3981, 16
        %v4027 = vrot.slane %v4025, 4
        %v4028 = vor.u32 %v4024, %v4027
        %v4029 = vsel %vm2390, %v4019, %v4028
        %v4031 = vshrl.u32 %v3982, 16
        %v4033 = vrot.slane %v4031, 3
        %v4034 = vshll.u32 %v3982, 16
        %v4036 = vrot.slane %v4034, 4
        %v4037 = vor.u32 %v4033, %v4036
        %v4038 = vsel %vm2390, %v4028, %v4037
        %v4040 = vshrl.u32 %v3983, 16
        %v4042 = vrot.slane %v4040, 3
        %v4043 = vshll.u32 %v3983, 16
        %v4045 = vrot.slane %v4043, 4
        %v4046 = vor.u32 %v4042, %v4045
        %v4047 = vsel %vm2390, %v4037, %v4046
        %v4049 = vshrl.u32 %v3984, 16
        %v4051 = vrot.slane %v4049, 3
        %v4052 = vshll.u32 %v3984, 16
        %v4054 = vrot.slane %v4052, 4
        %v4055 = vor.u32 %v4051, %v4054
        %v4056 = vsel %vm2390, %v4046, %v4055
        %v4058 = vshrl.u32 %v3985, 16
        %v4060 = vrot.slane %v4058, 3
        %v4061 = vshll.u32 %v3985, 16
        %v4063 = vrot.slane %v4061, 4
        %v4064 = vor.u32 %v4060, %v4063
        %v4065 = vsel %vm2390, %v4055, %v4064
        %v4067 = vshrl.u32 %v3986, 16
        %v4069 = vrot.slane %v4067, 3
        %v4070 = vshll.u32 %v3986, 16
        %v4072 = vrot.slane %v4070, 4
        %v4073 = vor.u32 %v4069, %v4072
        %v4074 = vsel %vm2390, %v4064, %v4073
        %v4076 = vshrl.u32 %v3987, 16
        %v4078 = vrot.slane %v4076, 3
        %v4079 = vshll.u32 %v3987, 16
        %v4081 = vrot.slane %v4079, 4
        %v4082 = vor.u32 %v4078, %v4081
        %v4083 = vsel %vm2390, %v4073, %v4082
        %v4085 = vshrl.u32 %v3988, 16
        %v4087 = vrot.slane %v4085, 3
        %v4088 = vshll.u32 %v3988, 16
        %v4090 = vrot.slane %v4088, 4
        %v4091 = vor.u32 %v4087, %v4090
        %v4092 = vsel %vm2390, %v4082, %v4091
        %v4094 = vshrl.u32 %v3989, 16
        %v4096 = vrot.slane %v4094, 3
        %v4097 = vshll.u32 %v3989, 16
        %v4099 = vrot.slane %v4097, 4
        %v4100 = vor.u32 %v4096, %v4099
        %v4101 = vsel %vm2390, %v4091, %v4100
        %v4103 = vshrl.u32 %v3990, 16
        %v4105 = vrot.slane %v4103, 3
        %v4106 = vshll.u32 %v3990, 16
        %v4108 = vrot.slane %v4106, 4
        %v4109 = vor.u32 %v4105, %v4108
        %v4110 = vsel %vm2390, %v4100, %v4109
        %v4112 = vshrl.u32 %v3991, 16
        %v4114 = vrot.slane %v4112, 3
        %v4115 = vshll.u32 %v3991, 16
        %v4117 = vrot.slane %v4115, 4
        %v4118 = vor.u32 %v4114, %v4117
        %v4119 = vsel %vm2390, %v4109, %v4118
        %v4121 = vshrl.u32 %v3992, 16
        %v4123 = vrot.slane %v4121, 3
        %v4124 = vshll.u32 %v3992, 16
        %v4126 = vrot.slane %v4124, 4
        %v4127 = vor.u32 %v4123, %v4126
        %v4128 = vsel %vm2390, %v4118, %v4127
        %v4130 = vshrl.u32 %v3993, 16
        %v4132 = vrot.slane %v4130, 3
        %v4133 = vshll.u32 %v3993, 16
        %v4135 = vrot.slane %v4133, 4
        %v4136 = vor.u32 %v4132, %v4135
        %v4137 = vsel %vm2390, %v4127, %v4136
        %v4139 = vshrl.u32 %v3994, 16
        %v4141 = vrot.slane %v4139, 3
        %v4142 = vshll.u32 %v3994, 16
        %v4144 = vrot.slane %v4142, 4
        %v4145 = vor.u32 %v4141, %v4144
        %v4146 = vsel %vm2390, %v4136, %v4145
        %v4179 = vunpack.c.l.b16 %v3896
        %v4180 = vunpack.c.l.b16 %v3897
        %v4181 = vunpack.c.l.b16 %v3898
        %v4182 = vunpack.c.l.b16 %v3899
        %v4183 = vunpack.c.l.b16 %v3900
        %v4184 = vunpack.c.l.b16 %v3901
        %v4185 = vunpack.c.l.b16 %v3902
        %v4186 = vunpack.c.l.b16 %v3903
        %v4187 = vunpack.c.l.b16 %v3904
        %v4188 = vunpack.c.l.b16 %v3905
        %v4189 = vunpack.c.l.b16 %v3906
        %v4190 = vunpack.c.l.b16 %v3907
        %v4191 = vunpack.c.l.b16 %v3908
        %v4192 = vunpack.c.l.b16 %v3909
        %v4193 = vunpack.c.l.b16 %v3910
        %v4194 = vunpack.c.l.b16 %v3911
        %v4195 = vpack.c.b16 %v4180, %v4179
        %v4196 = vpack.c.b16 %v4182, %v4181
        %v4197 = vpack.c.b16 %v4184, %v4183
        %v4198 = vpack.c.b16 %v4186, %v4185
        %v4199 = vpack.c.b16 %v4188, %v4187
        %v4200 = vpack.c.b16 %v4190, %v4189
        %v4201 = vpack.c.b16 %v4192, %v4191
        %v4202 = vpack.c.b16 %v4194, %v4193
        %4211 = vmatpush.bf16.msra.mxu0 %v4202
        %4212 = vmatpush.bf16.msra.mxu0 %v4201
        %4213 = vmatpush.bf16.msra.mxu0 %v4200
        %4214 = vmatpush.bf16.msra.mxu0 %v4199
        %4215 = vmatpush.bf16.msra.mxu0 %v4198
        %4216 = vmatpush.bf16.msra.mxu0 %v4197
        %4217 = vmatpush.bf16.msra.mxu0 %v4196
        %4218 = vmatpush.bf16.msra.mxu0 %v4195
        %4219 = vmatmul.bf16.gmra.mxu0 %v4011
        %v4220 = vpop.f32.mrf.mxu0
        %v4221 = vadd.f32 0.0, %v4220
        %v4222 = vpop.f32.mrf.mxu0
        %v4223 = vadd.f32 0.0, %v4222
        %4224 = vmatmul.bf16.gmra.mxu0 %v4020
        %v4225 = vpop.f32.mrf.mxu0
        %v4226 = vadd.f32 0.0, %v4225
        %v4227 = vpop.f32.mrf.mxu0
        %v4228 = vadd.f32 0.0, %v4227
        %4229 = vmatmul.bf16.gmra.mxu0 %v4029
        %v4230 = vpop.f32.mrf.mxu0
        %v4231 = vadd.f32 0.0, %v4230
        %v4232 = vpop.f32.mrf.mxu0
        %v4233 = vadd.f32 0.0, %v4232
        %4234 = vmatmul.bf16.gmra.mxu0 %v4038
        %v4235 = vpop.f32.mrf.mxu0
        %v4236 = vadd.f32 0.0, %v4235
        %v4237 = vpop.f32.mrf.mxu0
        %v4238 = vadd.f32 0.0, %v4237
        %4239 = vmatmul.bf16.gmra.mxu0 %v4047
        %v4240 = vpop.f32.mrf.mxu0
        %v4241 = vadd.f32 0.0, %v4240
        %v4242 = vpop.f32.mrf.mxu0
        %v4243 = vadd.f32 0.0, %v4242
        %4244 = vmatmul.bf16.gmra.mxu0 %v4056
        %v4245 = vpop.f32.mrf.mxu0
        %v4246 = vadd.f32 0.0, %v4245
        %v4247 = vpop.f32.mrf.mxu0
        %v4248 = vadd.f32 0.0, %v4247
        %4249 = vmatmul.bf16.gmra.mxu0 %v4065
        %v4250 = vpop.f32.mrf.mxu0
        %v4251 = vadd.f32 0.0, %v4250
        %v4252 = vpop.f32.mrf.mxu0
        %v4253 = vadd.f32 0.0, %v4252
        %4254 = vmatmul.bf16.gmra.mxu0 %v4074
        %v4255 = vpop.f32.mrf.mxu0
        %v4256 = vadd.f32 0.0, %v4255
        %v4257 = vpop.f32.mrf.mxu0
        %v4258 = vadd.f32 0.0, %v4257
        %4259 = vmatmul.bf16.gmra.mxu0 %v4083
        %v4260 = vpop.f32.mrf.mxu0
        %v4261 = vadd.f32 0.0, %v4260
        %v4262 = vpop.f32.mrf.mxu0
        %v4263 = vadd.f32 0.0, %v4262
        %4264 = vmatmul.bf16.gmra.mxu0 %v4092
        %v4265 = vpop.f32.mrf.mxu0
        %v4266 = vadd.f32 0.0, %v4265
        %v4267 = vpop.f32.mrf.mxu0
        %v4268 = vadd.f32 0.0, %v4267
        %4269 = vmatmul.bf16.gmra.mxu0 %v4101
        %v4270 = vpop.f32.mrf.mxu0
        %v4271 = vadd.f32 0.0, %v4270
        %v4272 = vpop.f32.mrf.mxu0
        %v4273 = vadd.f32 0.0, %v4272
        %4274 = vmatmul.bf16.gmra.mxu0 %v4110
        %v4275 = vpop.f32.mrf.mxu0
        %v4276 = vadd.f32 0.0, %v4275
        %v4277 = vpop.f32.mrf.mxu0
        %v4278 = vadd.f32 0.0, %v4277
        %4279 = vmatmul.bf16.gmra.mxu0 %v4119
        %v4280 = vpop.f32.mrf.mxu0
        %v4281 = vadd.f32 0.0, %v4280
        %v4282 = vpop.f32.mrf.mxu0
        %v4283 = vadd.f32 0.0, %v4282
        %4284 = vmatmul.bf16.gmra.mxu0 %v4128
        %v4285 = vpop.f32.mrf.mxu0
        %v4286 = vadd.f32 0.0, %v4285
        %v4287 = vpop.f32.mrf.mxu0
        %v4288 = vadd.f32 0.0, %v4287
        %4289 = vmatmul.bf16.gmra.mxu0 %v4137
        %v4290 = vpop.f32.mrf.mxu0
        %v4291 = vadd.f32 0.0, %v4290
        %v4292 = vpop.f32.mrf.mxu0
        %v4293 = vadd.f32 0.0, %v4292
        %4294 = vmatmul.bf16.gmra.mxu0 %v4146
        %v4295 = vpop.f32.mrf.mxu0
        %v4296 = vadd.f32 0.0, %v4295
        %v4297 = vpop.f32.mrf.mxu0
        %v4298 = vadd.f32 0.0, %v4297
        %4299 = vdwg.mxu0
        %v4300 = vadd.f32 %v3797, %v4221
        %v4301 = vadd.f32 %v3798, %v4223
        %v4302 = vadd.f32 %v3799, %v4226
        %v4303 = vadd.f32 %v3800, %v4228
        %v4304 = vadd.f32 %v3801, %v4231
        %v4305 = vadd.f32 %v3802, %v4233
        %v4306 = vadd.f32 %v3803, %v4236
        %v4307 = vadd.f32 %v3804, %v4238
        %v4308 = vadd.f32 %v3805, %v4241
        %v4309 = vadd.f32 %v3806, %v4243
        %v4310 = vadd.f32 %v3807, %v4246
        %v4311 = vadd.f32 %v3808, %v4248
        %v4312 = vadd.f32 %v3809, %v4251
        %v4313 = vadd.f32 %v3810, %v4253
        %v4314 = vadd.f32 %v3811, %v4256
        %v4315 = vadd.f32 %v3812, %v4258
        %v4316 = vadd.f32 %v3813, %v4261
        %v4317 = vadd.f32 %v3814, %v4263
        %v4318 = vadd.f32 %v3815, %v4266
        %v4319 = vadd.f32 %v3816, %v4268
        %v4320 = vadd.f32 %v3817, %v4271
        %v4321 = vadd.f32 %v3818, %v4273
        %v4322 = vadd.f32 %v3819, %v4276
        %v4323 = vadd.f32 %v3820, %v4278
        %v4324 = vadd.f32 %v3821, %v4281
        %v4325 = vadd.f32 %v3822, %v4283
        %v4326 = vadd.f32 %v3823, %v4286
        %v4327 = vadd.f32 %v3824, %v4288
        %v4328 = vadd.f32 %v3825, %v4291
        %v4329 = vadd.f32 %v3826, %v4293
        %v4330 = vadd.f32 %v3827, %v4296
        %v4331 = vadd.f32 %v3828, %v4298
        %s4332 = scalar_lea.vmem [#allocation9], 256
        %v4333 = vld [vmem:[%s4332] sm:$0xf]
        %v4334 = vld [vmem:[%s4332 + $0x4] sm:$0xf]
        %v4335 = vld [vmem:[%s4332 + $0x8] sm:$0xf]
        %v4336 = vld [vmem:[%s4332 + $0xc] sm:$0xf]
        %v4337 = vld [vmem:[%s4332 + $0x10] sm:$0xf]
        %v4338 = vld [vmem:[%s4332 + $0x14] sm:$0xf]
        %v4339 = vld [vmem:[%s4332 + $0x18] sm:$0xf]
        %v4340 = vld [vmem:[%s4332 + $0x1c] sm:$0xf]
        %v4341 = vld [vmem:[%s4332 + $0x20] sm:$0xf]
        %v4342 = vld [vmem:[%s4332 + $0x24] sm:$0xf]
        %v4343 = vld [vmem:[%s4332 + $0x28] sm:$0xf]
        %v4344 = vld [vmem:[%s4332 + $0x2c] sm:$0xf]
        %v4345 = vld [vmem:[%s4332 + $0x30] sm:$0xf]
        %v4346 = vld [vmem:[%s4332 + $0x34] sm:$0xf]
        %v4347 = vld [vmem:[%s4332 + $0x38] sm:$0xf]
        %v4348 = vld [vmem:[%s4332 + $0x3c] sm:$0xf]
        %v4381 = vunpack.c.l.b16 %v3830
        %v4382 = vunpack.c.l.b16 %v3831
        %v4383 = vunpack.c.l.b16 %v3832
        %v4384 = vunpack.c.l.b16 %v3833
        %v4385 = vunpack.c.l.b16 %v3834
        %v4386 = vunpack.c.l.b16 %v3835
        %v4387 = vunpack.c.l.b16 %v3836
        %v4388 = vunpack.c.l.b16 %v3837
        %v4389 = vunpack.c.l.b16 %v3838
        %v4390 = vunpack.c.l.b16 %v3839
        %v4391 = vunpack.c.l.b16 %v3840
        %v4392 = vunpack.c.l.b16 %v3841
        %v4393 = vunpack.c.l.b16 %v3842
        %v4394 = vunpack.c.l.b16 %v3843
        %v4395 = vunpack.c.l.b16 %v3844
        %v4396 = vunpack.c.l.b16 %v3845
        %v4397 = vunpack.c.l.b16 %v3846
        %v4398 = vunpack.c.l.b16 %v3847
        %v4399 = vunpack.c.l.b16 %v3848
        %v4400 = vunpack.c.l.b16 %v3849
        %v4401 = vunpack.c.l.b16 %v3850
        %v4402 = vunpack.c.l.b16 %v3851
        %v4403 = vunpack.c.l.b16 %v3852
        %v4404 = vunpack.c.l.b16 %v3853
        %v4405 = vunpack.c.l.b16 %v3854
        %v4406 = vunpack.c.l.b16 %v3855
        %v4407 = vunpack.c.l.b16 %v3856
        %v4408 = vunpack.c.l.b16 %v3857
        %v4409 = vunpack.c.l.b16 %v3858
        %v4410 = vunpack.c.l.b16 %v3859
        %v4411 = vunpack.c.l.b16 %v3860
        %v4412 = vunpack.c.l.b16 %v3861
        %v4413 = vpack.c.b16 %v4382, %v4381
        %v4414 = vpack.c.b16 %v4384, %v4383
        %v4415 = vpack.c.b16 %v4386, %v4385
        %v4416 = vpack.c.b16 %v4388, %v4387
        %v4417 = vpack.c.b16 %v4390, %v4389
        %v4418 = vpack.c.b16 %v4392, %v4391
        %v4419 = vpack.c.b16 %v4394, %v4393
        %v4420 = vpack.c.b16 %v4396, %v4395
        %v4421 = vpack.c.b16 %v4398, %v4397
        %v4422 = vpack.c.b16 %v4400, %v4399
        %v4423 = vpack.c.b16 %v4402, %v4401
        %v4424 = vpack.c.b16 %v4404, %v4403
        %v4425 = vpack.c.b16 %v4406, %v4405
        %v4426 = vpack.c.b16 %v4408, %v4407
        %v4427 = vpack.c.b16 %v4410, %v4409
        %v4428 = vpack.c.b16 %v4412, %v4411
        %v4461 = vunpack.c.l.b16 %v4333
        %v4462 = vunpack.c.l.b16 %v4334
        %v4463 = vunpack.c.l.b16 %v4335
        %v4464 = vunpack.c.l.b16 %v4336
        %v4465 = vunpack.c.l.b16 %v4337
        %v4466 = vunpack.c.l.b16 %v4338
        %v4467 = vunpack.c.l.b16 %v4339
        %v4468 = vunpack.c.l.b16 %v4340
        %v4469 = vunpack.c.l.b16 %v4341
        %v4470 = vunpack.c.l.b16 %v4342
        %v4471 = vunpack.c.l.b16 %v4343
        %v4472 = vunpack.c.l.b16 %v4344
        %v4473 = vunpack.c.l.b16 %v4345
        %v4474 = vunpack.c.l.b16 %v4346
        %v4475 = vunpack.c.l.b16 %v4347
        %v4476 = vunpack.c.l.b16 %v4348
        %v4477 = vpack.c.b16 %v4462, %v4461
        %v4478 = vpack.c.b16 %v4464, %v4463
        %v4479 = vpack.c.b16 %v4466, %v4465
        %v4480 = vpack.c.b16 %v4468, %v4467
        %v4481 = vpack.c.b16 %v4470, %v4469
        %v4482 = vpack.c.b16 %v4472, %v4471
        %v4483 = vpack.c.b16 %v4474, %v4473
        %v4484 = vpack.c.b16 %v4476, %v4475
        %4493 = vmatpush.bf16.msra.mxu0 %v4484
        %4494 = vmatpush.bf16.msra.mxu0 %v4483
        %4495 = vmatpush.bf16.msra.mxu0 %v4482
        %4496 = vmatpush.bf16.msra.mxu0 %v4481
        %4497 = vmatpush.bf16.msra.mxu0 %v4480
        %4498 = vmatpush.bf16.msra.mxu0 %v4479
        %4499 = vmatpush.bf16.msra.mxu0 %v4478
        %4500 = vmatpush.bf16.msra.mxu0 %v4477
        %4501 = vmatmul.bf16.gmra.mxu0 %v4413
        %v4502 = vpop.f32.mrf.mxu0
        %v4503 = vadd.f32 0.0, %v4502
        %v4504 = vpop.f32.mrf.mxu0
        %v4505 = vadd.f32 0.0, %v4504
        %4506 = vmatmul.bf16.gmra.mxu0 %v4414
        %v4507 = vpop.f32.mrf.mxu0
        %v4508 = vadd.f32 0.0, %v4507
        %v4509 = vpop.f32.mrf.mxu0
        %v4510 = vadd.f32 0.0, %v4509
        %4511 = vmatmul.bf16.gmra.mxu0 %v4415
        %v4512 = vpop.f32.mrf.mxu0
        %v4513 = vadd.f32 0.0, %v4512
        %v4514 = vpop.f32.mrf.mxu0
        %v4515 = vadd.f32 0.0, %v4514
        %4516 = vmatmul.bf16.gmra.mxu0 %v4416
        %v4517 = vpop.f32.mrf.mxu0
        %v4518 = vadd.f32 0.0, %v4517
        %v4519 = vpop.f32.mrf.mxu0
        %v4520 = vadd.f32 0.0, %v4519
        %4521 = vmatmul.bf16.gmra.mxu0 %v4417
        %v4522 = vpop.f32.mrf.mxu0
        %v4523 = vadd.f32 0.0, %v4522
        %v4524 = vpop.f32.mrf.mxu0
        %v4525 = vadd.f32 0.0, %v4524
        %4526 = vmatmul.bf16.gmra.mxu0 %v4418
        %v4527 = vpop.f32.mrf.mxu0
        %v4528 = vadd.f32 0.0, %v4527
        %v4529 = vpop.f32.mrf.mxu0
        %v4530 = vadd.f32 0.0, %v4529
        %4531 = vmatmul.bf16.gmra.mxu0 %v4419
        %v4532 = vpop.f32.mrf.mxu0
        %v4533 = vadd.f32 0.0, %v4532
        %v4534 = vpop.f32.mrf.mxu0
        %v4535 = vadd.f32 0.0, %v4534
        %4536 = vmatmul.bf16.gmra.mxu0 %v4420
        %v4537 = vpop.f32.mrf.mxu0
        %v4538 = vadd.f32 0.0, %v4537
        %v4539 = vpop.f32.mrf.mxu0
        %v4540 = vadd.f32 0.0, %v4539
        %4541 = vmatmul.bf16.gmra.mxu0 %v4421
        %v4542 = vpop.f32.mrf.mxu0
        %v4543 = vadd.f32 0.0, %v4542
        %v4544 = vpop.f32.mrf.mxu0
        %v4545 = vadd.f32 0.0, %v4544
        %4546 = vmatmul.bf16.gmra.mxu0 %v4422
        %v4547 = vpop.f32.mrf.mxu0
        %v4548 = vadd.f32 0.0, %v4547
        %v4549 = vpop.f32.mrf.mxu0
        %v4550 = vadd.f32 0.0, %v4549
        %4551 = vmatmul.bf16.gmra.mxu0 %v4423
        %v4552 = vpop.f32.mrf.mxu0
        %v4553 = vadd.f32 0.0, %v4552
        %v4554 = vpop.f32.mrf.mxu0
        %v4555 = vadd.f32 0.0, %v4554
        %4556 = vmatmul.bf16.gmra.mxu0 %v4424
        %v4557 = vpop.f32.mrf.mxu0
        %v4558 = vadd.f32 0.0, %v4557
        %v4559 = vpop.f32.mrf.mxu0
        %v4560 = vadd.f32 0.0, %v4559
        %4561 = vmatmul.bf16.gmra.mxu0 %v4425
        %v4562 = vpop.f32.mrf.mxu0
        %v4563 = vadd.f32 0.0, %v4562
        %v4564 = vpop.f32.mrf.mxu0
        %v4565 = vadd.f32 0.0, %v4564
        %4566 = vmatmul.bf16.gmra.mxu0 %v4426
        %v4567 = vpop.f32.mrf.mxu0
        %v4568 = vadd.f32 0.0, %v4567
        %v4569 = vpop.f32.mrf.mxu0
        %v4570 = vadd.f32 0.0, %v4569
        %4571 = vmatmul.bf16.gmra.mxu0 %v4427
        %v4572 = vpop.f32.mrf.mxu0
        %v4573 = vadd.f32 0.0, %v4572
        %v4574 = vpop.f32.mrf.mxu0
        %v4575 = vadd.f32 0.0, %v4574
        %4576 = vmatmul.bf16.gmra.mxu0 %v4428
        %v4577 = vpop.f32.mrf.mxu0
        %v4578 = vadd.f32 0.0, %v4577
        %v4579 = vpop.f32.mrf.mxu0
        %v4580 = vadd.f32 0.0, %v4579
        %4581 = vdwg.mxu0
        %v4582 = vadd.f32 %v4300, %v4503
        %v4583 = vadd.f32 %v4301, %v4505
        %v4584 = vadd.f32 %v4302, %v4508
        %v4585 = vadd.f32 %v4303, %v4510
        %v4586 = vadd.f32 %v4304, %v4513
        %v4587 = vadd.f32 %v4305, %v4515
        %v4588 = vadd.f32 %v4306, %v4518
        %v4589 = vadd.f32 %v4307, %v4520
        %v4590 = vadd.f32 %v4308, %v4523
        %v4591 = vadd.f32 %v4309, %v4525
        %v4592 = vadd.f32 %v4310, %v4528
        %v4593 = vadd.f32 %v4311, %v4530
        %v4594 = vadd.f32 %v4312, %v4533
        %v4595 = vadd.f32 %v4313, %v4535
        %v4596 = vadd.f32 %v4314, %v4538
        %v4597 = vadd.f32 %v4315, %v4540
        %v4598 = vadd.f32 %v4316, %v4543
        %v4599 = vadd.f32 %v4317, %v4545
        %v4600 = vadd.f32 %v4318, %v4548
        %v4601 = vadd.f32 %v4319, %v4550
        %v4602 = vadd.f32 %v4320, %v4553
        %v4603 = vadd.f32 %v4321, %v4555
        %v4604 = vadd.f32 %v4322, %v4558
        %v4605 = vadd.f32 %v4323, %v4560
        %v4606 = vadd.f32 %v4324, %v4563
        %v4607 = vadd.f32 %v4325, %v4565
        %v4608 = vadd.f32 %v4326, %v4568
        %v4609 = vadd.f32 %v4327, %v4570
        %v4610 = vadd.f32 %v4328, %v4573
        %v4611 = vadd.f32 %v4329, %v4575
        %v4612 = vadd.f32 %v4330, %v4578
        %v4613 = vadd.f32 %v4331, %v4580
        %v4614 = vld [vmem:[#allocation2 + $0xc] sm:$0xf]
        %v4615 = vld [vmem:[#allocation2 + $0x10] sm:$0xf]
        %v4616 = vld [vmem:[#allocation2 + $0x14] sm:$0xf]
        %v4617 = vld [vmem:[#allocation2 + $0x18] sm:$0xf]
        %v4618 = vld [vmem:[#allocation2 + $0x1c] sm:$0xf]
        %v4619 = vld [vmem:[#allocation2 + $0x20] sm:$0xf]
        %v4620 = vld [vmem:[#allocation2 + $0x24] sm:$0xf]
        %v4621 = vld [vmem:[#allocation2 + $0x28] sm:$0xf]
        %v4622 = vld [vmem:[#allocation2 + $0x2c] sm:$0xf]
        %v4623 = vld [vmem:[#allocation2 + $0x30] sm:$0xf]
        %v4624 = vld [vmem:[#allocation2 + $0x34] sm:$0xf]
        %v4625 = vld [vmem:[#allocation2 + $0x38] sm:$0xf]
        %v4626 = vld [vmem:[#allocation2 + $0x3c] sm:$0xf]
        %v4627 = vld [vmem:[#allocation2 + $0x40] sm:$0xf]
        %v4628 = vld [vmem:[#allocation2 + $0x44] sm:$0xf]
        %v4629 = vld [vmem:[#allocation2 + $0x48] sm:$0xf]
        %v4630 = vld [vmem:[#allocation2 + $0x4c] sm:$0xf]
        %v4631 = vld [vmem:[#allocation2 + $0x50] sm:$0xf]
        %v4632 = vld [vmem:[#allocation2 + $0x54] sm:$0xf]
        %v4633 = vld [vmem:[#allocation2 + $0x58] sm:$0xf]
        %v4634 = vld [vmem:[#allocation2 + $0x5c] sm:$0xf]
        %v4635 = vld [vmem:[#allocation2 + $0x60] sm:$0xf]
        %v4636 = vld [vmem:[#allocation2 + $0x64] sm:$0xf]
        %v4637 = vld [vmem:[#allocation2 + $0x68] sm:$0xf]
        %v4638 = vld [vmem:[#allocation2 + $0x6c] sm:$0xf]
        %v4639 = vld [vmem:[#allocation2 + $0x70] sm:$0xf]
        %v4640 = vld [vmem:[#allocation2 + $0x74] sm:$0xf]
        %v4641 = vld [vmem:[#allocation2 + $0x78] sm:$0xf]
        %v4642 = vld [vmem:[#allocation2 + $0x7c] sm:$0xf]
        %v4643 = vld [vmem:[#allocation2 + $0x80] sm:$0xf]
        %v4644 = vld [vmem:[#allocation2 + $0x84] sm:$0xf]
        %v4645 = vld [vmem:[#allocation2 + $0x88] sm:$0xf]
        %v4646 = vld [vmem:[#allocation2 + $0x8c] sm:$0x1]
        %v4647 = vsel %vm3153, %v4614, 0
        %v4648 = vsel %vm3160, %v4615, 0
        %v4649 = vsel %vm3167, %v4616, 0
        %v4650 = vsel %vm3174, %v4617, 0
        %v4651 = vsel %vm3181, %v4618, 0
        %v4652 = vsel %vm3188, %v4619, 0
        %v4653 = vsel %vm3195, %v4620, 0
        %v4654 = vsel %vm3202, %v4621, 0
        %v4655 = vsel %vm3209, %v4622, 0
        %v4656 = vsel %vm3216, %v4623, 0
        %v4657 = vsel %vm3223, %v4624, 0
        %v4658 = vsel %vm3230, %v4625, 0
        %v4659 = vsel %vm3237, %v4626, 0
        %v4660 = vsel %vm3244, %v4627, 0
        %v4661 = vsel %vm3251, %v4628, 0
        %v4662 = vsel %vm3258, %v4629, 0
        %v4663 = vsel %vm3265, %v4630, 0
        %v4664 = vsel %vm3272, %v4631, 0
        %v4665 = vsel %vm3279, %v4632, 0
        %v4666 = vsel %vm3286, %v4633, 0
        %v4667 = vsel %vm3293, %v4634, 0
        %v4668 = vsel %vm3300, %v4635, 0
        %v4669 = vsel %vm3307, %v4636, 0
        %v4670 = vsel %vm3314, %v4637, 0
        %v4671 = vsel %vm3321, %v4638, 0
        %v4672 = vsel %vm3328, %v4639, 0
        %v4673 = vsel %vm3335, %v4640, 0
        %v4674 = vsel %vm3342, %v4641, 0
        %v4675 = vsel %vm3349, %v4642, 0
        %v4676 = vsel %vm3356, %v4643, 0
        %v4677 = vsel %vm3363, %v4644, 0
        %v4678 = vsel %vm3370, %v4645, 0
        %v4679 = vsel %vm3377, %v4646, 0
        %s4680 = scalar_lea.vmem [#allocation9], 320
        %v4681 = vld [vmem:[%s4680] sm:$0xf]
        %v4682 = vld [vmem:[%s4680 + $0x4] sm:$0xf]
        %v4683 = vld [vmem:[%s4680 + $0x8] sm:$0xf]
        %v4684 = vld [vmem:[%s4680 + $0xc] sm:$0xf]
        %v4685 = vld [vmem:[%s4680 + $0x10] sm:$0xf]
        %v4686 = vld [vmem:[%s4680 + $0x14] sm:$0xf]
        %v4687 = vld [vmem:[%s4680 + $0x18] sm:$0xf]
        %v4688 = vld [vmem:[%s4680 + $0x1c] sm:$0xf]
        %v4689 = vld [vmem:[%s4680 + $0x20] sm:$0xf]
        %v4690 = vld [vmem:[%s4680 + $0x24] sm:$0xf]
        %v4691 = vld [vmem:[%s4680 + $0x28] sm:$0xf]
        %v4692 = vld [vmem:[%s4680 + $0x2c] sm:$0xf]
        %v4693 = vld [vmem:[%s4680 + $0x30] sm:$0xf]
        %v4694 = vld [vmem:[%s4680 + $0x34] sm:$0xf]
        %v4695 = vld [vmem:[%s4680 + $0x38] sm:$0xf]
        %v4696 = vld [vmem:[%s4680 + $0x3c] sm:$0xf]
        %v4730 = vunpack.c.l.b16 %v4647
        %v4731 = vunpack.c.l.b16 %v4648
        %v4732 = vunpack.c.l.b16 %v4649
        %v4733 = vunpack.c.l.b16 %v4650
        %v4734 = vunpack.c.l.b16 %v4651
        %v4735 = vunpack.c.l.b16 %v4652
        %v4736 = vunpack.c.l.b16 %v4653
        %v4737 = vunpack.c.l.b16 %v4654
        %v4738 = vunpack.c.l.b16 %v4655
        %v4739 = vunpack.c.l.b16 %v4656
        %v4740 = vunpack.c.l.b16 %v4657
        %v4741 = vunpack.c.l.b16 %v4658
        %v4742 = vunpack.c.l.b16 %v4659
        %v4743 = vunpack.c.l.b16 %v4660
        %v4744 = vunpack.c.l.b16 %v4661
        %v4745 = vunpack.c.l.b16 %v4662
        %v4746 = vunpack.c.l.b16 %v4663
        %v4747 = vunpack.c.l.b16 %v4664
        %v4748 = vunpack.c.l.b16 %v4665
        %v4749 = vunpack.c.l.b16 %v4666
        %v4750 = vunpack.c.l.b16 %v4667
        %v4751 = vunpack.c.l.b16 %v4668
        %v4752 = vunpack.c.l.b16 %v4669
        %v4753 = vunpack.c.l.b16 %v4670
        %v4754 = vunpack.c.l.b16 %v4671
        %v4755 = vunpack.c.l.b16 %v4672
        %v4756 = vunpack.c.l.b16 %v4673
        %v4757 = vunpack.c.l.b16 %v4674
        %v4758 = vunpack.c.l.b16 %v4675
        %v4759 = vunpack.c.l.b16 %v4676
        %v4760 = vunpack.c.l.b16 %v4677
        %v4761 = vunpack.c.l.b16 %v4678
        %v4762 = vunpack.c.l.b16 %v4679
        %v4763 = vpack.c.b16 %v4731, %v4730
        %v4764 = vpack.c.b16 %v4733, %v4732
        %v4765 = vpack.c.b16 %v4735, %v4734
        %v4766 = vpack.c.b16 %v4737, %v4736
        %v4767 = vpack.c.b16 %v4739, %v4738
        %v4768 = vpack.c.b16 %v4741, %v4740
        %v4769 = vpack.c.b16 %v4743, %v4742
        %v4770 = vpack.c.b16 %v4745, %v4744
        %v4771 = vpack.c.b16 %v4747, %v4746
        %v4772 = vpack.c.b16 %v4749, %v4748
        %v4773 = vpack.c.b16 %v4751, %v4750
        %v4774 = vpack.c.b16 %v4753, %v4752
        %v4775 = vpack.c.b16 %v4755, %v4754
        %v4776 = vpack.c.b16 %v4757, %v4756
        %v4777 = vpack.c.b16 %v4759, %v4758
        %v4778 = vpack.c.b16 %v4761, %v4760
        %v4779 = vpack.c.b16 %v4762, %v4762
        %v4781 = vshrl.u32 %v4763, 16
        %v4783 = vshll.u32 %v4763, 16
        %v4785 = vrot.slane %v4783, 1
        %v4786 = vor.u32 %v4781, %v4785
        %v4788 = vshll.u32 %v4764, 16
        %v4790 = vrot.slane %v4788, 1
        %v4791 = vsel %vm3511, %v4786, %v4790
        %v4792 = vshrl.u32 %v4764, 16
        %v4794 = vor.u32 %v4792, %v4790
        %v4796 = vshll.u32 %v4765, 16
        %v4798 = vrot.slane %v4796, 1
        %v4799 = vsel %vm3511, %v4794, %v4798
        %v4800 = vshrl.u32 %v4765, 16
        %v4802 = vor.u32 %v4800, %v4798
        %v4804 = vshll.u32 %v4766, 16
        %v4806 = vrot.slane %v4804, 1
        %v4807 = vsel %vm3511, %v4802, %v4806
        %v4808 = vshrl.u32 %v4766, 16
        %v4810 = vor.u32 %v4808, %v4806
        %v4812 = vshll.u32 %v4767, 16
        %v4814 = vrot.slane %v4812, 1
        %v4815 = vsel %vm3511, %v4810, %v4814
        %v4816 = vshrl.u32 %v4767, 16
        %v4818 = vor.u32 %v4816, %v4814
        %v4820 = vshll.u32 %v4768, 16
        %v4822 = vrot.slane %v4820, 1
        %v4823 = vsel %vm3511, %v4818, %v4822
        %v4824 = vshrl.u32 %v4768, 16
        %v4826 = vor.u32 %v4824, %v4822
        %v4828 = vshll.u32 %v4769, 16
        %v4830 = vrot.slane %v4828, 1
        %v4831 = vsel %vm3511, %v4826, %v4830
        %v4832 = vshrl.u32 %v4769, 16
        %v4834 = vor.u32 %v4832, %v4830
        %v4836 = vshll.u32 %v4770, 16
        %v4838 = vrot.slane %v4836, 1
        %v4839 = vsel %vm3511, %v4834, %v4838
        %v4840 = vshrl.u32 %v4770, 16
        %v4842 = vor.u32 %v4840, %v4838
        %v4844 = vshll.u32 %v4771, 16
        %v4846 = vrot.slane %v4844, 1
        %v4847 = vsel %vm3511, %v4842, %v4846
        %v4848 = vshrl.u32 %v4771, 16
        %v4850 = vor.u32 %v4848, %v4846
        %v4852 = vshll.u32 %v4772, 16
        %v4854 = vrot.slane %v4852, 1
        %v4855 = vsel %vm3511, %v4850, %v4854
        %v4856 = vshrl.u32 %v4772, 16
        %v4858 = vor.u32 %v4856, %v4854
        %v4860 = vshll.u32 %v4773, 16
        %v4862 = vrot.slane %v4860, 1
        %v4863 = vsel %vm3511, %v4858, %v4862
        %v4864 = vshrl.u32 %v4773, 16
        %v4866 = vor.u32 %v4864, %v4862
        %v4868 = vshll.u32 %v4774, 16
        %v4870 = vrot.slane %v4868, 1
        %v4871 = vsel %vm3511, %v4866, %v4870
        %v4872 = vshrl.u32 %v4774, 16
        %v4874 = vor.u32 %v4872, %v4870
        %v4876 = vshll.u32 %v4775, 16
        %v4878 = vrot.slane %v4876, 1
        %v4879 = vsel %vm3511, %v4874, %v4878
        %v4880 = vshrl.u32 %v4775, 16
        %v4882 = vor.u32 %v4880, %v4878
        %v4884 = vshll.u32 %v4776, 16
        %v4886 = vrot.slane %v4884, 1
        %v4887 = vsel %vm3511, %v4882, %v4886
        %v4888 = vshrl.u32 %v4776, 16
        %v4890 = vor.u32 %v4888, %v4886
        %v4892 = vshll.u32 %v4777, 16
        %v4894 = vrot.slane %v4892, 1
        %v4895 = vsel %vm3511, %v4890, %v4894
        %v4896 = vshrl.u32 %v4777, 16
        %v4898 = vor.u32 %v4896, %v4894
        %v4900 = vshll.u32 %v4778, 16
        %v4902 = vrot.slane %v4900, 1
        %v4903 = vsel %vm3511, %v4898, %v4902
        %v4904 = vshrl.u32 %v4778, 16
        %v4906 = vor.u32 %v4904, %v4902
        %v4908 = vshll.u32 %v4779, 16
        %v4910 = vrot.slane %v4908, 1
        %v4911 = vsel %vm3511, %v4906, %v4910
        %v4944 = vunpack.c.l.b16 %v4681
        %v4945 = vunpack.c.l.b16 %v4682
        %v4946 = vunpack.c.l.b16 %v4683
        %v4947 = vunpack.c.l.b16 %v4684
        %v4948 = vunpack.c.l.b16 %v4685
        %v4949 = vunpack.c.l.b16 %v4686
        %v4950 = vunpack.c.l.b16 %v4687
        %v4951 = vunpack.c.l.b16 %v4688
        %v4952 = vunpack.c.l.b16 %v4689
        %v4953 = vunpack.c.l.b16 %v4690
        %v4954 = vunpack.c.l.b16 %v4691
        %v4955 = vunpack.c.l.b16 %v4692
        %v4956 = vunpack.c.l.b16 %v4693
        %v4957 = vunpack.c.l.b16 %v4694
        %v4958 = vunpack.c.l.b16 %v4695
        %v4959 = vunpack.c.l.b16 %v4696
        %v4960 = vpack.c.b16 %v4945, %v4944
        %v4961 = vpack.c.b16 %v4947, %v4946
        %v4962 = vpack.c.b16 %v4949, %v4948
        %v4963 = vpack.c.b16 %v4951, %v4950
        %v4964 = vpack.c.b16 %v4953, %v4952
        %v4965 = vpack.c.b16 %v4955, %v4954
        %v4966 = vpack.c.b16 %v4957, %v4956
        %v4967 = vpack.c.b16 %v4959, %v4958
        %4976 = vmatpush.bf16.msra.mxu0 %v4967
        %4977 = vmatpush.bf16.msra.mxu0 %v4966
        %4978 = vmatpush.bf16.msra.mxu0 %v4965
        %4979 = vmatpush.bf16.msra.mxu0 %v4964
        %4980 = vmatpush.bf16.msra.mxu0 %v4963
        %4981 = vmatpush.bf16.msra.mxu0 %v4962
        %4982 = vmatpush.bf16.msra.mxu0 %v4961
        %4983 = vmatpush.bf16.msra.mxu0 %v4960
        %4984 = vmatmul.bf16.gmra.mxu0 %v4791
        %v4985 = vpop.f32.mrf.mxu0
        %v4986 = vadd.f32 0.0, %v4985
        %v4987 = vpop.f32.mrf.mxu0
        %v4988 = vadd.f32 0.0, %v4987
        %4989 = vmatmul.bf16.gmra.mxu0 %v4799
        %v4990 = vpop.f32.mrf.mxu0
        %v4991 = vadd.f32 0.0, %v4990
        %v4992 = vpop.f32.mrf.mxu0
        %v4993 = vadd.f32 0.0, %v4992
        %4994 = vmatmul.bf16.gmra.mxu0 %v4807
        %v4995 = vpop.f32.mrf.mxu0
        %v4996 = vadd.f32 0.0, %v4995
        %v4997 = vpop.f32.mrf.mxu0
        %v4998 = vadd.f32 0.0, %v4997
        %4999 = vmatmul.bf16.gmra.mxu0 %v4815
        %v5000 = vpop.f32.mrf.mxu0
        %v5001 = vadd.f32 0.0, %v5000
        %v5002 = vpop.f32.mrf.mxu0
        %v5003 = vadd.f32 0.0, %v5002
        %5004 = vmatmul.bf16.gmra.mxu0 %v4823
        %v5005 = vpop.f32.mrf.mxu0
        %v5006 = vadd.f32 0.0, %v5005
        %v5007 = vpop.f32.mrf.mxu0
        %v5008 = vadd.f32 0.0, %v5007
        %5009 = vmatmul.bf16.gmra.mxu0 %v4831
        %v5010 = vpop.f32.mrf.mxu0
        %v5011 = vadd.f32 0.0, %v5010
        %v5012 = vpop.f32.mrf.mxu0
        %v5013 = vadd.f32 0.0, %v5012
        %5014 = vmatmul.bf16.gmra.mxu0 %v4839
        %v5015 = vpop.f32.mrf.mxu0
        %v5016 = vadd.f32 0.0, %v5015
        %v5017 = vpop.f32.mrf.mxu0
        %v5018 = vadd.f32 0.0, %v5017
        %5019 = vmatmul.bf16.gmra.mxu0 %v4847
        %v5020 = vpop.f32.mrf.mxu0
        %v5021 = vadd.f32 0.0, %v5020
        %v5022 = vpop.f32.mrf.mxu0
        %v5023 = vadd.f32 0.0, %v5022
        %5024 = vmatmul.bf16.gmra.mxu0 %v4855
        %v5025 = vpop.f32.mrf.mxu0
        %v5026 = vadd.f32 0.0, %v5025
        %v5027 = vpop.f32.mrf.mxu0
        %v5028 = vadd.f32 0.0, %v5027
        %5029 = vmatmul.bf16.gmra.mxu0 %v4863
        %v5030 = vpop.f32.mrf.mxu0
        %v5031 = vadd.f32 0.0, %v5030
        %v5032 = vpop.f32.mrf.mxu0
        %v5033 = vadd.f32 0.0, %v5032
        %5034 = vmatmul.bf16.gmra.mxu0 %v4871
        %v5035 = vpop.f32.mrf.mxu0
        %v5036 = vadd.f32 0.0, %v5035
        %v5037 = vpop.f32.mrf.mxu0
        %v5038 = vadd.f32 0.0, %v5037
        %5039 = vmatmul.bf16.gmra.mxu0 %v4879
        %v5040 = vpop.f32.mrf.mxu0
        %v5041 = vadd.f32 0.0, %v5040
        %v5042 = vpop.f32.mrf.mxu0
        %v5043 = vadd.f32 0.0, %v5042
        %5044 = vmatmul.bf16.gmra.mxu0 %v4887
        %v5045 = vpop.f32.mrf.mxu0
        %v5046 = vadd.f32 0.0, %v5045
        %v5047 = vpop.f32.mrf.mxu0
        %v5048 = vadd.f32 0.0, %v5047
        %5049 = vmatmul.bf16.gmra.mxu0 %v4895
        %v5050 = vpop.f32.mrf.mxu0
        %v5051 = vadd.f32 0.0, %v5050
        %v5052 = vpop.f32.mrf.mxu0
        %v5053 = vadd.f32 0.0, %v5052
        %5054 = vmatmul.bf16.gmra.mxu0 %v4903
        %v5055 = vpop.f32.mrf.mxu0
        %v5056 = vadd.f32 0.0, %v5055
        %v5057 = vpop.f32.mrf.mxu0
        %v5058 = vadd.f32 0.0, %v5057
        %5059 = vmatmul.bf16.gmra.mxu0 %v4911
        %v5060 = vpop.f32.mrf.mxu0
        %v5061 = vadd.f32 0.0, %v5060
        %v5062 = vpop.f32.mrf.mxu0
        %v5063 = vadd.f32 0.0, %v5062
        %5064 = vdwg.mxu0
        %v5065 = vadd.f32 %v4582, %v4986
        %v5066 = vadd.f32 %v4583, %v4988
        %v5067 = vadd.f32 %v4584, %v4991
        %v5068 = vadd.f32 %v4585, %v4993
        %v5069 = vadd.f32 %v4586, %v4996
        %v5070 = vadd.f32 %v4587, %v4998
        %v5071 = vadd.f32 %v4588, %v5001
        %v5072 = vadd.f32 %v4589, %v5003
        %v5073 = vadd.f32 %v4590, %v5006
        %v5074 = vadd.f32 %v4591, %v5008
        %v5075 = vadd.f32 %v4592, %v5011
        %v5076 = vadd.f32 %v4593, %v5013
        %v5077 = vadd.f32 %v4594, %v5016
        %v5078 = vadd.f32 %v4595, %v5018
        %v5079 = vadd.f32 %v4596, %v5021
        %v5080 = vadd.f32 %v4597, %v5023
        %v5081 = vadd.f32 %v4598, %v5026
        %v5082 = vadd.f32 %v4599, %v5028
        %v5083 = vadd.f32 %v4600, %v5031
        %v5084 = vadd.f32 %v4601, %v5033
        %v5085 = vadd.f32 %v4602, %v5036
        %v5086 = vadd.f32 %v4603, %v5038
        %v5087 = vadd.f32 %v4604, %v5041
        %v5088 = vadd.f32 %v4605, %v5043
        %v5089 = vadd.f32 %v4606, %v5046
        %v5090 = vadd.f32 %v4607, %v5048
        %v5091 = vadd.f32 %v4608, %v5051
        %v5092 = vadd.f32 %v4609, %v5053
        %v5093 = vadd.f32 %v4610, %v5056
        %v5094 = vadd.f32 %v4611, %v5058
        %v5095 = vadd.f32 %v4612, %v5061
        %v5096 = vadd.f32 %v4613, %v5063
        %v5097 = vld [vmem:[#allocation2 + $0x10] sm:$0x8]
        %v5098 = vld [vmem:[#allocation2 + $0x14] sm:$0xf]
        %v5099 = vld [vmem:[#allocation2 + $0x18] sm:$0xf]
        %v5100 = vld [vmem:[#allocation2 + $0x1c] sm:$0xf]
        %v5101 = vld [vmem:[#allocation2 + $0x20] sm:$0xf]
        %v5102 = vld [vmem:[#allocation2 + $0x24] sm:$0xf]
        %v5103 = vld [vmem:[#allocation2 + $0x28] sm:$0xf]
        %v5104 = vld [vmem:[#allocation2 + $0x2c] sm:$0xf]
        %v5105 = vld [vmem:[#allocation2 + $0x30] sm:$0xf]
        %v5106 = vld [vmem:[#allocation2 + $0x34] sm:$0xf]
        %v5107 = vld [vmem:[#allocation2 + $0x38] sm:$0xf]
        %v5108 = vld [vmem:[#allocation2 + $0x3c] sm:$0xf]
        %v5109 = vld [vmem:[#allocation2 + $0x40] sm:$0xf]
        %v5110 = vld [vmem:[#allocation2 + $0x44] sm:$0xf]
        %v5111 = vld [vmem:[#allocation2 + $0x48] sm:$0xf]
        %v5112 = vld [vmem:[#allocation2 + $0x4c] sm:$0xf]
        %v5113 = vld [vmem:[#allocation2 + $0x50] sm:$0xf]
        %v5114 = vld [vmem:[#allocation2 + $0x54] sm:$0xf]
        %v5115 = vld [vmem:[#allocation2 + $0x58] sm:$0xf]
        %v5116 = vld [vmem:[#allocation2 + $0x5c] sm:$0xf]
        %v5117 = vld [vmem:[#allocation2 + $0x60] sm:$0xf]
        %v5118 = vld [vmem:[#allocation2 + $0x64] sm:$0xf]
        %v5119 = vld [vmem:[#allocation2 + $0x68] sm:$0xf]
        %v5120 = vld [vmem:[#allocation2 + $0x6c] sm:$0xf]
        %v5121 = vld [vmem:[#allocation2 + $0x70] sm:$0xf]
        %v5122 = vld [vmem:[#allocation2 + $0x74] sm:$0xf]
        %v5123 = vld [vmem:[#allocation2 + $0x78] sm:$0xf]
        %v5124 = vld [vmem:[#allocation2 + $0x7c] sm:$0xf]
        %v5125 = vld [vmem:[#allocation2 + $0x80] sm:$0xf]
        %v5126 = vld [vmem:[#allocation2 + $0x84] sm:$0xf]
        %v5127 = vld [vmem:[#allocation2 + $0x88] sm:$0xf]
        %v5128 = vld [vmem:[#allocation2 + $0x8c] sm:$0xf]
        %v5129 = vld [vmem:[#allocation2 + $0x90] sm:$0xf]
        %v5130 = vsel %vm1783, %v5097, 0
        %v5131 = vsel %vm1790, %v5098, 0
        %v5132 = vsel %vm1797, %v5099, 0
        %v5133 = vsel %vm1804, %v5100, 0
        %v5134 = vsel %vm1811, %v5101, 0
        %v5135 = vsel %vm1818, %v5102, 0
        %v5136 = vsel %vm1825, %v5103, 0
        %v5137 = vsel %vm1832, %v5104, 0
        %v5138 = vsel %vm1839, %v5105, 0
        %v5139 = vsel %vm1846, %v5106, 0
        %v5140 = vsel %vm1853, %v5107, 0
        %v5141 = vsel %vm1860, %v5108, 0
        %v5142 = vsel %vm1867, %v5109, 0
        %v5143 = vsel %vm1874, %v5110, 0
        %v5144 = vsel %vm1881, %v5111, 0
        %v5145 = vsel %vm1888, %v5112, 0
        %v5146 = vsel %vm1895, %v5113, 0
        %v5147 = vsel %vm1902, %v5114, 0
        %v5148 = vsel %vm1909, %v5115, 0
        %v5149 = vsel %vm1916, %v5116, 0
        %v5150 = vsel %vm1923, %v5117, 0
        %v5151 = vsel %vm1930, %v5118, 0
        %v5152 = vsel %vm1937, %v5119, 0
        %v5153 = vsel %vm1944, %v5120, 0
        %v5154 = vsel %vm1951, %v5121, 0
        %v5155 = vsel %vm1958, %v5122, 0
        %v5156 = vsel %vm1965, %v5123, 0
        %v5157 = vsel %vm1972, %v5124, 0
        %v5158 = vsel %vm1979, %v5125, 0
        %v5159 = vsel %vm1986, %v5126, 0
        %v5160 = vsel %vm1993, %v5127, 0
        %v5161 = vsel %vm2000, %v5128, 0
        %v5162 = vsel %vm2007, %v5129, 0
        %s5163 = scalar_lea.vmem [#allocation9], 384
        %v5164 = vld [vmem:[%s5163] sm:$0xf]
        %v5165 = vld [vmem:[%s5163 + $0x4] sm:$0xf]
        %v5166 = vld [vmem:[%s5163 + $0x8] sm:$0xf]
        %v5167 = vld [vmem:[%s5163 + $0xc] sm:$0xf]
        %v5168 = vld [vmem:[%s5163 + $0x10] sm:$0xf]
        %v5169 = vld [vmem:[%s5163 + $0x14] sm:$0xf]
        %v5170 = vld [vmem:[%s5163 + $0x18] sm:$0xf]
        %v5171 = vld [vmem:[%s5163 + $0x1c] sm:$0xf]
        %v5172 = vld [vmem:[%s5163 + $0x20] sm:$0xf]
        %v5173 = vld [vmem:[%s5163 + $0x24] sm:$0xf]
        %v5174 = vld [vmem:[%s5163 + $0x28] sm:$0xf]
        %v5175 = vld [vmem:[%s5163 + $0x2c] sm:$0xf]
        %v5176 = vld [vmem:[%s5163 + $0x30] sm:$0xf]
        %v5177 = vld [vmem:[%s5163 + $0x34] sm:$0xf]
        %v5178 = vld [vmem:[%s5163 + $0x38] sm:$0xf]
        %v5179 = vld [vmem:[%s5163 + $0x3c] sm:$0xf]
        %v5213 = vunpack.c.l.b16 %v5130
        %v5214 = vunpack.c.l.b16 %v5131
        %v5215 = vunpack.c.l.b16 %v5132
        %v5216 = vunpack.c.l.b16 %v5133
        %v5217 = vunpack.c.l.b16 %v5134
        %v5218 = vunpack.c.l.b16 %v5135
        %v5219 = vunpack.c.l.b16 %v5136
        %v5220 = vunpack.c.l.b16 %v5137
        %v5221 = vunpack.c.l.b16 %v5138
        %v5222 = vunpack.c.l.b16 %v5139
        %v5223 = vunpack.c.l.b16 %v5140
        %v5224 = vunpack.c.l.b16 %v5141
        %v5225 = vunpack.c.l.b16 %v5142
        %v5226 = vunpack.c.l.b16 %v5143
        %v5227 = vunpack.c.l.b16 %v5144
        %v5228 = vunpack.c.l.b16 %v5145
        %v5229 = vunpack.c.l.b16 %v5146
        %v5230 = vunpack.c.l.b16 %v5147
        %v5231 = vunpack.c.l.b16 %v5148
        %v5232 = vunpack.c.l.b16 %v5149
        %v5233 = vunpack.c.l.b16 %v5150
        %v5234 = vunpack.c.l.b16 %v5151
        %v5235 = vunpack.c.l.b16 %v5152
        %v5236 = vunpack.c.l.b16 %v5153
        %v5237 = vunpack.c.l.b16 %v5154
        %v5238 = vunpack.c.l.b16 %v5155
        %v5239 = vunpack.c.l.b16 %v5156
        %v5240 = vunpack.c.l.b16 %v5157
        %v5241 = vunpack.c.l.b16 %v5158
        %v5242 = vunpack.c.l.b16 %v5159
        %v5243 = vunpack.c.l.b16 %v5160
        %v5244 = vunpack.c.l.b16 %v5161
        %v5245 = vunpack.c.l.b16 %v5162
        %v5246 = vpack.c.b16 %v5214, %v5213
        %v5247 = vpack.c.b16 %v5216, %v5215
        %v5248 = vpack.c.b16 %v5218, %v5217
        %v5249 = vpack.c.b16 %v5220, %v5219
        %v5250 = vpack.c.b16 %v5222, %v5221
        %v5251 = vpack.c.b16 %v5224, %v5223
        %v5252 = vpack.c.b16 %v5226, %v5225
        %v5253 = vpack.c.b16 %v5228, %v5227
        %v5254 = vpack.c.b16 %v5230, %v5229
        %v5255 = vpack.c.b16 %v5232, %v5231
        %v5256 = vpack.c.b16 %v5234, %v5233
        %v5257 = vpack.c.b16 %v5236, %v5235
        %v5258 = vpack.c.b16 %v5238, %v5237
        %v5259 = vpack.c.b16 %v5240, %v5239
        %v5260 = vpack.c.b16 %v5242, %v5241
        %v5261 = vpack.c.b16 %v5244, %v5243
        %v5262 = vpack.c.b16 %v5245, %v5245
        %v5264 = vshrl.u32 %v5246, 16
        %v5266 = vrot.slane %v5264, 3
        %v5267 = vshll.u32 %v5246, 16
        %v5269 = vrot.slane %v5267, 4
        %v5270 = vor.u32 %v5266, %v5269
        %v5272 = vshrl.u32 %v5247, 16
        %v5274 = vrot.slane %v5272, 3
        %v5275 = vshll.u32 %v5247, 16
        %v5277 = vrot.slane %v5275, 4
        %v5278 = vor.u32 %v5274, %v5277
        %v5279 = vsel %vm2390, %v5270, %v5278
        %v5281 = vshrl.u32 %v5248, 16
        %v5283 = vrot.slane %v5281, 3
        %v5284 = vshll.u32 %v5248, 16
        %v5286 = vrot.slane %v5284, 4
        %v5287 = vor.u32 %v5283, %v5286
        %v5288 = vsel %vm2390, %v5278, %v5287
        %v5290 = vshrl.u32 %v5249, 16
        %v5292 = vrot.slane %v5290, 3
        %v5293 = vshll.u32 %v5249, 16
        %v5295 = vrot.slane %v5293, 4
        %v5296 = vor.u32 %v5292, %v5295
        %v5297 = vsel %vm2390, %v5287, %v5296
        %v5299 = vshrl.u32 %v5250, 16
        %v5301 = vrot.slane %v5299, 3
        %v5302 = vshll.u32 %v5250, 16
        %v5304 = vrot.slane %v5302, 4
        %v5305 = vor.u32 %v5301, %v5304
        %v5306 = vsel %vm2390, %v5296, %v5305
        %v5308 = vshrl.u32 %v5251, 16
        %v5310 = vrot.slane %v5308, 3
        %v5311 = vshll.u32 %v5251, 16
        %v5313 = vrot.slane %v5311, 4
        %v5314 = vor.u32 %v5310, %v5313
        %v5315 = vsel %vm2390, %v5305, %v5314
        %v5317 = vshrl.u32 %v5252, 16
        %v5319 = vrot.slane %v5317, 3
        %v5320 = vshll.u32 %v5252, 16
        %v5322 = vrot.slane %v5320, 4
        %v5323 = vor.u32 %v5319, %v5322
        %v5324 = vsel %vm2390, %v5314, %v5323
        %v5326 = vshrl.u32 %v5253, 16
        %v5328 = vrot.slane %v5326, 3
        %v5329 = vshll.u32 %v5253, 16
        %v5331 = vrot.slane %v5329, 4
        %v5332 = vor.u32 %v5328, %v5331
        %v5333 = vsel %vm2390, %v5323, %v5332
        %v5335 = vshrl.u32 %v5254, 16
        %v5337 = vrot.slane %v5335, 3
        %v5338 = vshll.u32 %v5254, 16
        %v5340 = vrot.slane %v5338, 4
        %v5341 = vor.u32 %v5337, %v5340
        %v5342 = vsel %vm2390, %v5332, %v5341
        %v5344 = vshrl.u32 %v5255, 16
        %v5346 = vrot.slane %v5344, 3
        %v5347 = vshll.u32 %v5255, 16
        %v5349 = vrot.slane %v5347, 4
        %v5350 = vor.u32 %v5346, %v5349
        %v5351 = vsel %vm2390, %v5341, %v5350
        %v5353 = vshrl.u32 %v5256, 16
        %v5355 = vrot.slane %v5353, 3
        %v5356 = vshll.u32 %v5256, 16
        %v5358 = vrot.slane %v5356, 4
        %v5359 = vor.u32 %v5355, %v5358
        %v5360 = vsel %vm2390, %v5350, %v5359
        %v5362 = vshrl.u32 %v5257, 16
        %v5364 = vrot.slane %v5362, 3
        %v5365 = vshll.u32 %v5257, 16
        %v5367 = vrot.slane %v5365, 4
        %v5368 = vor.u32 %v5364, %v5367
        %v5369 = vsel %vm2390, %v5359, %v5368
        %v5371 = vshrl.u32 %v5258, 16
        %v5373 = vrot.slane %v5371, 3
        %v5374 = vshll.u32 %v5258, 16
        %v5376 = vrot.slane %v5374, 4
        %v5377 = vor.u32 %v5373, %v5376
        %v5378 = vsel %vm2390, %v5368, %v5377
        %v5380 = vshrl.u32 %v5259, 16
        %v5382 = vrot.slane %v5380, 3
        %v5383 = vshll.u32 %v5259, 16
        %v5385 = vrot.slane %v5383, 4
        %v5386 = vor.u32 %v5382, %v5385
        %v5387 = vsel %vm2390, %v5377, %v5386
        %v5389 = vshrl.u32 %v5260, 16
        %v5391 = vrot.slane %v5389, 3
        %v5392 = vshll.u32 %v5260, 16
        %v5394 = vrot.slane %v5392, 4
        %v5395 = vor.u32 %v5391, %v5394
        %v5396 = vsel %vm2390, %v5386, %v5395
        %v5398 = vshrl.u32 %v5261, 16
        %v5400 = vrot.slane %v5398, 3
        %v5401 = vshll.u32 %v5261, 16
        %v5403 = vrot.slane %v5401, 4
        %v5404 = vor.u32 %v5400, %v5403
        %v5405 = vsel %vm2390, %v5395, %v5404
        %v5407 = vshrl.u32 %v5262, 16
        %v5409 = vrot.slane %v5407, 3
        %v5410 = vshll.u32 %v5262, 16
        %v5412 = vrot.slane %v5410, 4
        %v5413 = vor.u32 %v5409, %v5412
        %v5414 = vsel %vm2390, %v5404, %v5413
        %v5447 = vunpack.c.l.b16 %v5164
        %v5448 = vunpack.c.l.b16 %v5165
        %v5449 = vunpack.c.l.b16 %v5166
        %v5450 = vunpack.c.l.b16 %v5167
        %v5451 = vunpack.c.l.b16 %v5168
        %v5452 = vunpack.c.l.b16 %v5169
        %v5453 = vunpack.c.l.b16 %v5170
        %v5454 = vunpack.c.l.b16 %v5171
        %v5455 = vunpack.c.l.b16 %v5172
        %v5456 = vunpack.c.l.b16 %v5173
        %v5457 = vunpack.c.l.b16 %v5174
        %v5458 = vunpack.c.l.b16 %v5175
        %v5459 = vunpack.c.l.b16 %v5176
        %v5460 = vunpack.c.l.b16 %v5177
        %v5461 = vunpack.c.l.b16 %v5178
        %v5462 = vunpack.c.l.b16 %v5179
        %v5463 = vpack.c.b16 %v5448, %v5447
        %v5464 = vpack.c.b16 %v5450, %v5449
        %v5465 = vpack.c.b16 %v5452, %v5451
        %v5466 = vpack.c.b16 %v5454, %v5453
        %v5467 = vpack.c.b16 %v5456, %v5455
        %v5468 = vpack.c.b16 %v5458, %v5457
        %v5469 = vpack.c.b16 %v5460, %v5459
        %v5470 = vpack.c.b16 %v5462, %v5461
        %5479 = vmatpush.bf16.msra.mxu0 %v5470
        %5480 = vmatpush.bf16.msra.mxu0 %v5469
        %5481 = vmatpush.bf16.msra.mxu0 %v5468
        %5482 = vmatpush.bf16.msra.mxu0 %v5467
        %5483 = vmatpush.bf16.msra.mxu0 %v5466
        %5484 = vmatpush.bf16.msra.mxu0 %v5465
        %5485 = vmatpush.bf16.msra.mxu0 %v5464
        %5486 = vmatpush.bf16.msra.mxu0 %v5463
        %5487 = vmatmul.bf16.gmra.mxu0 %v5279
        %v5488 = vpop.f32.mrf.mxu0
        %v5489 = vadd.f32 0.0, %v5488
        %v5490 = vpop.f32.mrf.mxu0
        %v5491 = vadd.f32 0.0, %v5490
        %5492 = vmatmul.bf16.gmra.mxu0 %v5288
        %v5493 = vpop.f32.mrf.mxu0
        %v5494 = vadd.f32 0.0, %v5493
        %v5495 = vpop.f32.mrf.mxu0
        %v5496 = vadd.f32 0.0, %v5495
        %5497 = vmatmul.bf16.gmra.mxu0 %v5297
        %v5498 = vpop.f32.mrf.mxu0
        %v5499 = vadd.f32 0.0, %v5498
        %v5500 = vpop.f32.mrf.mxu0
        %v5501 = vadd.f32 0.0, %v5500
        %5502 = vmatmul.bf16.gmra.mxu0 %v5306
        %v5503 = vpop.f32.mrf.mxu0
        %v5504 = vadd.f32 0.0, %v5503
        %v5505 = vpop.f32.mrf.mxu0
        %v5506 = vadd.f32 0.0, %v5505
        %5507 = vmatmul.bf16.gmra.mxu0 %v5315
        %v5508 = vpop.f32.mrf.mxu0
        %v5509 = vadd.f32 0.0, %v5508
        %v5510 = vpop.f32.mrf.mxu0
        %v5511 = vadd.f32 0.0, %v5510
        %5512 = vmatmul.bf16.gmra.mxu0 %v5324
        %v5513 = vpop.f32.mrf.mxu0
        %v5514 = vadd.f32 0.0, %v5513
        %v5515 = vpop.f32.mrf.mxu0
        %v5516 = vadd.f32 0.0, %v5515
        %5517 = vmatmul.bf16.gmra.mxu0 %v5333
        %v5518 = vpop.f32.mrf.mxu0
        %v5519 = vadd.f32 0.0, %v5518
        %v5520 = vpop.f32.mrf.mxu0
        %v5521 = vadd.f32 0.0, %v5520
        %5522 = vmatmul.bf16.gmra.mxu0 %v5342
        %v5523 = vpop.f32.mrf.mxu0
        %v5524 = vadd.f32 0.0, %v5523
        %v5525 = vpop.f32.mrf.mxu0
        %v5526 = vadd.f32 0.0, %v5525
        %5527 = vmatmul.bf16.gmra.mxu0 %v5351
        %v5528 = vpop.f32.mrf.mxu0
        %v5529 = vadd.f32 0.0, %v5528
        %v5530 = vpop.f32.mrf.mxu0
        %v5531 = vadd.f32 0.0, %v5530
        %5532 = vmatmul.bf16.gmra.mxu0 %v5360
        %v5533 = vpop.f32.mrf.mxu0
        %v5534 = vadd.f32 0.0, %v5533
        %v5535 = vpop.f32.mrf.mxu0
        %v5536 = vadd.f32 0.0, %v5535
        %5537 = vmatmul.bf16.gmra.mxu0 %v5369
        %v5538 = vpop.f32.mrf.mxu0
        %v5539 = vadd.f32 0.0, %v5538
        %v5540 = vpop.f32.mrf.mxu0
        %v5541 = vadd.f32 0.0, %v5540
        %5542 = vmatmul.bf16.gmra.mxu0 %v5378
        %v5543 = vpop.f32.mrf.mxu0
        %v5544 = vadd.f32 0.0, %v5543
        %v5545 = vpop.f32.mrf.mxu0
        %v5546 = vadd.f32 0.0, %v5545
        %5547 = vmatmul.bf16.gmra.mxu0 %v5387
        %v5548 = vpop.f32.mrf.mxu0
        %v5549 = vadd.f32 0.0, %v5548
        %v5550 = vpop.f32.mrf.mxu0
        %v5551 = vadd.f32 0.0, %v5550
        %5552 = vmatmul.bf16.gmra.mxu0 %v5396
        %v5553 = vpop.f32.mrf.mxu0
        %v5554 = vadd.f32 0.0, %v5553
        %v5555 = vpop.f32.mrf.mxu0
        %v5556 = vadd.f32 0.0, %v5555
        %5557 = vmatmul.bf16.gmra.mxu0 %v5405
        %v5558 = vpop.f32.mrf.mxu0
        %v5559 = vadd.f32 0.0, %v5558
        %v5560 = vpop.f32.mrf.mxu0
        %v5561 = vadd.f32 0.0, %v5560
        %5562 = vmatmul.bf16.gmra.mxu0 %v5414
        %v5563 = vpop.f32.mrf.mxu0
        %v5564 = vadd.f32 0.0, %v5563
        %v5565 = vpop.f32.mrf.mxu0
        %v5566 = vadd.f32 0.0, %v5565
        %5567 = vdwg.mxu0
        %v5568 = vadd.f32 %v5065, %v5489
        %v5569 = vadd.f32 %v5066, %v5491
        %v5570 = vadd.f32 %v5067, %v5494
        %v5571 = vadd.f32 %v5068, %v5496
        %v5572 = vadd.f32 %v5069, %v5499
        %v5573 = vadd.f32 %v5070, %v5501
        %v5574 = vadd.f32 %v5071, %v5504
        %v5575 = vadd.f32 %v5072, %v5506
        %v5576 = vadd.f32 %v5073, %v5509
        %v5577 = vadd.f32 %v5074, %v5511
        %v5578 = vadd.f32 %v5075, %v5514
        %v5579 = vadd.f32 %v5076, %v5516
        %v5580 = vadd.f32 %v5077, %v5519
        %v5581 = vadd.f32 %v5078, %v5521
        %v5582 = vadd.f32 %v5079, %v5524
        %v5583 = vadd.f32 %v5080, %v5526
        %v5584 = vadd.f32 %v5081, %v5529
        %v5585 = vadd.f32 %v5082, %v5531
        %v5586 = vadd.f32 %v5083, %v5534
        %v5587 = vadd.f32 %v5084, %v5536
        %v5588 = vadd.f32 %v5085, %v5539
        %v5589 = vadd.f32 %v5086, %v5541
        %v5590 = vadd.f32 %v5087, %v5544
        %v5591 = vadd.f32 %v5088, %v5546
        %v5592 = vadd.f32 %v5089, %v5549
        %v5593 = vadd.f32 %v5090, %v5551
        %v5594 = vadd.f32 %v5091, %v5554
        %v5595 = vadd.f32 %v5092, %v5556
        %v5596 = vadd.f32 %v5093, %v5559
        %v5597 = vadd.f32 %v5094, %v5561
        %v5598 = vadd.f32 %v5095, %v5564
        %v5599 = vadd.f32 %v5096, %v5566
        %s5600 = scalar_lea.vmem [#allocation9], 448
        %v5601 = vld [vmem:[%s5600] sm:$0xf]
        %v5602 = vld [vmem:[%s5600 + $0x4] sm:$0xf]
        %v5603 = vld [vmem:[%s5600 + $0x8] sm:$0xf]
        %v5604 = vld [vmem:[%s5600 + $0xc] sm:$0xf]
        %v5605 = vld [vmem:[%s5600 + $0x10] sm:$0xf]
        %v5606 = vld [vmem:[%s5600 + $0x14] sm:$0xf]
        %v5607 = vld [vmem:[%s5600 + $0x18] sm:$0xf]
        %v5608 = vld [vmem:[%s5600 + $0x1c] sm:$0xf]
        %v5609 = vld [vmem:[%s5600 + $0x20] sm:$0xf]
        %v5610 = vld [vmem:[%s5600 + $0x24] sm:$0xf]
        %v5611 = vld [vmem:[%s5600 + $0x28] sm:$0xf]
        %v5612 = vld [vmem:[%s5600 + $0x2c] sm:$0xf]
        %v5613 = vld [vmem:[%s5600 + $0x30] sm:$0xf]
        %v5614 = vld [vmem:[%s5600 + $0x34] sm:$0xf]
        %v5615 = vld [vmem:[%s5600 + $0x38] sm:$0xf]
        %v5616 = vld [vmem:[%s5600 + $0x3c] sm:$0xf]
        %v5649 = vunpack.c.l.b16 %v5098
        %v5650 = vunpack.c.l.b16 %v5099
        %v5651 = vunpack.c.l.b16 %v5100
        %v5652 = vunpack.c.l.b16 %v5101
        %v5653 = vunpack.c.l.b16 %v5102
        %v5654 = vunpack.c.l.b16 %v5103
        %v5655 = vunpack.c.l.b16 %v5104
        %v5656 = vunpack.c.l.b16 %v5105
        %v5657 = vunpack.c.l.b16 %v5106
        %v5658 = vunpack.c.l.b16 %v5107
        %v5659 = vunpack.c.l.b16 %v5108
        %v5660 = vunpack.c.l.b16 %v5109
        %v5661 = vunpack.c.l.b16 %v5110
        %v5662 = vunpack.c.l.b16 %v5111
        %v5663 = vunpack.c.l.b16 %v5112
        %v5664 = vunpack.c.l.b16 %v5113
        %v5665 = vunpack.c.l.b16 %v5114
        %v5666 = vunpack.c.l.b16 %v5115
        %v5667 = vunpack.c.l.b16 %v5116
        %v5668 = vunpack.c.l.b16 %v5117
        %v5669 = vunpack.c.l.b16 %v5118
        %v5670 = vunpack.c.l.b16 %v5119
        %v5671 = vunpack.c.l.b16 %v5120
        %v5672 = vunpack.c.l.b16 %v5121
        %v5673 = vunpack.c.l.b16 %v5122
        %v5674 = vunpack.c.l.b16 %v5123
        %v5675 = vunpack.c.l.b16 %v5124
        %v5676 = vunpack.c.l.b16 %v5125
        %v5677 = vunpack.c.l.b16 %v5126
        %v5678 = vunpack.c.l.b16 %v5127
        %v5679 = vunpack.c.l.b16 %v5128
        %v5680 = vunpack.c.l.b16 %v5129
        %v5681 = vpack.c.b16 %v5650, %v5649
        %v5682 = vpack.c.b16 %v5652, %v5651
        %v5683 = vpack.c.b16 %v5654, %v5653
        %v5684 = vpack.c.b16 %v5656, %v5655
        %v5685 = vpack.c.b16 %v5658, %v5657
        %v5686 = vpack.c.b16 %v5660, %v5659
        %v5687 = vpack.c.b16 %v5662, %v5661
        %v5688 = vpack.c.b16 %v5664, %v5663
        %v5689 = vpack.c.b16 %v5666, %v5665
        %v5690 = vpack.c.b16 %v5668, %v5667
        %v5691 = vpack.c.b16 %v5670, %v5669
        %v5692 = vpack.c.b16 %v5672, %v5671
        %v5693 = vpack.c.b16 %v5674, %v5673
        %v5694 = vpack.c.b16 %v5676, %v5675
        %v5695 = vpack.c.b16 %v5678, %v5677
        %v5696 = vpack.c.b16 %v5680, %v5679
        %v5729 = vunpack.c.l.b16 %v5601
        %v5730 = vunpack.c.l.b16 %v5602
        %v5731 = vunpack.c.l.b16 %v5603
        %v5732 = vunpack.c.l.b16 %v5604
        %v5733 = vunpack.c.l.b16 %v5605
        %v5734 = vunpack.c.l.b16 %v5606
        %v5735 = vunpack.c.l.b16 %v5607
        %v5736 = vunpack.c.l.b16 %v5608
        %v5737 = vunpack.c.l.b16 %v5609
        %v5738 = vunpack.c.l.b16 %v5610
        %v5739 = vunpack.c.l.b16 %v5611
        %v5740 = vunpack.c.l.b16 %v5612
        %v5741 = vunpack.c.l.b16 %v5613
        %v5742 = vunpack.c.l.b16 %v5614
        %v5743 = vunpack.c.l.b16 %v5615
        %v5744 = vunpack.c.l.b16 %v5616
        %v5745 = vpack.c.b16 %v5730, %v5729
        %v5746 = vpack.c.b16 %v5732, %v5731
        %v5747 = vpack.c.b16 %v5734, %v5733
        %v5748 = vpack.c.b16 %v5736, %v5735
        %v5749 = vpack.c.b16 %v5738, %v5737
        %v5750 = vpack.c.b16 %v5740, %v5739
        %v5751 = vpack.c.b16 %v5742, %v5741
        %v5752 = vpack.c.b16 %v5744, %v5743
        %5761 = vmatpush.bf16.msra.mxu0 %v5752
        %5762 = vmatpush.bf16.msra.mxu0 %v5751
        %5763 = vmatpush.bf16.msra.mxu0 %v5750
        %5764 = vmatpush.bf16.msra.mxu0 %v5749
        %5765 = vmatpush.bf16.msra.mxu0 %v5748
        %5766 = vmatpush.bf16.msra.mxu0 %v5747
        %5767 = vmatpush.bf16.msra.mxu0 %v5746
        %5768 = vmatpush.bf16.msra.mxu0 %v5745
        %5769 = vmatmul.bf16.gmra.mxu0 %v5681
        %v5770 = vpop.f32.mrf.mxu0
        %v5771 = vadd.f32 0.0, %v5770
        %v5772 = vpop.f32.mrf.mxu0
        %v5773 = vadd.f32 0.0, %v5772
        %5774 = vmatmul.bf16.gmra.mxu0 %v5682
        %v5775 = vpop.f32.mrf.mxu0
        %v5776 = vadd.f32 0.0, %v5775
        %v5777 = vpop.f32.mrf.mxu0
        %v5778 = vadd.f32 0.0, %v5777
        %5779 = vmatmul.bf16.gmra.mxu0 %v5683
        %v5780 = vpop.f32.mrf.mxu0
        %v5781 = vadd.f32 0.0, %v5780
        %v5782 = vpop.f32.mrf.mxu0
        %v5783 = vadd.f32 0.0, %v5782
        %5784 = vmatmul.bf16.gmra.mxu0 %v5684
        %v5785 = vpop.f32.mrf.mxu0
        %v5786 = vadd.f32 0.0, %v5785
        %v5787 = vpop.f32.mrf.mxu0
        %v5788 = vadd.f32 0.0, %v5787
        %5789 = vmatmul.bf16.gmra.mxu0 %v5685
        %v5790 = vpop.f32.mrf.mxu0
        %v5791 = vadd.f32 0.0, %v5790
        %v5792 = vpop.f32.mrf.mxu0
        %v5793 = vadd.f32 0.0, %v5792
        %5794 = vmatmul.bf16.gmra.mxu0 %v5686
        %v5795 = vpop.f32.mrf.mxu0
        %v5796 = vadd.f32 0.0, %v5795
        %v5797 = vpop.f32.mrf.mxu0
        %v5798 = vadd.f32 0.0, %v5797
        %5799 = vmatmul.bf16.gmra.mxu0 %v5687
        %v5800 = vpop.f32.mrf.mxu0
        %v5801 = vadd.f32 0.0, %v5800
        %v5802 = vpop.f32.mrf.mxu0
        %v5803 = vadd.f32 0.0, %v5802
        %5804 = vmatmul.bf16.gmra.mxu0 %v5688
        %v5805 = vpop.f32.mrf.mxu0
        %v5806 = vadd.f32 0.0, %v5805
        %v5807 = vpop.f32.mrf.mxu0
        %v5808 = vadd.f32 0.0, %v5807
        %5809 = vmatmul.bf16.gmra.mxu0 %v5689
        %v5810 = vpop.f32.mrf.mxu0
        %v5811 = vadd.f32 0.0, %v5810
        %v5812 = vpop.f32.mrf.mxu0
        %v5813 = vadd.f32 0.0, %v5812
        %5814 = vmatmul.bf16.gmra.mxu0 %v5690
        %v5815 = vpop.f32.mrf.mxu0
        %v5816 = vadd.f32 0.0, %v5815
        %v5817 = vpop.f32.mrf.mxu0
        %v5818 = vadd.f32 0.0, %v5817
        %5819 = vmatmul.bf16.gmra.mxu0 %v5691
        %v5820 = vpop.f32.mrf.mxu0
        %v5821 = vadd.f32 0.0, %v5820
        %v5822 = vpop.f32.mrf.mxu0
        %v5823 = vadd.f32 0.0, %v5822
        %5824 = vmatmul.bf16.gmra.mxu0 %v5692
        %v5825 = vpop.f32.mrf.mxu0
        %v5826 = vadd.f32 0.0, %v5825
        %v5827 = vpop.f32.mrf.mxu0
        %v5828 = vadd.f32 0.0, %v5827
        %5829 = vmatmul.bf16.gmra.mxu0 %v5693
        %v5830 = vpop.f32.mrf.mxu0
        %v5831 = vadd.f32 0.0, %v5830
        %v5832 = vpop.f32.mrf.mxu0
        %v5833 = vadd.f32 0.0, %v5832
        %5834 = vmatmul.bf16.gmra.mxu0 %v5694
        %v5835 = vpop.f32.mrf.mxu0
        %v5836 = vadd.f32 0.0, %v5835
        %v5837 = vpop.f32.mrf.mxu0
        %v5838 = vadd.f32 0.0, %v5837
        %5839 = vmatmul.bf16.gmra.mxu0 %v5695
        %v5840 = vpop.f32.mrf.mxu0
        %v5841 = vadd.f32 0.0, %v5840
        %v5842 = vpop.f32.mrf.mxu0
        %v5843 = vadd.f32 0.0, %v5842
        %5844 = vmatmul.bf16.gmra.mxu0 %v5696
        %v5845 = vpop.f32.mrf.mxu0
        %v5846 = vadd.f32 0.0, %v5845
        %v5847 = vpop.f32.mrf.mxu0
        %v5848 = vadd.f32 0.0, %v5847
        %5849 = vdwg.mxu0
        %v5850 = vadd.f32 %v5568, %v5771
        %v5851 = vadd.f32 %v5569, %v5773
        %v5852 = vadd.f32 %v5570, %v5776
        %v5853 = vadd.f32 %v5571, %v5778
        %v5854 = vadd.f32 %v5572, %v5781
        %v5855 = vadd.f32 %v5573, %v5783
        %v5856 = vadd.f32 %v5574, %v5786
        %v5857 = vadd.f32 %v5575, %v5788
        %v5858 = vadd.f32 %v5576, %v5791
        %v5859 = vadd.f32 %v5577, %v5793
        %v5860 = vadd.f32 %v5578, %v5796
        %v5861 = vadd.f32 %v5579, %v5798
        %v5862 = vadd.f32 %v5580, %v5801
        %v5863 = vadd.f32 %v5581, %v5803
        %v5864 = vadd.f32 %v5582, %v5806
        %v5865 = vadd.f32 %v5583, %v5808
        %v5866 = vadd.f32 %v5584, %v5811
        %v5867 = vadd.f32 %v5585, %v5813
        %v5868 = vadd.f32 %v5586, %v5816
        %v5869 = vadd.f32 %v5587, %v5818
        %v5870 = vadd.f32 %v5588, %v5821
        %v5871 = vadd.f32 %v5589, %v5823
        %v5872 = vadd.f32 %v5590, %v5826
        %v5873 = vadd.f32 %v5591, %v5828
        %v5874 = vadd.f32 %v5592, %v5831
        %v5875 = vadd.f32 %v5593, %v5833
        %v5876 = vadd.f32 %v5594, %v5836
        %v5877 = vadd.f32 %v5595, %v5838
        %v5878 = vadd.f32 %v5596, %v5841
        %v5879 = vadd.f32 %v5597, %v5843
        %v5880 = vadd.f32 %v5598, %v5846
        %v5881 = vadd.f32 %v5599, %v5848
        %v5882 = vld [vmem:[#allocation2 + $0x14] sm:$0xf]
        %v5883 = vld [vmem:[#allocation2 + $0x18] sm:$0xf]
        %v5884 = vld [vmem:[#allocation2 + $0x1c] sm:$0xf]
        %v5885 = vld [vmem:[#allocation2 + $0x20] sm:$0xf]
        %v5886 = vld [vmem:[#allocation2 + $0x24] sm:$0xf]
        %v5887 = vld [vmem:[#allocation2 + $0x28] sm:$0xf]
        %v5888 = vld [vmem:[#allocation2 + $0x2c] sm:$0xf]
        %v5889 = vld [vmem:[#allocation2 + $0x30] sm:$0xf]
        %v5890 = vld [vmem:[#allocation2 + $0x34] sm:$0xf]
        %v5891 = vld [vmem:[#allocation2 + $0x38] sm:$0xf]
        %v5892 = vld [vmem:[#allocation2 + $0x3c] sm:$0xf]
        %v5893 = vld [vmem:[#allocation2 + $0x40] sm:$0xf]
        %v5894 = vld [vmem:[#allocation2 + $0x44] sm:$0xf]
        %v5895 = vld [vmem:[#allocation2 + $0x48] sm:$0xf]
        %v5896 = vld [vmem:[#allocation2 + $0x4c] sm:$0xf]
        %v5897 = vld [vmem:[#allocation2 + $0x50] sm:$0xf]
        %v5898 = vld [vmem:[#allocation2 + $0x54] sm:$0xf]
        %v5899 = vld [vmem:[#allocation2 + $0x58] sm:$0xf]
        %v5900 = vld [vmem:[#allocation2 + $0x5c] sm:$0xf]
        %v5901 = vld [vmem:[#allocation2 + $0x60] sm:$0xf]
        %v5902 = vld [vmem:[#allocation2 + $0x64] sm:$0xf]
        %v5903 = vld [vmem:[#allocation2 + $0x68] sm:$0xf]
        %v5904 = vld [vmem:[#allocation2 + $0x6c] sm:$0xf]
        %v5905 = vld [vmem:[#allocation2 + $0x70] sm:$0xf]
        %v5906 = vld [vmem:[#allocation2 + $0x74] sm:$0xf]
        %v5907 = vld [vmem:[#allocation2 + $0x78] sm:$0xf]
        %v5908 = vld [vmem:[#allocation2 + $0x7c] sm:$0xf]
        %v5909 = vld [vmem:[#allocation2 + $0x80] sm:$0xf]
        %v5910 = vld [vmem:[#allocation2 + $0x84] sm:$0xf]
        %v5911 = vld [vmem:[#allocation2 + $0x88] sm:$0xf]
        %v5912 = vld [vmem:[#allocation2 + $0x8c] sm:$0xf]
        %v5913 = vld [vmem:[#allocation2 + $0x90] sm:$0xf]
        %v5914 = vld [vmem:[#allocation2 + $0x94] sm:$0x1]
        %v5915 = vsel %vm3153, %v5882, 0
        %v5916 = vsel %vm3160, %v5883, 0
        %v5917 = vsel %vm3167, %v5884, 0
        %v5918 = vsel %vm3174, %v5885, 0
        %v5919 = vsel %vm3181, %v5886, 0
        %v5920 = vsel %vm3188, %v5887, 0
        %v5921 = vsel %vm3195, %v5888, 0
        %v5922 = vsel %vm3202, %v5889, 0
        %v5923 = vsel %vm3209, %v5890, 0
        %v5924 = vsel %vm3216, %v5891, 0
        %v5925 = vsel %vm3223, %v5892, 0
        %v5926 = vsel %vm3230, %v5893, 0
        %v5927 = vsel %vm3237, %v5894, 0
        %v5928 = vsel %vm3244, %v5895, 0
        %v5929 = vsel %vm3251, %v5896, 0
        %v5930 = vsel %vm3258, %v5897, 0
        %v5931 = vsel %vm3265, %v5898, 0
        %v5932 = vsel %vm3272, %v5899, 0
        %v5933 = vsel %vm3279, %v5900, 0
        %v5934 = vsel %vm3286, %v5901, 0
        %v5935 = vsel %vm3293, %v5902, 0
        %v5936 = vsel %vm3300, %v5903, 0
        %v5937 = vsel %vm3307, %v5904, 0
        %v5938 = vsel %vm3314, %v5905, 0
        %v5939 = vsel %vm3321, %v5906, 0
        %v5940 = vsel %vm3328, %v5907, 0
        %v5941 = vsel %vm3335, %v5908, 0
        %v5942 = vsel %vm3342, %v5909, 0
        %v5943 = vsel %vm3349, %v5910, 0
        %v5944 = vsel %vm3356, %v5911, 0
        %v5945 = vsel %vm3363, %v5912, 0
        %v5946 = vsel %vm3370, %v5913, 0
        %v5947 = vsel %vm3377, %v5914, 0
        %s5948 = scalar_lea.vmem [#allocation9], 512
        %v5949 = vld [vmem:[%s5948] sm:$0xf]
        %v5950 = vld [vmem:[%s5948 + $0x4] sm:$0xf]
        %v5951 = vld [vmem:[%s5948 + $0x8] sm:$0xf]
        %v5952 = vld [vmem:[%s5948 + $0xc] sm:$0xf]
        %v5953 = vld [vmem:[%s5948 + $0x10] sm:$0xf]
        %v5954 = vld [vmem:[%s5948 + $0x14] sm:$0xf]
        %v5955 = vld [vmem:[%s5948 + $0x18] sm:$0xf]
        %v5956 = vld [vmem:[%s5948 + $0x1c] sm:$0xf]
        %v5957 = vld [vmem:[%s5948 + $0x20] sm:$0xf]
        %v5958 = vld [vmem:[%s5948 + $0x24] sm:$0xf]
        %v5959 = vld [vmem:[%s5948 + $0x28] sm:$0xf]
        %v5960 = vld [vmem:[%s5948 + $0x2c] sm:$0xf]
        %v5961 = vld [vmem:[%s5948 + $0x30] sm:$0xf]
        %v5962 = vld [vmem:[%s5948 + $0x34] sm:$0xf]
        %v5963 = vld [vmem:[%s5948 + $0x38] sm:$0xf]
        %v5964 = vld [vmem:[%s5948 + $0x3c] sm:$0xf]
        %v5998 = vunpack.c.l.b16 %v5915
        %v5999 = vunpack.c.l.b16 %v5916
        %v6000 = vunpack.c.l.b16 %v5917
        %v6001 = vunpack.c.l.b16 %v5918
        %v6002 = vunpack.c.l.b16 %v5919
        %v6003 = vunpack.c.l.b16 %v5920
        %v6004 = vunpack.c.l.b16 %v5921
        %v6005 = vunpack.c.l.b16 %v5922
        %v6006 = vunpack.c.l.b16 %v5923
        %v6007 = vunpack.c.l.b16 %v5924
        %v6008 = vunpack.c.l.b16 %v5925
        %v6009 = vunpack.c.l.b16 %v5926
        %v6010 = vunpack.c.l.b16 %v5927
        %v6011 = vunpack.c.l.b16 %v5928
        %v6012 = vunpack.c.l.b16 %v5929
        %v6013 = vunpack.c.l.b16 %v5930
        %v6014 = vunpack.c.l.b16 %v5931
        %v6015 = vunpack.c.l.b16 %v5932
        %v6016 = vunpack.c.l.b16 %v5933
        %v6017 = vunpack.c.l.b16 %v5934
        %v6018 = vunpack.c.l.b16 %v5935
        %v6019 = vunpack.c.l.b16 %v5936
        %v6020 = vunpack.c.l.b16 %v5937
        %v6021 = vunpack.c.l.b16 %v5938
        %v6022 = vunpack.c.l.b16 %v5939
        %v6023 = vunpack.c.l.b16 %v5940
        %v6024 = vunpack.c.l.b16 %v5941
        %v6025 = vunpack.c.l.b16 %v5942
        %v6026 = vunpack.c.l.b16 %v5943
        %v6027 = vunpack.c.l.b16 %v5944
        %v6028 = vunpack.c.l.b16 %v5945
        %v6029 = vunpack.c.l.b16 %v5946
        %v6030 = vunpack.c.l.b16 %v5947
        %v6031 = vpack.c.b16 %v5999, %v5998
        %v6032 = vpack.c.b16 %v6001, %v6000
        %v6033 = vpack.c.b16 %v6003, %v6002
        %v6034 = vpack.c.b16 %v6005, %v6004
        %v6035 = vpack.c.b16 %v6007, %v6006
        %v6036 = vpack.c.b16 %v6009, %v6008
        %v6037 = vpack.c.b16 %v6011, %v6010
        %v6038 = vpack.c.b16 %v6013, %v6012
        %v6039 = vpack.c.b16 %v6015, %v6014
        %v6040 = vpack.c.b16 %v6017, %v6016
        %v6041 = vpack.c.b16 %v6019, %v6018
        %v6042 = vpack.c.b16 %v6021, %v6020
        %v6043 = vpack.c.b16 %v6023, %v6022
        %v6044 = vpack.c.b16 %v6025, %v6024
        %v6045 = vpack.c.b16 %v6027, %v6026
        %v6046 = vpack.c.b16 %v6029, %v6028
        %v6047 = vpack.c.b16 %v6030, %v6030
        %v6049 = vshrl.u32 %v6031, 16
        %v6051 = vshll.u32 %v6031, 16
        %v6053 = vrot.slane %v6051, 1
        %v6054 = vor.u32 %v6049, %v6053
        %v6056 = vshll.u32 %v6032, 16
        %v6058 = vrot.slane %v6056, 1
        %v6059 = vsel %vm3511, %v6054, %v6058
        %v6060 = vshrl.u32 %v6032, 16
        %v6062 = vor.u32 %v6060, %v6058
        %v6064 = vshll.u32 %v6033, 16
        %v6066 = vrot.slane %v6064, 1
        %v6067 = vsel %vm3511, %v6062, %v6066
        %v6068 = vshrl.u32 %v6033, 16
        %v6070 = vor.u32 %v6068, %v6066
        %v6072 = vshll.u32 %v6034, 16
        %v6074 = vrot.slane %v6072, 1
        %v6075 = vsel %vm3511, %v6070, %v6074
        %v6076 = vshrl.u32 %v6034, 16
        %v6078 = vor.u32 %v6076, %v6074
        %v6080 = vshll.u32 %v6035, 16
        %v6082 = vrot.slane %v6080, 1
        %v6083 = vsel %vm3511, %v6078, %v6082
        %v6084 = vshrl.u32 %v6035, 16
        %v6086 = vor.u32 %v6084, %v6082
        %v6088 = vshll.u32 %v6036, 16
        %v6090 = vrot.slane %v6088, 1
        %v6091 = vsel %vm3511, %v6086, %v6090
        %v6092 = vshrl.u32 %v6036, 16
        %v6094 = vor.u32 %v6092, %v6090
        %v6096 = vshll.u32 %v6037, 16
        %v6098 = vrot.slane %v6096, 1
        %v6099 = vsel %vm3511, %v6094, %v6098
        %v6100 = vshrl.u32 %v6037, 16
        %v6102 = vor.u32 %v6100, %v6098
        %v6104 = vshll.u32 %v6038, 16
        %v6106 = vrot.slane %v6104, 1
        %v6107 = vsel %vm3511, %v6102, %v6106
        %v6108 = vshrl.u32 %v6038, 16
        %v6110 = vor.u32 %v6108, %v6106
        %v6112 = vshll.u32 %v6039, 16
        %v6114 = vrot.slane %v6112, 1
        %v6115 = vsel %vm3511, %v6110, %v6114
        %v6116 = vshrl.u32 %v6039, 16
        %v6118 = vor.u32 %v6116, %v6114
        %v6120 = vshll.u32 %v6040, 16
        %v6122 = vrot.slane %v6120, 1
        %v6123 = vsel %vm3511, %v6118, %v6122
        %v6124 = vshrl.u32 %v6040, 16
        %v6126 = vor.u32 %v6124, %v6122
        %v6128 = vshll.u32 %v6041, 16
        %v6130 = vrot.slane %v6128, 1
        %v6131 = vsel %vm3511, %v6126, %v6130
        %v6132 = vshrl.u32 %v6041, 16
        %v6134 = vor.u32 %v6132, %v6130
        %v6136 = vshll.u32 %v6042, 16
        %v6138 = vrot.slane %v6136, 1
        %v6139 = vsel %vm3511, %v6134, %v6138
        %v6140 = vshrl.u32 %v6042, 16
        %v6142 = vor.u32 %v6140, %v6138
        %v6144 = vshll.u32 %v6043, 16
        %v6146 = vrot.slane %v6144, 1
        %v6147 = vsel %vm3511, %v6142, %v6146
        %v6148 = vshrl.u32 %v6043, 16
        %v6150 = vor.u32 %v6148, %v6146
        %v6152 = vshll.u32 %v6044, 16
        %v6154 = vrot.slane %v6152, 1
        %v6155 = vsel %vm3511, %v6150, %v6154
        %v6156 = vshrl.u32 %v6044, 16
        %v6158 = vor.u32 %v6156, %v6154
        %v6160 = vshll.u32 %v6045, 16
        %v6162 = vrot.slane %v6160, 1
        %v6163 = vsel %vm3511, %v6158, %v6162
        %v6164 = vshrl.u32 %v6045, 16
        %v6166 = vor.u32 %v6164, %v6162
        %v6168 = vshll.u32 %v6046, 16
        %v6170 = vrot.slane %v6168, 1
        %v6171 = vsel %vm3511, %v6166, %v6170
        %v6172 = vshrl.u32 %v6046, 16
        %v6174 = vor.u32 %v6172, %v6170
        %v6176 = vshll.u32 %v6047, 16
        %v6178 = vrot.slane %v6176, 1
        %v6179 = vsel %vm3511, %v6174, %v6178
        %v6212 = vunpack.c.l.b16 %v5949
        %v6213 = vunpack.c.l.b16 %v5950
        %v6214 = vunpack.c.l.b16 %v5951
        %v6215 = vunpack.c.l.b16 %v5952
        %v6216 = vunpack.c.l.b16 %v5953
        %v6217 = vunpack.c.l.b16 %v5954
        %v6218 = vunpack.c.l.b16 %v5955
        %v6219 = vunpack.c.l.b16 %v5956
        %v6220 = vunpack.c.l.b16 %v5957
        %v6221 = vunpack.c.l.b16 %v5958
        %v6222 = vunpack.c.l.b16 %v5959
        %v6223 = vunpack.c.l.b16 %v5960
        %v6224 = vunpack.c.l.b16 %v5961
        %v6225 = vunpack.c.l.b16 %v5962
        %v6226 = vunpack.c.l.b16 %v5963
        %v6227 = vunpack.c.l.b16 %v5964
        %v6228 = vpack.c.b16 %v6213, %v6212
        %v6229 = vpack.c.b16 %v6215, %v6214
        %v6230 = vpack.c.b16 %v6217, %v6216
        %v6231 = vpack.c.b16 %v6219, %v6218
        %v6232 = vpack.c.b16 %v6221, %v6220
        %v6233 = vpack.c.b16 %v6223, %v6222
        %v6234 = vpack.c.b16 %v6225, %v6224
        %v6235 = vpack.c.b16 %v6227, %v6226
        %6244 = vmatpush.bf16.msra.mxu0 %v6235
        %6245 = vmatpush.bf16.msra.mxu0 %v6234
        %6246 = vmatpush.bf16.msra.mxu0 %v6233
        %6247 = vmatpush.bf16.msra.mxu0 %v6232
        %6248 = vmatpush.bf16.msra.mxu0 %v6231
        %6249 = vmatpush.bf16.msra.mxu0 %v6230
        %6250 = vmatpush.bf16.msra.mxu0 %v6229
        %6251 = vmatpush.bf16.msra.mxu0 %v6228
        %6252 = vmatmul.bf16.gmra.mxu0 %v6059
        %v6253 = vpop.f32.mrf.mxu0
        %v6254 = vadd.f32 0.0, %v6253
        %v6255 = vpop.f32.mrf.mxu0
        %v6256 = vadd.f32 0.0, %v6255
        %6257 = vmatmul.bf16.gmra.mxu0 %v6067
        %v6258 = vpop.f32.mrf.mxu0
        %v6259 = vadd.f32 0.0, %v6258
        %v6260 = vpop.f32.mrf.mxu0
        %v6261 = vadd.f32 0.0, %v6260
        %6262 = vmatmul.bf16.gmra.mxu0 %v6075
        %v6263 = vpop.f32.mrf.mxu0
        %v6264 = vadd.f32 0.0, %v6263
        %v6265 = vpop.f32.mrf.mxu0
        %v6266 = vadd.f32 0.0, %v6265
        %6267 = vmatmul.bf16.gmra.mxu0 %v6083
        %v6268 = vpop.f32.mrf.mxu0
        %v6269 = vadd.f32 0.0, %v6268
        %v6270 = vpop.f32.mrf.mxu0
        %v6271 = vadd.f32 0.0, %v6270
        %6272 = vmatmul.bf16.gmra.mxu0 %v6091
        %v6273 = vpop.f32.mrf.mxu0
        %v6274 = vadd.f32 0.0, %v6273
        %v6275 = vpop.f32.mrf.mxu0
        %v6276 = vadd.f32 0.0, %v6275
        %6277 = vmatmul.bf16.gmra.mxu0 %v6099
        %v6278 = vpop.f32.mrf.mxu0
        %v6279 = vadd.f32 0.0, %v6278
        %v6280 = vpop.f32.mrf.mxu0
        %v6281 = vadd.f32 0.0, %v6280
        %6282 = vmatmul.bf16.gmra.mxu0 %v6107
        %v6283 = vpop.f32.mrf.mxu0
        %v6284 = vadd.f32 0.0, %v6283
        %v6285 = vpop.f32.mrf.mxu0
        %v6286 = vadd.f32 0.0, %v6285
        %6287 = vmatmul.bf16.gmra.mxu0 %v6115
        %v6288 = vpop.f32.mrf.mxu0
        %v6289 = vadd.f32 0.0, %v6288
        %v6290 = vpop.f32.mrf.mxu0
        %v6291 = vadd.f32 0.0, %v6290
        %6292 = vmatmul.bf16.gmra.mxu0 %v6123
        %v6293 = vpop.f32.mrf.mxu0
        %v6294 = vadd.f32 0.0, %v6293
        %v6295 = vpop.f32.mrf.mxu0
        %v6296 = vadd.f32 0.0, %v6295
        %6297 = vmatmul.bf16.gmra.mxu0 %v6131
        %v6298 = vpop.f32.mrf.mxu0
        %v6299 = vadd.f32 0.0, %v6298
        %v6300 = vpop.f32.mrf.mxu0
        %v6301 = vadd.f32 0.0, %v6300
        %6302 = vmatmul.bf16.gmra.mxu0 %v6139
        %v6303 = vpop.f32.mrf.mxu0
        %v6304 = vadd.f32 0.0, %v6303
        %v6305 = vpop.f32.mrf.mxu0
        %v6306 = vadd.f32 0.0, %v6305
        %6307 = vmatmul.bf16.gmra.mxu0 %v6147
        %v6308 = vpop.f32.mrf.mxu0
        %v6309 = vadd.f32 0.0, %v6308
        %v6310 = vpop.f32.mrf.mxu0
        %v6311 = vadd.f32 0.0, %v6310
        %6312 = vmatmul.bf16.gmra.mxu0 %v6155
        %v6313 = vpop.f32.mrf.mxu0
        %v6314 = vadd.f32 0.0, %v6313
        %v6315 = vpop.f32.mrf.mxu0
        %v6316 = vadd.f32 0.0, %v6315
        %6317 = vmatmul.bf16.gmra.mxu0 %v6163
        %v6318 = vpop.f32.mrf.mxu0
        %v6319 = vadd.f32 0.0, %v6318
        %v6320 = vpop.f32.mrf.mxu0
        %v6321 = vadd.f32 0.0, %v6320
        %6322 = vmatmul.bf16.gmra.mxu0 %v6171
        %v6323 = vpop.f32.mrf.mxu0
        %v6324 = vadd.f32 0.0, %v6323
        %v6325 = vpop.f32.mrf.mxu0
        %v6326 = vadd.f32 0.0, %v6325
        %6327 = vmatmul.bf16.gmra.mxu0 %v6179
        %v6328 = vpop.f32.mrf.mxu0
        %v6329 = vadd.f32 0.0, %v6328
        %v6330 = vpop.f32.mrf.mxu0
        %v6331 = vadd.f32 0.0, %v6330
        %6332 = vdwg.mxu0
        %v6333 = vadd.f32 %v5850, %v6254
        %v6334 = vadd.f32 %v5851, %v6256
        %v6335 = vadd.f32 %v5852, %v6259
        %v6336 = vadd.f32 %v5853, %v6261
        %v6337 = vadd.f32 %v5854, %v6264
        %v6338 = vadd.f32 %v5855, %v6266
        %v6339 = vadd.f32 %v5856, %v6269
        %v6340 = vadd.f32 %v5857, %v6271
        %v6341 = vadd.f32 %v5858, %v6274
        %v6342 = vadd.f32 %v5859, %v6276
        %v6343 = vadd.f32 %v5860, %v6279
        %v6344 = vadd.f32 %v5861, %v6281
        %v6345 = vadd.f32 %v5862, %v6284
        %v6346 = vadd.f32 %v5863, %v6286
        %v6347 = vadd.f32 %v5864, %v6289
        %v6348 = vadd.f32 %v5865, %v6291
        %v6349 = vadd.f32 %v5866, %v6294
        %v6350 = vadd.f32 %v5867, %v6296
        %v6351 = vadd.f32 %v5868, %v6299
        %v6352 = vadd.f32 %v5869, %v6301
        %v6353 = vadd.f32 %v5870, %v6304
        %v6354 = vadd.f32 %v5871, %v6306
        %v6355 = vadd.f32 %v5872, %v6309
        %v6356 = vadd.f32 %v5873, %v6311
        %v6357 = vadd.f32 %v5874, %v6314
        %v6358 = vadd.f32 %v5875, %v6316
        %v6359 = vadd.f32 %v5876, %v6319
        %v6360 = vadd.f32 %v5877, %v6321
        %v6361 = vadd.f32 %v5878, %v6324
        %v6362 = vadd.f32 %v5879, %v6326
        %v6363 = vadd.f32 %v5880, %v6329
        %v6364 = vadd.f32 %v5881, %v6331
        %v6365 = vld [vmem:[%s4] sm:$0x1]
        %v6367 = vperm.slane %v6365, 0
        %v6369 = vadd.f32 %v6333, %v6367
        %v6370 = vadd.f32 %v6334, %v6367
        %v6371 = vadd.f32 %v6335, %v6367
        %v6372 = vadd.f32 %v6336, %v6367
        %v6373 = vadd.f32 %v6337, %v6367
        %v6374 = vadd.f32 %v6338, %v6367
        %v6375 = vadd.f32 %v6339, %v6367
        %v6376 = vadd.f32 %v6340, %v6367
        %v6377 = vadd.f32 %v6341, %v6367
        %v6378 = vadd.f32 %v6342, %v6367
        %v6379 = vadd.f32 %v6343, %v6367
        %v6380 = vadd.f32 %v6344, %v6367
        %v6381 = vadd.f32 %v6345, %v6367
        %v6382 = vadd.f32 %v6346, %v6367
        %v6383 = vadd.f32 %v6347, %v6367
        %v6384 = vadd.f32 %v6348, %v6367
        %v6385 = vadd.f32 %v6349, %v6367
        %v6386 = vadd.f32 %v6350, %v6367
        %v6387 = vadd.f32 %v6351, %v6367
        %v6388 = vadd.f32 %v6352, %v6367
        %v6389 = vadd.f32 %v6353, %v6367
        %v6390 = vadd.f32 %v6354, %v6367
        %v6391 = vadd.f32 %v6355, %v6367
        %v6392 = vadd.f32 %v6356, %v6367
        %v6393 = vadd.f32 %v6357, %v6367
        %v6394 = vadd.f32 %v6358, %v6367
        %v6395 = vadd.f32 %v6359, %v6367
        %v6396 = vadd.f32 %v6360, %v6367
        %v6397 = vadd.f32 %v6361, %v6367
        %v6398 = vadd.f32 %v6362, %v6367
        %v6399 = vadd.f32 %v6363, %v6367
        %v6400 = vadd.f32 %v6364, %v6367
        %v6401 = vmax.f32 %v6369, 0.0
        %v6402 = vmax.f32 %v6370, 0.0
        %v6403 = vmax.f32 %v6371, 0.0
        %v6404 = vmax.f32 %v6372, 0.0
        %v6405 = vmax.f32 %v6373, 0.0
        %v6406 = vmax.f32 %v6374, 0.0
        %v6407 = vmax.f32 %v6375, 0.0
        %v6408 = vmax.f32 %v6376, 0.0
        %v6409 = vmax.f32 %v6377, 0.0
        %v6410 = vmax.f32 %v6378, 0.0
        %v6411 = vmax.f32 %v6379, 0.0
        %v6412 = vmax.f32 %v6380, 0.0
        %v6413 = vmax.f32 %v6381, 0.0
        %v6414 = vmax.f32 %v6382, 0.0
        %v6415 = vmax.f32 %v6383, 0.0
        %v6416 = vmax.f32 %v6384, 0.0
        %v6417 = vmax.f32 %v6385, 0.0
        %v6418 = vmax.f32 %v6386, 0.0
        %v6419 = vmax.f32 %v6387, 0.0
        %v6420 = vmax.f32 %v6388, 0.0
        %v6421 = vmax.f32 %v6389, 0.0
        %v6422 = vmax.f32 %v6390, 0.0
        %v6423 = vmax.f32 %v6391, 0.0
        %v6424 = vmax.f32 %v6392, 0.0
        %v6425 = vmax.f32 %v6393, 0.0
        %v6426 = vmax.f32 %v6394, 0.0
        %v6427 = vmax.f32 %v6395, 0.0
        %v6428 = vmax.f32 %v6396, 0.0
        %v6429 = vmax.f32 %v6397, 0.0
        %v6430 = vmax.f32 %v6398, 0.0
        %v6431 = vmax.f32 %v6399, 0.0
        %v6432 = vmax.f32 %v6400, 0.0
        %v6433 = vadd.f32 %v6401, %v6403
        %v6434 = vadd.f32 %v6402, %v6404
        %v6435 = vadd.f32 %v6405, %v6407
        %v6436 = vadd.f32 %v6406, %v6408
        %v6437 = vadd.f32 %v6409, %v6411
        %v6438 = vadd.f32 %v6410, %v6412
        %v6439 = vadd.f32 %v6413, %v6415
        %v6440 = vadd.f32 %v6414, %v6416
        %v6441 = vadd.f32 %v6417, %v6419
        %v6442 = vadd.f32 %v6418, %v6420
        %v6443 = vadd.f32 %v6421, %v6423
        %v6444 = vadd.f32 %v6422, %v6424
        %v6445 = vadd.f32 %v6425, %v6427
        %v6446 = vadd.f32 %v6426, %v6428
        %v6447 = vadd.f32 %v6429, %v6431
        %v6448 = vadd.f32 %v6430, %v6432
        %6449 = vst [vmem:[#allocation3] sm:$0xff] %v6433
        %6450 = vst [vmem:[#allocation3 + $0x8] sm:$0xff] %v6434
        %6451 = vst [vmem:[#allocation3 + $0x10] sm:$0xff] %v6435
        %6452 = vst [vmem:[#allocation3 + $0x18] sm:$0xff] %v6436
        %6453 = vst [vmem:[#allocation3 + $0x20] sm:$0xff] %v6437
        %6454 = vst [vmem:[#allocation3 + $0x28] sm:$0xff] %v6438
        %6455 = vst [vmem:[#allocation3 + $0x30] sm:$0xff] %v6439
        %6456 = vst [vmem:[#allocation3 + $0x38] sm:$0xff] %v6440
        %6457 = vst [vmem:[#allocation3 + $0x40] sm:$0xff] %v6441
        %6458 = vst [vmem:[#allocation3 + $0x48] sm:$0xff] %v6442
        %6459 = vst [vmem:[#allocation3 + $0x50] sm:$0xff] %v6443
        %6460 = vst [vmem:[#allocation3 + $0x58] sm:$0xff] %v6444
        %6461 = vst [vmem:[#allocation3 + $0x60] sm:$0xff] %v6445
        %6462 = vst [vmem:[#allocation3 + $0x68] sm:$0xff] %v6446
        %6463 = vst [vmem:[#allocation3 + $0x70] sm:$0xff] %v6447
        %6464 = vst [vmem:[#allocation3 + $0x78] sm:$0xff] %v6448
        %v6465 = vld [vmem:[#allocation3] ss:$2 sm:$0xff]
        %s6466 = scalar_lea.vmem [#allocation3], 16
        %v6467 = vld [vmem:[%s6466] ss:$2 sm:$0xff]
        %s6468 = scalar_lea.vmem [#allocation3], 32
        %v6469 = vld [vmem:[%s6468] ss:$2 sm:$0xff]
        %s6470 = scalar_lea.vmem [#allocation3], 48
        %v6471 = vld [vmem:[%s6470] ss:$2 sm:$0xff]
        %s6472 = scalar_lea.vmem [#allocation3], 64
        %v6473 = vld [vmem:[%s6472] ss:$2 sm:$0xff]
        %s6474 = scalar_lea.vmem [#allocation3], 80
        %v6475 = vld [vmem:[%s6474] ss:$2 sm:$0xff]
        %s6476 = scalar_lea.vmem [#allocation3], 96
        %v6477 = vld [vmem:[%s6476] ss:$2 sm:$0xff]
        %s6478 = scalar_lea.vmem [#allocation3], 112
        %v6479 = vld [vmem:[%s6478] ss:$2 sm:$0xff]
        %s6480 = scalar_lea.vmem [#allocation3], 1
        %v6481 = vld [vmem:[%s6480] ss:$2 sm:$0xff]
        %s6482 = scalar_lea.vmem [#allocation3], 17
        %v6483 = vld [vmem:[%s6482] ss:$2 sm:$0xff]
        %s6484 = scalar_lea.vmem [#allocation3], 33
        %v6485 = vld [vmem:[%s6484] ss:$2 sm:$0xff]
        %s6486 = scalar_lea.vmem [#allocation3], 49
        %v6487 = vld [vmem:[%s6486] ss:$2 sm:$0xff]
        %s6488 = scalar_lea.vmem [#allocation3], 65
        %v6489 = vld [vmem:[%s6488] ss:$2 sm:$0xff]
        %s6490 = scalar_lea.vmem [#allocation3], 81
        %v6491 = vld [vmem:[%s6490] ss:$2 sm:$0xff]
        %s6492 = scalar_lea.vmem [#allocation3], 97
        %v6493 = vld [vmem:[%s6492] ss:$2 sm:$0xff]
        %s6494 = scalar_lea.vmem [#allocation3], 113
        %v6495 = vld [vmem:[%s6494] ss:$2 sm:$0xff]
        %v6496 = vadd.f32 %v6465, %v6481
        %v6497 = vadd.f32 %v6467, %v6483
        %v6498 = vadd.f32 %v6469, %v6485
        %v6499 = vadd.f32 %v6471, %v6487
        %v6500 = vadd.f32 %v6473, %v6489
        %v6501 = vadd.f32 %v6475, %v6491
        %v6502 = vadd.f32 %v6477, %v6493
        %v6503 = vadd.f32 %v6479, %v6495
        %v6504 = vmul.f32 %v6496, 0.25
        %v6505 = vmul.f32 %v6497, 0.25
        %v6506 = vmul.f32 %v6498, 0.25
        %v6507 = vmul.f32 %v6499, 0.25
        %v6508 = vmul.f32 %v6500, 0.25
        %v6509 = vmul.f32 %v6501, 0.25
        %v6510 = vmul.f32 %v6502, 0.25
        %v6511 = vmul.f32 %v6503, 0.25
        %v6512 = vpack.c.bf16 %v6505, %v6504
        %v6513 = vpack.c.bf16 %v6507, %v6506
        %v6514 = vpack.c.bf16 %v6509, %v6508
        %v6515 = vpack.c.bf16 %v6511, %v6510
        %v6516 = vld [vmem:[#allocation10] sm:$0xf]
        %v6517 = vld [vmem:[#allocation10 + $0x4] sm:$0xf]
        %v6518 = vld [vmem:[#allocation10 + $0x8] sm:$0xf]
        %v6519 = vld [vmem:[#allocation10 + $0xc] sm:$0xf]
        %v6520 = vld [vmem:[#allocation10 + $0x10] sm:$0xf]
        %v6521 = vld [vmem:[#allocation10 + $0x14] sm:$0xf]
        %v6522 = vld [vmem:[#allocation10 + $0x18] sm:$0xf]
        %v6523 = vld [vmem:[#allocation10 + $0x1c] sm:$0xf]
        %v6524 = vld [vmem:[#allocation10 + $0x20] sm:$0xf]
        %v6525 = vld [vmem:[#allocation10 + $0x24] sm:$0xf]
        %v6526 = vld [vmem:[#allocation10 + $0x28] sm:$0xf]
        %v6527 = vld [vmem:[#allocation10 + $0x2c] sm:$0xf]
        %v6528 = vld [vmem:[#allocation10 + $0x30] sm:$0xf]
        %v6529 = vld [vmem:[#allocation10 + $0x34] sm:$0xf]
        %v6530 = vld [vmem:[#allocation10 + $0x38] sm:$0xf]
        %v6531 = vld [vmem:[#allocation10 + $0x3c] sm:$0xf]
        %v6532 = vld [vmem:[%s6] sm:$0x1]
        %v6534 = vperm.slane %v6532, 0
        %v6552 = vunpack.c.l.b16 %v6516
        %v6553 = vunpack.c.l.b16 %v6517
        %v6554 = vunpack.c.l.b16 %v6518
        %v6555 = vunpack.c.l.b16 %v6519
        %v6556 = vunpack.c.l.b16 %v6520
        %v6557 = vunpack.c.l.b16 %v6521
        %v6558 = vunpack.c.l.b16 %v6522
        %v6559 = vunpack.c.l.b16 %v6523
        %v6560 = vunpack.c.l.b16 %v6524
        %v6561 = vunpack.c.l.b16 %v6525
        %v6562 = vunpack.c.l.b16 %v6526
        %v6563 = vunpack.c.l.b16 %v6527
        %v6564 = vunpack.c.l.b16 %v6528
        %v6565 = vunpack.c.l.b16 %v6529
        %v6566 = vunpack.c.l.b16 %v6530
        %v6567 = vunpack.c.l.b16 %v6531
        %v6568 = vpack.c.b16 %v6553, %v6552
        %v6569 = vpack.c.b16 %v6555, %v6554
        %v6570 = vpack.c.b16 %v6557, %v6556
        %v6571 = vpack.c.b16 %v6559, %v6558
        %v6572 = vpack.c.b16 %v6561, %v6560
        %v6573 = vpack.c.b16 %v6563, %v6562
        %v6574 = vpack.c.b16 %v6565, %v6564
        %v6575 = vpack.c.b16 %v6567, %v6566
        %6584 = vmatpush.bf16.msra.mxu0 %v6575
        %6585 = vmatpush.bf16.msra.mxu0 %v6574
        %6586 = vmatpush.bf16.msra.mxu0 %v6573
        %6587 = vmatpush.bf16.msra.mxu0 %v6572
        %6588 = vmatpush.bf16.msra.mxu0 %v6571
        %6589 = vmatpush.bf16.msra.mxu0 %v6570
        %6590 = vmatpush.bf16.msra.mxu0 %v6569
        %6591 = vmatpush.bf16.msra.mxu0 %v6568
        %6592 = vmatmul.bf16.gmra.mxu0 %v6512
        %v6593 = vpop.f32.mrf.mxu0
        %v6594 = vadd.f32 %v6534, %v6593
        %v6595 = vpop.f32.mrf.mxu0
        %v6596 = vadd.f32 %v6534, %v6595
        %6597 = vmatmul.bf16.gmra.mxu0 %v6513
        %v6598 = vpop.f32.mrf.mxu0
        %v6599 = vadd.f32 %v6534, %v6598
        %v6600 = vpop.f32.mrf.mxu0
        %v6601 = vadd.f32 %v6534, %v6600
        %6602 = vmatmul.bf16.gmra.mxu0 %v6514
        %v6603 = vpop.f32.mrf.mxu0
        %v6604 = vadd.f32 %v6534, %v6603
        %v6605 = vpop.f32.mrf.mxu0
        %v6606 = vadd.f32 %v6534, %v6605
        %6607 = vmatmul.bf16.gmra.mxu0 %v6515
        %v6608 = vpop.f32.mrf.mxu0
        %v6609 = vadd.f32 %v6534, %v6608
        %v6610 = vpop.f32.mrf.mxu0
        %v6611 = vadd.f32 %v6534, %v6610
        %6612 = vdwg.mxu0
        %v6613 = vunpack.c.l.bf16 %v432
        %v6614 = vunpack.c.l.bf16 %v433
        %v6615 = vunpack.c.l.bf16 %v434
        %v6616 = vunpack.c.l.bf16 %v435
        %v6617 = vunpack.c.l.bf16 %v436
        %v6618 = vunpack.c.l.bf16 %v437
        %v6619 = vunpack.c.l.bf16 %v438
        %v6620 = vunpack.c.l.bf16 %v439
        %v6621 = vunpack.c.l.bf16 %v440
        %v6622 = vunpack.c.l.bf16 %v441
        %v6623 = vunpack.c.l.bf16 %v442
        %v6624 = vunpack.c.l.bf16 %v443
        %v6625 = vunpack.c.l.bf16 %v444
        %v6626 = vunpack.c.l.bf16 %v445
        %v6627 = vunpack.c.l.bf16 %v446
        %v6628 = vunpack.c.l.bf16 %v447
        %v6629 = vunpack.c.l.bf16 %v448
        %v6630 = vunpack.c.l.bf16 %v449
        %v6631 = vunpack.c.l.bf16 %v450
        %v6632 = vunpack.c.l.bf16 %v451
        %v6633 = vunpack.c.l.bf16 %v452
        %v6634 = vunpack.c.l.bf16 %v453
        %v6635 = vunpack.c.l.bf16 %v454
        %v6636 = vunpack.c.l.bf16 %v455
        %v6637 = vunpack.c.l.bf16 %v456
        %v6638 = vunpack.c.l.bf16 %v457
        %v6639 = vunpack.c.l.bf16 %v458
        %v6640 = vunpack.c.l.bf16 %v459
        %v6641 = vunpack.c.l.bf16 %v460
        %v6642 = vunpack.c.l.bf16 %v461
        %v6643 = vunpack.c.l.bf16 %v462
        %v6644 = vunpack.c.l.bf16 %v463
        %v6645 = vadd.f32 %v6613, %v6615
        %v6646 = vadd.f32 %v6614, %v6616
        %v6647 = vadd.f32 %v6617, %v6619
        %v6648 = vadd.f32 %v6618, %v6620
        %v6649 = vadd.f32 %v6621, %v6623
        %v6650 = vadd.f32 %v6622, %v6624
        %v6651 = vadd.f32 %v6625, %v6627
        %v6652 = vadd.f32 %v6626, %v6628
        %v6653 = vadd.f32 %v6629, %v6631
        %v6654 = vadd.f32 %v6630, %v6632
        %v6655 = vadd.f32 %v6633, %v6635
        %v6656 = vadd.f32 %v6634, %v6636
        %v6657 = vadd.f32 %v6637, %v6639
        %v6658 = vadd.f32 %v6638, %v6640
        %v6659 = vadd.f32 %v6641, %v6643
        %v6660 = vadd.f32 %v6642, %v6644
        %6661 = vst [vmem:[#allocation3] sm:$0xff] %v6645
        %6662 = vst [vmem:[#allocation3 + $0x8] sm:$0xff] %v6646
        %6663 = vst [vmem:[#allocation3 + $0x10] sm:$0xff] %v6647
        %6664 = vst [vmem:[#allocation3 + $0x18] sm:$0xff] %v6648
        %6665 = vst [vmem:[#allocation3 + $0x20] sm:$0xff] %v6649
        %6666 = vst [vmem:[#allocation3 + $0x28] sm:$0xff] %v6650
        %6667 = vst [vmem:[#allocation3 + $0x30] sm:$0xff] %v6651
        %6668 = vst [vmem:[#allocation3 + $0x38] sm:$0xff] %v6652
        %6669 = vst [vmem:[#allocation3 + $0x40] sm:$0xff] %v6653
        %6670 = vst [vmem:[#allocation3 + $0x48] sm:$0xff] %v6654
        %6671 = vst [vmem:[#allocation3 + $0x50] sm:$0xff] %v6655
        %6672 = vst [vmem:[#allocation3 + $0x58] sm:$0xff] %v6656
        %6673 = vst [vmem:[#allocation3 + $0x60] sm:$0xff] %v6657
        %6674 = vst [vmem:[#allocation3 + $0x68] sm:$0xff] %v6658
        %6675 = vst [vmem:[#allocation3 + $0x70] sm:$0xff] %v6659
        %6676 = vst [vmem:[#allocation3 + $0x78] sm:$0xff] %v6660
        %v6677 = vld [vmem:[#allocation3] ss:$2 sm:$0xff]
        %v6678 = vld [vmem:[%s6466] ss:$2 sm:$0xff]
        %v6679 = vld [vmem:[%s6468] ss:$2 sm:$0xff]
        %v6680 = vld [vmem:[%s6470] ss:$2 sm:$0xff]
        %v6681 = vld [vmem:[%s6472] ss:$2 sm:$0xff]
        %v6682 = vld [vmem:[%s6474] ss:$2 sm:$0xff]
        %v6683 = vld [vmem:[%s6476] ss:$2 sm:$0xff]
        %v6684 = vld [vmem:[%s6478] ss:$2 sm:$0xff]
        %v6685 = vld [vmem:[%s6480] ss:$2 sm:$0xff]
        %v6686 = vld [vmem:[%s6482] ss:$2 sm:$0xff]
        %v6687 = vld [vmem:[%s6484] ss:$2 sm:$0xff]
        %v6688 = vld [vmem:[%s6486] ss:$2 sm:$0xff]
        %v6689 = vld [vmem:[%s6488] ss:$2 sm:$0xff]
        %v6690 = vld [vmem:[%s6490] ss:$2 sm:$0xff]
        %v6691 = vld [vmem:[%s6492] ss:$2 sm:$0xff]
        %v6692 = vld [vmem:[%s6494] ss:$2 sm:$0xff]
        %v6693 = vadd.f32 %v6677, %v6685
        %v6694 = vadd.f32 %v6678, %v6686
        %v6695 = vadd.f32 %v6679, %v6687
        %v6696 = vadd.f32 %v6680, %v6688
        %v6697 = vadd.f32 %v6681, %v6689
        %v6698 = vadd.f32 %v6682, %v6690
        %v6699 = vadd.f32 %v6683, %v6691
        %v6700 = vadd.f32 %v6684, %v6692
        %v6701 = vmul.f32 %v6693, 0.25
        %v6702 = vmul.f32 %v6694, 0.25
        %v6703 = vmul.f32 %v6695, 0.25
        %v6704 = vmul.f32 %v6696, 0.25
        %v6705 = vmul.f32 %v6697, 0.25
        %v6706 = vmul.f32 %v6698, 0.25
        %v6707 = vmul.f32 %v6699, 0.25
        %v6708 = vmul.f32 %v6700, 0.25
        %v6709 = vpack.c.bf16 %v6702, %v6701
        %v6710 = vpack.c.bf16 %v6704, %v6703
        %v6711 = vpack.c.bf16 %v6706, %v6705
        %v6712 = vpack.c.bf16 %v6708, %v6707
        %v6713 = vld [vmem:[#allocation12] sm:$0xf]
        %v6714 = vld [vmem:[#allocation12 + $0x4] sm:$0xf]
        %v6715 = vld [vmem:[#allocation12 + $0x8] sm:$0xf]
        %v6716 = vld [vmem:[#allocation12 + $0xc] sm:$0xf]
        %v6717 = vld [vmem:[#allocation12 + $0x10] sm:$0xf]
        %v6718 = vld [vmem:[#allocation12 + $0x14] sm:$0xf]
        %v6719 = vld [vmem:[#allocation12 + $0x18] sm:$0xf]
        %v6720 = vld [vmem:[#allocation12 + $0x1c] sm:$0xf]
        %v6721 = vld [vmem:[#allocation12 + $0x20] sm:$0xf]
        %v6722 = vld [vmem:[#allocation12 + $0x24] sm:$0xf]
        %v6723 = vld [vmem:[#allocation12 + $0x28] sm:$0xf]
        %v6724 = vld [vmem:[#allocation12 + $0x2c] sm:$0xf]
        %v6725 = vld [vmem:[#allocation12 + $0x30] sm:$0xf]
        %v6726 = vld [vmem:[#allocation12 + $0x34] sm:$0xf]
        %v6727 = vld [vmem:[#allocation12 + $0x38] sm:$0xf]
        %v6728 = vld [vmem:[#allocation12 + $0x3c] sm:$0xf]
        %v6729 = vld [vmem:[%s8] sm:$0x1]
        %v6731 = vperm.slane %v6729, 0
        %v6749 = vunpack.c.l.b16 %v6713
        %v6750 = vunpack.c.l.b16 %v6714
        %v6751 = vunpack.c.l.b16 %v6715
        %v6752 = vunpack.c.l.b16 %v6716
        %v6753 = vunpack.c.l.b16 %v6717
        %v6754 = vunpack.c.l.b16 %v6718
        %v6755 = vunpack.c.l.b16 %v6719
        %v6756 = vunpack.c.l.b16 %v6720
        %v6757 = vunpack.c.l.b16 %v6721
        %v6758 = vunpack.c.l.b16 %v6722
        %v6759 = vunpack.c.l.b16 %v6723
        %v6760 = vunpack.c.l.b16 %v6724
        %v6761 = vunpack.c.l.b16 %v6725
        %v6762 = vunpack.c.l.b16 %v6726
        %v6763 = vunpack.c.l.b16 %v6727
        %v6764 = vunpack.c.l.b16 %v6728
        %v6765 = vpack.c.b16 %v6750, %v6749
        %v6766 = vpack.c.b16 %v6752, %v6751
        %v6767 = vpack.c.b16 %v6754, %v6753
        %v6768 = vpack.c.b16 %v6756, %v6755
        %v6769 = vpack.c.b16 %v6758, %v6757
        %v6770 = vpack.c.b16 %v6760, %v6759
        %v6771 = vpack.c.b16 %v6762, %v6761
        %v6772 = vpack.c.b16 %v6764, %v6763
        %6781 = vmatpush.bf16.msra.mxu0 %v6772
        %6782 = vmatpush.bf16.msra.mxu0 %v6771
        %6783 = vmatpush.bf16.msra.mxu0 %v6770
        %6784 = vmatpush.bf16.msra.mxu0 %v6769
        %6785 = vmatpush.bf16.msra.mxu0 %v6768
        %6786 = vmatpush.bf16.msra.mxu0 %v6767
        %6787 = vmatpush.bf16.msra.mxu0 %v6766
        %6788 = vmatpush.bf16.msra.mxu0 %v6765
        %6789 = vmatmul.bf16.gmra.mxu0 %v6709
        %v6790 = vpop.f32.mrf.mxu0
        %v6791 = vadd.f32 %v6731, %v6790
        %v6792 = vpop.f32.mrf.mxu0
        %v6793 = vadd.f32 %v6731, %v6792
        %6794 = vmatmul.bf16.gmra.mxu0 %v6710
        %v6795 = vpop.f32.mrf.mxu0
        %v6796 = vadd.f32 %v6731, %v6795
        %v6797 = vpop.f32.mrf.mxu0
        %v6798 = vadd.f32 %v6731, %v6797
        %6799 = vmatmul.bf16.gmra.mxu0 %v6711
        %v6800 = vpop.f32.mrf.mxu0
        %v6801 = vadd.f32 %v6731, %v6800
        %v6802 = vpop.f32.mrf.mxu0
        %v6803 = vadd.f32 %v6731, %v6802
        %6804 = vmatmul.bf16.gmra.mxu0 %v6712
        %v6805 = vpop.f32.mrf.mxu0
        %v6806 = vadd.f32 %v6731, %v6805
        %v6807 = vpop.f32.mrf.mxu0
        %v6808 = vadd.f32 %v6731, %v6807
        %6809 = vdwg.mxu0
        %v6810 = vadd.f32 %v6594, %v6791
        %v6811 = vadd.f32 %v6596, %v6793
        %v6812 = vadd.f32 %v6599, %v6796
        %v6813 = vadd.f32 %v6601, %v6798
        %v6814 = vadd.f32 %v6604, %v6801
        %v6815 = vadd.f32 %v6606, %v6803
        %v6816 = vadd.f32 %v6609, %v6806
        %v6817 = vadd.f32 %v6611, %v6808
        %v6818 = vmax.f32 %v6810, 0.0
        %v6819 = vmax.f32 %v6811, 0.0
        %v6820 = vmax.f32 %v6812, 0.0
        %v6821 = vmax.f32 %v6813, 0.0
        %v6822 = vmax.f32 %v6814, 0.0
        %v6823 = vmax.f32 %v6815, 0.0
        %v6824 = vmax.f32 %v6816, 0.0
        %v6825 = vmax.f32 %v6817, 0.0
        %6826 = vst [vmem:[%s418] sm:$0xff] %v6818
        %6827 = vst [vmem:[%s418 + $0x8] sm:$0xff] %v6819
        %6828 = vst [vmem:[%s418 + $0x10] sm:$0xff] %v6820
        %6829 = vst [vmem:[%s418 + $0x18] sm:$0xff] %v6821
        %6830 = vst [vmem:[%s418 + $0x20] sm:$0xff] %v6822
        %6831 = vst [vmem:[%s418 + $0x28] sm:$0xff] %v6823
        %6832 = vst [vmem:[%s418 + $0x30] sm:$0xff] %v6824
        %6833 = vst [vmem:[%s418 + $0x38] sm:$0xff] %v6825
        %s6834 = sand.u32 %s230, 1
        %s6835 = scalar_lea.sflag [#allocation6], %s6834
        %s6836 = sand.u32 %s230, 1
        %s6837 = smul.addr %s6836, 64
        %s6838 = scalar_lea.vmem [#allocation13], %s6837
        // Predicated region
        $region81: #{tpu_custom_call.1} parent=55 // pred_check
          %p6839 = pneg %p240
        $region82: #{tpu_custom_call.1} parent=55 // pred_check_branch
          %6841 = sbr.rel (%p6839) target = $region84
        $region83: #{tpu_custom_call.1} parent=55 // pred_region
          %6843 = vsyncadd %s6835, 0
          %s6844 = smul.addr %s28, 8
          %s6845 = smul.addr %s6844, 8
          %s6846 = scalar_lea.hbm %s9, %s6845
          %s6847 = sshll.u32 %s6838, 4
          %s6848 = int_to_ptr.vmem [resolvable:$true] %s6847
          %s6849 = sshll.u32 %s6846, 4
          %s6850 = int_to_ptr.hbm [resolvable:$true] %s6849
          %6855 = dma.vmem_to_hbm [thread:$0]  %s6848, 1024, %s6850, %s6835, 128, 128, 8
        $region84: #{tpu_custom_call.1} parent=55 // pred_fallthru
          _
      $region56: #{tpu_custom_call.1} parent=5 // pred_fallthru
        _
      %p6856 = scmp.le.s32.totalorder 2, %s23
      // Predicated region
      $region85: #{tpu_custom_call.1} parent=5 // pred_check
        %p6857 = pneg %p6856
      $region86: #{tpu_custom_call.1} parent=5 // pred_check_branch
        %6859 = sbr.rel (%p6857) target = $region88
      $region87: #{tpu_custom_call.1} parent=5 // pred_region
        %s6860 = ssub.s32 %s23, 2
        // Predicated region
        $region89: #{tpu_custom_call.1} parent=87 // pred_check
          %p6861 = pneg %p246
        $region90: #{tpu_custom_call.1} parent=87 // pred_check_branch
          %6863 = sbr.rel (%p6861) target = $region92
        $region91: #{tpu_custom_call.1} parent=87 // pred_region
          %s6864 = sand.u32 %s231, 1
          %s6865 = scalar_lea.sflag [#allocation6], %s6864
          %s6866 = sand.u32 %s231, 1
          %s6867 = smul.addr %s6866, 64
          %s6868 = scalar_lea.vmem [#allocation13], %s6867
          %6870 = dma.done %s6865, 1024
        $region92: #{tpu_custom_call.1} parent=87 // pred_fallthru
          _
      $region88: #{tpu_custom_call.1} parent=5 // pred_fallthru
        _
    $region6: #{tpu_custom_call.1} parent=1 // loop_footer
      %s27 = sadd.s32 1, %s23
    $region7: #{tpu_custom_call.1} parent=1 // loop_footer_branch
      %22 = sbr.rel target = $region3
    $region8: #{tpu_custom_call.1} parent=1 // loop_exit
      _
    %6871 = vsyncpa [#allocation5], 1
    %s6872 = scalar_lea.sflag [#allocation5], 1
    %6873 = vsyncpa %s6872, 1
    %6874 = vsyncpa [#allocation8], 1
    %6875 = vsyncpa [#allocation11], 1
    %6876 = vsyncpa [#allocation6], 1
    %s6877 = scalar_lea.sflag [#allocation6], 1
    %6878 = vsyncpa %s6877, 1

</llo_original>
